<compile_context>
chip_gen: v7x
topology: tpu7x:2x2x1
jax: 0.10.0
libtpu: 0.0.40
codegen_flags: <defaults>
</compile_context>

<pallas_src>
import numpy as np

import jax
import jax.numpy as jnp
from jax import lax
from jax.experimental import pallas as pl
from jax.experimental.pallas import tpu as pltpu

# ----------------------------- hyper-params ---------------------------------
BATCH = 2
IN_CH = 4
IMG = 16
HIDDEN = 32                      # hp.hidden_size
ENC_OUT = (16, 4, 4)             # encoder.get_output_size()
OUT_FLAT = ENC_OUT[0] * ENC_OUT[1] * ENC_OUT[2]   # 256
IN_FEAT = IN_CH * IMG * IMG                        # 1024
MAX_TB = 256                     # batch-tile rows per grid step


# ------------------------- fused Pallas kernel -------------------------------
def _vae_fused_kernel(
        x_ref, eps_ref,
        ek1_ref, eb1_ref, ek2_ref, eb2_ref,          # encoder convs (folded, bf16)
        l1w_ref, l1b_ref, l2w_ref, l2b_ref,          # linear1 / linear2
        l3w_ref, l3b_ref, l4w_ref, l4b_ref,          # linear3 / linear4
        dk1_ref, db1_ref, dk2_ref, db2_ref,          # decoder up2+convs (folded, bf16)
        mlz_ref, im_ref):
    """Whole VAE forward for one batch tile.  Every layer is a bf16 MXU matmul
    with f32 accumulation; bias/ReLU/exp/sigmoid run in f32 on VPU/EUP."""

    def mm(a_bf16, w_ref, b_ref):
        # explicit bf16 x bf16 -> f32 accumulate on the MXU; f32 bias add.
        return jnp.dot(a_bf16, w_ref[...],
                       preferred_element_type=jnp.float32) + b_ref[...]

    def relu_bf16(y_f32):
        return jnp.maximum(y_f32, 0.0).astype(jnp.bfloat16)

    x = x_ref[...]                                        # (TB, 1024) bf16
    # ---- encode ----
    h = relu_bf16(mm(x, ek1_ref, eb1_ref))                # conv1 + ReLU -> (TB, 512)
    h = relu_bf16(mm(h, ek2_ref, eb2_ref))                # conv2 + ReLU -> (TB, 256)
    e = relu_bf16(mm(h, l1w_ref, l1b_ref))                # linear1 + ReLU -> (TB, 128)
    ml = mm(e, l2w_ref, l2b_ref)                          # linear2 -> (TB, 64) = [mu|logvar]
    mu = ml[:, :HIDDEN]
    logvar = ml[:, HIDDEN:]
    # ---- reparameterize (fused; exp -> EUP slot) ----
    z = mu + eps_ref[...] * jnp.exp(0.5 * logvar)         # (TB, 32) f32
    # ---- decode ----
    d = relu_bf16(mm(z.astype(jnp.bfloat16), l3w_ref, l3b_ref))   # (TB, 128)
    d = relu_bf16(mm(d, l4w_ref, l4b_ref))                        # (TB, 256)
    d = relu_bf16(mm(d, dk1_ref, db1_ref))                        # (TB, 512)
    im = jax.nn.sigmoid(mm(d, dk2_ref, db2_ref))                  # (TB, 1024)
    # ---- packed lane-dense scalar output: [mu | logvar | z] ----
    mlz_ref[:, 0:2 * HIDDEN] = ml
    mlz_ref[:, 2 * HIDDEN:3 * HIDDEN] = z
    im_ref[...] = im


_PARAM_ORDER = ("enc_k1", "enc_b1", "enc_k2", "enc_b2",
                "lin1_w", "lin1_b", "lin2_w", "lin2_b",
                "lin3_w", "lin3_b", "lin4_w", "lin4_b",
                "dec_k1", "dec_b1", "dec_k2", "dec_b2")


@jax.jit
def vae_forward(image, params, eps):
    """mu, logvar, z, im = VAE(image); one fused pallas_call with a batch grid.

    Weights stay VMEM-resident across all grid steps (constant index_map);
    activations stream in batch tiles of up to MAX_TB rows."""
    B = image.shape[0]
    x = image.reshape(B, -1).astype(jnp.bfloat16)         # NCHW flatten + bf16 cast

    if B <= MAX_TB:
        tb, bp = B, B
    else:
        tb = MAX_TB
        bp = ((B + tb - 1) // tb) * tb
    if bp != B:                                           # pad to a whole tile count
        x = jnp.pad(x, ((0, bp - B), (0, 0)))
        eps = jnp.pad(eps, ((0, bp - B), (0, 0)))

    w_args = [params[n] for n in _PARAM_ORDER]
    # weights/biases: full-array blocks, constant index -> no re-fetch across steps
    w_specs = [pl.BlockSpec(tuple(w.shape), lambda i: (0, 0)) for w in w_args]

    mlz, im_flat = pl.pallas_call(
        _vae_fused_kernel,
        grid=(bp // tb,),
        in_specs=[pl.BlockSpec((tb, IN_FEAT), lambda i: (i, 0)),     # x
                  pl.BlockSpec((tb, HIDDEN), lambda i: (i, 0))]      # eps
                 + w_specs,
        out_specs=(pl.BlockSpec((tb, 3 * HIDDEN), lambda i: (i, 0)),
                   pl.BlockSpec((tb, IN_FEAT), lambda i: (i, 0))),
        out_shape=(jax.ShapeDtypeStruct((bp, 3 * HIDDEN), jnp.float32),
                   jax.ShapeDtypeStruct((bp, IN_FEAT), jnp.float32)),
        compiler_params=pltpu.CompilerParams(
            dimension_semantics=("parallel",),        # megacore batch split on v7x
            vmem_limit_bytes=32 * 1024 * 1024),       # ~ <15 MB actually used (bf16)
    )(x, eps, *w_args)

    mu = mlz[:B, 0:HIDDEN]
    logvar = mlz[:B, HIDDEN:2 * HIDDEN]
    z = mlz[:B, 2 * HIDDEN:3 * HIDDEN]
    im = im_flat[:B].reshape(B, IN_CH, IMG, IMG)          # back to NCHW (free)
    return mu, logvar, z, im


# --------------------- parameter init + conv folding -------------------------
def init_params(key):
    """Raw PyTorch-layout parameters (conv: OIHW, linear: (in, out)), f32."""
    def dense(k, fan_in, shape):
        return jax.random.normal(k, shape, jnp.float32) / jnp.sqrt(fan_in)

    ks = jax.random.split(key, 16)
    p = {}
    p["enc_c1_w"] = dense(ks[0], IN_CH * 9, (8, IN_CH, 3, 3))
    p["enc_c1_b"] = 0.1 * jax.random.normal(ks[8], (8,), jnp.float32)
    p["enc_c2_w"] = dense(ks[1], 8 * 9, (16, 8, 3, 3))
    p["enc_c2_b"] = 0.1 * jax.random.normal(ks[9], (16,), jnp.float32)
    p["lin1_w"] = dense(ks[2], OUT_FLAT, (OUT_FLAT, 128))
    p["lin1_b"] = 0.1 * jax.random.normal(ks[10], (128,), jnp.float32)
    p["lin2_w"] = dense(ks[3], 128, (128, HIDDEN * 2))
    p["lin2_b"] = 0.1 * jax.random.normal(ks[11], (HIDDEN * 2,), jnp.float32)
    p["lin3_w"] = dense(ks[4], HIDDEN, (HIDDEN, 128))
    p["lin3_b"] = 0.1 * jax.random.normal(ks[12], (128,), jnp.float32)
    p["lin4_w"] = dense(ks[5], 128, (128, OUT_FLAT))
    p["lin4_b"] = 0.1 * jax.random.normal(ks[13], (OUT_FLAT,), jnp.float32)
    p["dec_c1_w"] = dense(ks[6], 16 * 9, (8, 16, 3, 3))
    p["dec_c1_b"] = 0.1 * jax.random.normal(ks[14], (8,), jnp.float32)
    p["dec_c2_w"] = dense(ks[7], 8 * 9, (IN_CH, 8, 3, 3))
    p["dec_c2_b"] = 0.1 * jax.random.normal(ks[15], (IN_CH,), jnp.float32)
    return p


def _conv_fold_structure(src_hw, out_hw, stride, pad, upsample):
    """P[src_pos, di, dj, out_pos] = 1 iff source pixel src_pos feeds kernel tap
    (di,dj) of conv output out_pos.  Zero-padding taps are dropped; an optional
    preceding nearest-neighbour 2x upsample is folded into the index map."""
    hs_dim, ws_dim = src_hw
    ho_dim, wo_dim = out_hw
    scale = 2 if upsample else 1
    h_in, w_in = hs_dim * scale, ws_dim * scale
    P = np.zeros((hs_dim * ws_dim, 3, 3, ho_dim * wo_dim), np.float32)
    for di in range(3):
        for dj in range(3):
            for ho in range(ho_dim):
                hi = ho * stride + di - pad
                if hi < 0 or hi >= h_in:
                    continue
                hs = hi // scale
                for wo in range(wo_dim):
                    wi = wo * stride + dj - pad
                    if wi < 0 or wi >= w_in:
                        continue
                    ws = wi // scale
                    P[hs * ws_dim + ws, di, dj, ho * wo_dim + wo] = 1.0
    return P


def _fold_conv(w, b, P):
    """Fold conv weight (OIHW) + structure P into one dense matmul so that
    y_flat(B, Cout*Ho*Wo) = x_flat(B, Cin*Hs*Ws) @ K + bias (NCHW flatten)."""
    w = np.asarray(w, np.float32)
    b = np.asarray(b, np.float32)
    cout, cin = w.shape[0], w.shape[1]
    n_src, _, _, n_out = P.shape
    k = np.einsum("pdeq,ocde->cpoq", P, w).reshape(cin * n_src, cout * n_out)
    bias = np.repeat(b, n_out).reshape(1, cout * n_out)
    return jnp.asarray(k), jnp.asarray(bias)


def fold_params(raw):
    """Precompute fused-kernel operands once (outside the hot path).
    Matmul weights are stored in bf16; biases stay f32, pre-reshaped to (1,N)."""
    bf16 = jnp.bfloat16
    p = {}
    # encoder conv1: (B,4,16,16) -k3,s2,p1-> (B,8,8,8)
    P = _conv_fold_structure((IMG, IMG), (8, 8), stride=2, pad=1, upsample=False)
    k, b = _fold_conv(raw["enc_c1_w"], raw["enc_c1_b"], P)
    p["enc_k1"], p["enc_b1"] = k.astype(bf16), b
    # encoder conv2: (B,8,8,8) -k3,s2,p1-> (B,16,4,4)
    P = _conv_fold_structure((8, 8), (4, 4), stride=2, pad=1, upsample=False)
    k, b = _fold_conv(raw["enc_c2_w"], raw["enc_c2_b"], P)
    p["enc_k2"], p["enc_b2"] = k.astype(bf16), b
    # decoder conv1: (B,16,4,4) -up2-> (B,16,8,8) -k3,s1,p1-> (B,8,8,8)
    P = _conv_fold_structure((4, 4), (8, 8), stride=1, pad=1, upsample=True)
    k, b = _fold_conv(raw["dec_c1_w"], raw["dec_c1_b"], P)
    p["dec_k1"], p["dec_b1"] = k.astype(bf16), b
    # decoder conv2: (B,8,8,8) -up2-> (B,8,16,16) -k3,s1,p1-> (B,4,16,16)
    P = _conv_fold_structure((8, 8), (IMG, IMG), stride=1, pad=1, upsample=True)
    k, b = _fold_conv(raw["dec_c2_w"], raw["dec_c2_b"], P)
    p["dec_k2"], p["dec_b2"] = k.astype(bf16), b
    # linears: (in,out) weights in bf16; (1,N) f32 biases; linear2 kept whole.
    for name in ("lin1", "lin2", "lin3", "lin4"):
        p[f"{name}_w"] = raw[f"{name}_w"].astype(bf16)
        p[f"{name}_b"] = raw[f"{name}_b"].reshape(1, -1).astype(jnp.float32)
    return p


# ------------------------- pure-JAX reference --------------------------------
def reference_forward(image, raw, eps):
    """Un-fused XLA reference with identical semantics.  Mirrors the kernel's
    explicit bf16 MXU inputs (weights + activations rounded to bf16, f32 math)
    so the comparison isolates the operator semantics, not matmul precision."""
    prec = lax.Precision.HIGHEST
    f32 = jnp.float32

    def q(t):                                # bf16-round, compute in f32
        return t.astype(jnp.bfloat16).astype(f32)

    def conv(x, w, b, stride):
        y = lax.conv_general_dilated(
            q(x), q(w), window_strides=(stride, stride), padding=((1, 1), (1, 1)),
            dimension_numbers=("NCHW", "OIHW", "NCHW"), precision=prec)
        return y + b.reshape(1, -1, 1, 1)

    def dense(x, w, b):
        return jnp.dot(q(x), q(w), precision=prec) + b

    def up2(x):
        return jnp.repeat(jnp.repeat(x, 2, axis=2), 2, axis=3)

    B = image.shape[0]
    h = jax.nn.relu(conv(image, raw["enc_c1_w"], raw["enc_c1_b"], 2))
    h = jax.nn.relu(conv(h, raw["enc_c2_w"], raw["enc_c2_b"], 2))
    emb = h.reshape(B, -1)
    e = jax.nn.relu(dense(emb, raw["lin1_w"], raw["lin1_b"]))
    z2 = dense(e, raw["lin2_w"], raw["lin2_b"])
    mu, logvar = z2[:, :HIDDEN], z2[:, HIDDEN:]
    z = mu + eps * jnp.exp(0.5 * logvar)
    d = jax.nn.relu(dense(z, raw["lin3_w"], raw["lin3_b"]))
    d = jax.nn.relu(dense(d, raw["lin4_w"], raw["lin4_b"]))
    d = d.reshape(B, *ENC_OUT)
    d = jax.nn.relu(conv(up2(d), raw["dec_c1_w"], raw["dec_c1_b"], 1))
    im = jax.nn.sigmoid(conv(up2(d), raw["dec_c2_w"], raw["dec_c2_b"], 1))
    return mu, logvar, z, im


def _check(got, want):
    for g, w in zip(got, want):
        np.testing.assert_allclose(np.asarray(g), np.asarray(w),
                                   atol=2e-2, rtol=2e-2)


# ----------------------------- main ------------------------------------------
if __name__ == "__main__":
    key = jax.random.PRNGKey(0)
    k_img, k_eps, k_par, k_img2, k_eps2 = jax.random.split(key, 5)

    raw = init_params(k_par)
    params = fold_params(raw)        # one-time fold; hot path is a single kernel

    # ---- demo batch (B=2), the module's nominal input shape ----
    image = jax.random.normal(k_img, (BATCH, IN_CH, IMG, IMG), jnp.float32)
    eps = jax.random.normal(k_eps, (BATCH, HIDDEN), jnp.float32)   # randn_like(std)

    mu, logvar, z, im = vae_forward(image, params, eps)
    jax.block_until_ready((mu, logvar, z, im))

    assert mu.shape == (BATCH, HIDDEN)
    assert logvar.shape == (BATCH, HIDDEN)
    assert z.shape == (BATCH, HIDDEN)
    assert im.shape == (BATCH, IN_CH, IMG, IMG)
    assert bool(jnp.all(im >= 0.0)) and bool(jnp.all(im <= 1.0))

    _check((mu, logvar, z, im), jax.jit(reference_forward)(image, raw, eps))

    # ---- larger batch: exercises the batch grid (grid=2), tile padding and
    #      weight residency across grid steps ----
    B2 = 384
    image2 = jax.random.normal(k_img2, (B2, IN_CH, IMG, IMG), jnp.float32)
    eps2 = jax.random.normal(k_eps2, (B2, HIDDEN), jnp.float32)
    out2 = vae_forward(image2, params, eps2)
    jax.block_until_ready(out2)
    assert out2[3].shape == (B2, IN_CH, IMG, IMG)
    _check(out2, jax.jit(reference_forward)(image2, raw, eps2))

    print("KERNEL_OK")
</pallas_src>

<mosaic_0001>
module attributes {stable_mosaic.version = 11 : i64} {
  func.func @_vae_fused_kernel(%arg0: i32, %arg1: memref<2x1024xbf16, #tpu.memory_space<vmem>>, %arg2: memref<2x32xf32, #tpu.memory_space<vmem>>, %arg3: memref<1024x512xbf16, #tpu.memory_space<vmem>>, %arg4: memref<1x512xf32, #tpu.memory_space<vmem>>, %arg5: memref<512x256xbf16, #tpu.memory_space<vmem>>, %arg6: memref<1x256xf32, #tpu.memory_space<vmem>>, %arg7: memref<256x128xbf16, #tpu.memory_space<vmem>>, %arg8: memref<1x128xf32, #tpu.memory_space<vmem>>, %arg9: memref<128x64xbf16, #tpu.memory_space<vmem>>, %arg10: memref<1x64xf32, #tpu.memory_space<vmem>>, %arg11: memref<32x128xbf16, #tpu.memory_space<vmem>>, %arg12: memref<1x128xf32, #tpu.memory_space<vmem>>, %arg13: memref<128x256xbf16, #tpu.memory_space<vmem>>, %arg14: memref<1x256xf32, #tpu.memory_space<vmem>>, %arg15: memref<256x512xbf16, #tpu.memory_space<vmem>>, %arg16: memref<1x512xf32, #tpu.memory_space<vmem>>, %arg17: memref<512x1024xbf16, #tpu.memory_space<vmem>>, %arg18: memref<1x1024xf32, #tpu.memory_space<vmem>>, %arg19: memref<2x96xf32, #tpu.memory_space<vmem>>, %arg20: memref<2x1024xf32, #tpu.memory_space<vmem>>) attributes {dimension_semantics = [#tpu.dimension_semantics<parallel>], iteration_bounds = array<i64: 1>, scalar_prefetch = 0 : i64, scratch_operands = 0 : i64, tpu.core_type = #tpu.core_type<tc>, window_params = [{transform_indices = @transform_0, window_bounds = array<i64: 2, 1024>}, {transform_indices = @transform_1, window_bounds = array<i64: 2, 32>}, {pipeline_mode = #tpu.pipeline_mode<synchronous>, transform_indices = @transform_2, window_bounds = array<i64: 1024, 512>}, {pipeline_mode = #tpu.pipeline_mode<synchronous>, transform_indices = @transform_3, window_bounds = array<i64: 1, 512>}, {pipeline_mode = #tpu.pipeline_mode<synchronous>, transform_indices = @transform_4, window_bounds = array<i64: 512, 256>}, {pipeline_mode = #tpu.pipeline_mode<synchronous>, transform_indices = @transform_5, window_bounds = array<i64: 1, 256>}, {pipeline_mode = #tpu.pipeline_mode<synchronous>, transform_indices = @transform_6, window_bounds = array<i64: 256, 128>}, {pipeline_mode = #tpu.pipeline_mode<synchronous>, transform_indices = @transform_7, window_bounds = array<i64: 1, 128>}, {pipeline_mode = #tpu.pipeline_mode<synchronous>, transform_indices = @transform_8, window_bounds = array<i64: 128, 64>}, {pipeline_mode = #tpu.pipeline_mode<synchronous>, transform_indices = @transform_9, window_bounds = array<i64: 1, 64>}, {pipeline_mode = #tpu.pipeline_mode<synchronous>, transform_indices = @transform_10, window_bounds = array<i64: 32, 128>}, {pipeline_mode = #tpu.pipeline_mode<synchronous>, transform_indices = @transform_11, window_bounds = array<i64: 1, 128>}, {pipeline_mode = #tpu.pipeline_mode<synchronous>, transform_indices = @transform_12, window_bounds = array<i64: 128, 256>}, {pipeline_mode = #tpu.pipeline_mode<synchronous>, transform_indices = @transform_13, window_bounds = array<i64: 1, 256>}, {pipeline_mode = #tpu.pipeline_mode<synchronous>, transform_indices = @transform_14, window_bounds = array<i64: 256, 512>}, {pipeline_mode = #tpu.pipeline_mode<synchronous>, transform_indices = @transform_15, window_bounds = array<i64: 1, 512>}, {pipeline_mode = #tpu.pipeline_mode<synchronous>, transform_indices = @transform_16, window_bounds = array<i64: 512, 1024>}, {pipeline_mode = #tpu.pipeline_mode<synchronous>, transform_indices = @transform_17, window_bounds = array<i64: 1, 1024>}, {transform_indices = @transform_18, window_bounds = array<i64: 2, 96>}, {transform_indices = @transform_19, window_bounds = array<i64: 2, 1024>}]} {
    %c0 = arith.constant 0 : index
    %c0_0 = arith.constant 0 : index
    %0 = vector.load %arg1[%c0, %c0_0] : memref<2x1024xbf16, #tpu.memory_space<vmem>>, vector<2x1024xbf16>
    %c0_1 = arith.constant 0 : index
    %c0_2 = arith.constant 0 : index
    %1 = vector.load %arg3[%c0_1, %c0_2] : memref<1024x512xbf16, #tpu.memory_space<vmem>>, vector<1024x512xbf16>
    %cst = arith.constant dense<0.000000e+00> : vector<2x512xf32>
    %2 = tpu.matmul %0, %1, %cst {dimension_numbers = #tpu.dot_dimension_numbers<[1], [0], [0], [1], [0, 0, 1, 1], [], []>} : vector<2x1024xbf16>, vector<1024x512xbf16>, vector<2x512xf32> -> vector<2x512xf32>
    %c0_3 = arith.constant 0 : index
    %c0_4 = arith.constant 0 : index
    %3 = vector.load %arg4[%c0_3, %c0_4] : memref<1x512xf32, #tpu.memory_space<vmem>>, vector<1x512xf32>
    %4 = vector.broadcast %3 : vector<1x512xf32> to vector<2x512xf32>
    %5 = arith.addf %2, %4 : vector<2x512xf32>
    %cst_5 = arith.constant 0.000000e+00 : f32
    %6 = vector.broadcast %cst_5 : f32 to vector<2x512xf32>
    %7 = arith.maximumf %5, %6 : vector<2x512xf32>
    %8 = arith.truncf %7 : vector<2x512xf32> to vector<2x512xbf16>
    %c0_6 = arith.constant 0 : index
    %c0_7 = arith.constant 0 : index
    %9 = vector.load %arg5[%c0_6, %c0_7] : memref<512x256xbf16, #tpu.memory_space<vmem>>, vector<512x256xbf16>
    %cst_8 = arith.constant dense<0.000000e+00> : vector<2x256xf32>
    %10 = tpu.matmul %8, %9, %cst_8 {dimension_numbers = #tpu.dot_dimension_numbers<[1], [0], [0], [1], [0, 0, 1, 1], [], []>} : vector<2x512xbf16>, vector<512x256xbf16>, vector<2x256xf32> -> vector<2x256xf32>
    %c0_9 = arith.constant 0 : index
    %c0_10 = arith.constant 0 : index
    %11 = vector.load %arg6[%c0_9, %c0_10] : memref<1x256xf32, #tpu.memory_space<vmem>>, vector<1x256xf32>
    %12 = vector.broadcast %11 : vector<1x256xf32> to vector<2x256xf32>
    %13 = arith.addf %10, %12 : vector<2x256xf32>
    %cst_11 = arith.constant 0.000000e+00 : f32
    %14 = vector.broadcast %cst_11 : f32 to vector<2x256xf32>
    %15 = arith.maximumf %13, %14 : vector<2x256xf32>
    %16 = arith.truncf %15 : vector<2x256xf32> to vector<2x256xbf16>
    %c0_12 = arith.constant 0 : index
    %c0_13 = arith.constant 0 : index
    %17 = vector.load %arg7[%c0_12, %c0_13] : memref<256x128xbf16, #tpu.memory_space<vmem>>, vector<256x128xbf16>
    %cst_14 = arith.constant dense<0.000000e+00> : vector<2x128xf32>
    %18 = tpu.matmul %16, %17, %cst_14 {dimension_numbers = #tpu.dot_dimension_numbers<[1], [0], [0], [1], [0, 0, 1, 1], [], []>} : vector<2x256xbf16>, vector<256x128xbf16>, vector<2x128xf32> -> vector<2x128xf32>
    %c0_15 = arith.constant 0 : index
    %c0_16 = arith.constant 0 : index
    %19 = vector.load %arg8[%c0_15, %c0_16] : memref<1x128xf32, #tpu.memory_space<vmem>>, vector<1x128xf32>
    %20 = vector.broadcast %19 : vector<1x128xf32> to vector<2x128xf32>
    %21 = arith.addf %18, %20 : vector<2x128xf32>
    %cst_17 = arith.constant 0.000000e+00 : f32
    %22 = vector.broadcast %cst_17 : f32 to vector<2x128xf32>
    %23 = arith.maximumf %21, %22 : vector<2x128xf32>
    %24 = arith.truncf %23 : vector<2x128xf32> to vector<2x128xbf16>
    %c0_18 = arith.constant 0 : index
    %c0_19 = arith.constant 0 : index
    %25 = vector.load %arg9[%c0_18, %c0_19] : memref<128x64xbf16, #tpu.memory_space<vmem>>, vector<128x64xbf16>
    %cst_20 = arith.constant dense<0.000000e+00> : vector<2x64xf32>
    %26 = tpu.matmul %24, %25, %cst_20 {dimension_numbers = #tpu.dot_dimension_numbers<[1], [0], [0], [1], [0, 0, 1, 1], [], []>} : vector<2x128xbf16>, vector<128x64xbf16>, vector<2x64xf32> -> vector<2x64xf32>
    %c0_21 = arith.constant 0 : index
    %c0_22 = arith.constant 0 : index
    %27 = vector.load %arg10[%c0_21, %c0_22] : memref<1x64xf32, #tpu.memory_space<vmem>>, vector<1x64xf32>
    %28 = vector.broadcast %27 : vector<1x64xf32> to vector<2x64xf32>
    %29 = arith.addf %26, %28 : vector<2x64xf32>
    %30 = vector.extract_strided_slice %29 {offsets = [0, 0], sizes = [2, 32], strides = [1, 1]} : vector<2x64xf32> to vector<2x32xf32>
    %31 = vector.extract_strided_slice %29 {offsets = [0, 32], sizes = [2, 32], strides = [1, 1]} : vector<2x64xf32> to vector<2x32xf32>
    %c0_23 = arith.constant 0 : index
    %c0_24 = arith.constant 0 : index
    %32 = vector.load %arg2[%c0_23, %c0_24] : memref<2x32xf32, #tpu.memory_space<vmem>>, vector<2x32xf32>
    %cst_25 = arith.constant 5.000000e-01 : f32
    %33 = vector.broadcast %cst_25 : f32 to vector<2x32xf32>
    %34 = arith.mulf %33, %31 : vector<2x32xf32>
    %35 = math.exp %34 : vector<2x32xf32>
    %36 = arith.mulf %32, %35 : vector<2x32xf32>
    %37 = arith.addf %30, %36 : vector<2x32xf32>
    %38 = arith.truncf %37 : vector<2x32xf32> to vector<2x32xbf16>
    %c0_26 = arith.constant 0 : index
    %c0_27 = arith.constant 0 : index
    %39 = vector.load %arg11[%c0_26, %c0_27] : memref<32x128xbf16, #tpu.memory_space<vmem>>, vector<32x128xbf16>
    %cst_28 = arith.constant dense<0.000000e+00> : vector<2x128xf32>
    %40 = tpu.matmul %38, %39, %cst_28 {dimension_numbers = #tpu.dot_dimension_numbers<[1], [0], [0], [1], [0, 0, 1, 1], [], []>} : vector<2x32xbf16>, vector<32x128xbf16>, vector<2x128xf32> -> vector<2x128xf32>
    %c0_29 = arith.constant 0 : index
    %c0_30 = arith.constant 0 : index
    %41 = vector.load %arg12[%c0_29, %c0_30] : memref<1x128xf32, #tpu.memory_space<vmem>>, vector<1x128xf32>
    %42 = vector.broadcast %41 : vector<1x128xf32> to vector<2x128xf32>
    %43 = arith.addf %40, %42 : vector<2x128xf32>
    %cst_31 = arith.constant 0.000000e+00 : f32
    %44 = vector.broadcast %cst_31 : f32 to vector<2x128xf32>
    %45 = arith.maximumf %43, %44 : vector<2x128xf32>
    %46 = arith.truncf %45 : vector<2x128xf32> to vector<2x128xbf16>
    %c0_32 = arith.constant 0 : index
    %c0_33 = arith.constant 0 : index
    %47 = vector.load %arg13[%c0_32, %c0_33] : memref<128x256xbf16, #tpu.memory_space<vmem>>, vector<128x256xbf16>
    %cst_34 = arith.constant dense<0.000000e+00> : vector<2x256xf32>
    %48 = tpu.matmul %46, %47, %cst_34 {dimension_numbers = #tpu.dot_dimension_numbers<[1], [0], [0], [1], [0, 0, 1, 1], [], []>} : vector<2x128xbf16>, vector<128x256xbf16>, vector<2x256xf32> -> vector<2x256xf32>
    %c0_35 = arith.constant 0 : index
    %c0_36 = arith.constant 0 : index
    %49 = vector.load %arg14[%c0_35, %c0_36] : memref<1x256xf32, #tpu.memory_space<vmem>>, vector<1x256xf32>
    %50 = vector.broadcast %49 : vector<1x256xf32> to vector<2x256xf32>
    %51 = arith.addf %48, %50 : vector<2x256xf32>
    %cst_37 = arith.constant 0.000000e+00 : f32
    %52 = vector.broadcast %cst_37 : f32 to vector<2x256xf32>
    %53 = arith.maximumf %51, %52 : vector<2x256xf32>
    %54 = arith.truncf %53 : vector<2x256xf32> to vector<2x256xbf16>
    %c0_38 = arith.constant 0 : index
    %c0_39 = arith.constant 0 : index
    %55 = vector.load %arg15[%c0_38, %c0_39] : memref<256x512xbf16, #tpu.memory_space<vmem>>, vector<256x512xbf16>
    %cst_40 = arith.constant dense<0.000000e+00> : vector<2x512xf32>
    %56 = tpu.matmul %54, %55, %cst_40 {dimension_numbers = #tpu.dot_dimension_numbers<[1], [0], [0], [1], [0, 0, 1, 1], [], []>} : vector<2x256xbf16>, vector<256x512xbf16>, vector<2x512xf32> -> vector<2x512xf32>
    %c0_41 = arith.constant 0 : index
    %c0_42 = arith.constant 0 : index
    %57 = vector.load %arg16[%c0_41, %c0_42] : memref<1x512xf32, #tpu.memory_space<vmem>>, vector<1x512xf32>
    %58 = vector.broadcast %57 : vector<1x512xf32> to vector<2x512xf32>
    %59 = arith.addf %56, %58 : vector<2x512xf32>
    %cst_43 = arith.constant 0.000000e+00 : f32
    %60 = vector.broadcast %cst_43 : f32 to vector<2x512xf32>
    %61 = arith.maximumf %59, %60 : vector<2x512xf32>
    %62 = arith.truncf %61 : vector<2x512xf32> to vector<2x512xbf16>
    %c0_44 = arith.constant 0 : index
    %c0_45 = arith.constant 0 : index
    %63 = vector.load %arg17[%c0_44, %c0_45] : memref<512x1024xbf16, #tpu.memory_space<vmem>>, vector<512x1024xbf16>
    %cst_46 = arith.constant dense<0.000000e+00> : vector<2x1024xf32>
    %64 = tpu.matmul %62, %63, %cst_46 {dimension_numbers = #tpu.dot_dimension_numbers<[1], [0], [0], [1], [0, 0, 1, 1], [], []>} : vector<2x512xbf16>, vector<512x1024xbf16>, vector<2x1024xf32> -> vector<2x1024xf32>
    %c0_47 = arith.constant 0 : index
    %c0_48 = arith.constant 0 : index
    %65 = vector.load %arg18[%c0_47, %c0_48] : memref<1x1024xf32, #tpu.memory_space<vmem>>, vector<1x1024xf32>
    %66 = vector.broadcast %65 : vector<1x1024xf32> to vector<2x1024xf32>
    %67 = arith.addf %64, %66 : vector<2x1024xf32>
    %68 = arith.negf %67 : vector<2x1024xf32>
    %69 = math.exp %68 : vector<2x1024xf32>
    %cst_49 = arith.constant 1.000000e+00 : f32
    %70 = vector.broadcast %cst_49 : f32 to vector<2x1024xf32>
    %71 = arith.addf %70, %69 : vector<2x1024xf32>
    %72 = arith.divf %70, %71 : vector<2x1024xf32>
    %c0_50 = arith.constant 0 : index
    %c0_51 = arith.constant 0 : index
    %73 = vector.load %arg19[%c0_50, %c0_51] : memref<2x96xf32, #tpu.memory_space<vmem>>, vector<2x64xf32>
    tpu.vector_store %arg19[%c0_50, %c0_51], %29 {strides = array<i32>} : memref<2x96xf32, #tpu.memory_space<vmem>>, vector<2x64xf32>,
    %c0_52 = arith.constant 0 : index
    %c64 = arith.constant 64 : index
    %74 = vector.load %arg19[%c0_52, %c64] : memref<2x96xf32, #tpu.memory_space<vmem>>, vector<2x32xf32>
    tpu.vector_store %arg19[%c0_52, %c64], %37 {strides = array<i32>} : memref<2x96xf32, #tpu.memory_space<vmem>>, vector<2x32xf32>,
    %c0_53 = arith.constant 0 : index
    %c0_54 = arith.constant 0 : index
    %75 = vector.load %arg20[%c0_53, %c0_54] : memref<2x1024xf32, #tpu.memory_space<vmem>>, vector<2x1024xf32>
    tpu.vector_store %arg20[%c0_53, %c0_54], %72 {strides = array<i32>} : memref<2x1024xf32, #tpu.memory_space<vmem>>, vector<2x1024xf32>,
    return
  }
  func.func @transform_0(%arg0: i32) -> (i32, i32) {
    %c0_i32 = arith.constant 0 : i32
    %c0_i32_0 = arith.constant 0 : i32
    return %arg0, %c0_i32 : i32, i32
  }
  func.func @transform_1(%arg0: i32) -> (i32, i32) {
    %c0_i32 = arith.constant 0 : i32
    %c0_i32_0 = arith.constant 0 : i32
    return %arg0, %c0_i32 : i32, i32
  }
  func.func @transform_2(%arg0: i32) -> (i32, i32) {
    %c0_i32 = arith.constant 0 : i32
    %c0_i32_0 = arith.constant 0 : i32
    %c0_i32_1 = arith.constant 0 : i32
    return %c0_i32, %c0_i32_0 : i32, i32
  }
  func.func @transform_3(%arg0: i32) -> (i32, i32) {
    %c0_i32 = arith.constant 0 : i32
    %c0_i32_0 = arith.constant 0 : i32
    %c0_i32_1 = arith.constant 0 : i32
    return %c0_i32, %c0_i32_0 : i32, i32
  }
  func.func @transform_4(%arg0: i32) -> (i32, i32) {
    %c0_i32 = arith.constant 0 : i32
    %c0_i32_0 = arith.constant 0 : i32
    %c0_i32_1 = arith.constant 0 : i32
    return %c0_i32, %c0_i32_0 : i32, i32
  }
  func.func @transform_5(%arg0: i32) -> (i32, i32) {
    %c0_i32 = arith.constant 0 : i32
    %c0_i32_0 = arith.constant 0 : i32
    %c0_i32_1 = arith.constant 0 : i32
    return %c0_i32, %c0_i32_0 : i32, i32
  }
  func.func @transform_6(%arg0: i32) -> (i32, i32) {
    %c0_i32 = arith.constant 0 : i32
    %c0_i32_0 = arith.constant 0 : i32
    %c0_i32_1 = arith.constant 0 : i32
    return %c0_i32, %c0_i32_0 : i32, i32
  }
  func.func @transform_7(%arg0: i32) -> (i32, i32) {
    %c0_i32 = arith.constant 0 : i32
    %c0_i32_0 = arith.constant 0 : i32
    %c0_i32_1 = arith.constant 0 : i32
    return %c0_i32, %c0_i32_0 : i32, i32
  }
  func.func @transform_8(%arg0: i32) -> (i32, i32) {
    %c0_i32 = arith.constant 0 : i32
    %c0_i32_0 = arith.constant 0 : i32
    %c0_i32_1 = arith.constant 0 : i32
    return %c0_i32, %c0_i32_0 : i32, i32
  }
  func.func @transform_9(%arg0: i32) -> (i32, i32) {
    %c0_i32 = arith.constant 0 : i32
    %c0_i32_0 = arith.constant 0 : i32
    %c0_i32_1 = arith.constant 0 : i32
    return %c0_i32, %c0_i32_0 : i32, i32
  }
  func.func @transform_10(%arg0: i32) -> (i32, i32) {
    %c0_i32 = arith.constant 0 : i32
    %c0_i32_0 = arith.constant 0 : i32
    %c0_i32_1 = arith.constant 0 : i32
    return %c0_i32, %c0_i32_0 : i32, i32
  }
  func.func @transform_11(%arg0: i32) -> (i32, i32) {
    %c0_i32 = arith.constant 0 : i32
    %c0_i32_0 = arith.constant 0 : i32
    %c0_i32_1 = arith.constant 0 : i32
    return %c0_i32, %c0_i32_0 : i32, i32
  }
  func.func @transform_12(%arg0: i32) -> (i32, i32) {
    %c0_i32 = arith.constant 0 : i32
    %c0_i32_0 = arith.constant 0 : i32
    %c0_i32_1 = arith.constant 0 : i32
    return %c0_i32, %c0_i32_0 : i32, i32
  }
  func.func @transform_13(%arg0: i32) -> (i32, i32) {
    %c0_i32 = arith.constant 0 : i32
    %c0_i32_0 = arith.constant 0 : i32
    %c0_i32_1 = arith.constant 0 : i32
    return %c0_i32, %c0_i32_0 : i32, i32
  }
  func.func @transform_14(%arg0: i32) -> (i32, i32) {
    %c0_i32 = arith.constant 0 : i32
    %c0_i32_0 = arith.constant 0 : i32
    %c0_i32_1 = arith.constant 0 : i32
    return %c0_i32, %c0_i32_0 : i32, i32
  }
  func.func @transform_15(%arg0: i32) -> (i32, i32) {
    %c0_i32 = arith.constant 0 : i32
    %c0_i32_0 = arith.constant 0 : i32
    %c0_i32_1 = arith.constant 0 : i32
    return %c0_i32, %c0_i32_0 : i32, i32
  }
  func.func @transform_16(%arg0: i32) -> (i32, i32) {
    %c0_i32 = arith.constant 0 : i32
    %c0_i32_0 = arith.constant 0 : i32
    %c0_i32_1 = arith.constant 0 : i32
    return %c0_i32, %c0_i32_0 : i32, i32
  }
  func.func @transform_17(%arg0: i32) -> (i32, i32) {
    %c0_i32 = arith.constant 0 : i32
    %c0_i32_0 = arith.constant 0 : i32
    %c0_i32_1 = arith.constant 0 : i32
    return %c0_i32, %c0_i32_0 : i32, i32
  }
  func.func @transform_18(%arg0: i32) -> (i32, i32) {
    %c0_i32 = arith.constant 0 : i32
    %c0_i32_0 = arith.constant 0 : i32
    return %arg0, %c0_i32 : i32, i32
  }
  func.func @transform_19(%arg0: i32) -> (i32, i32) {
    %c0_i32 = arith.constant 0 : i32
    %c0_i32_0 = arith.constant 0 : i32
    return %arg0, %c0_i32 : i32, i32
  }
}

</mosaic_0001>

<llo_original>
// kernel: vae_forward.1
$region0: #{vae_forward.1}
  #allocation0 [shape = 'u32[]', space=smem, size = 0x4, offset = 0x4, fixed_abs, tag = 'smem constant byte address 0x4 - core index']
  #allocation1 [shape = 'u32[144,128]{1,0:T(1,128)}', space=vmem, size = 0x12000, scoped, tag = 'internal scratch']
  %s0 = inlined_call_operand.vmem [shape: bf16[2,1024], index: 0, kind: input, shape index: {}]
  %s1 = inlined_call_operand.vmem [shape: f32[2,32], index: 1, kind: input, shape index: {}]
  %s2 = inlined_call_operand.hbm [shape: bf16[1024,512], index: 2, kind: input, shape index: {}]
  %s3 = inlined_call_operand.vmem [shape: f32[1,512], index: 3, kind: input, shape index: {}]
  %s4 = inlined_call_operand.hbm [shape: bf16[512,256], index: 4, kind: input, shape index: {}]
  %s5 = inlined_call_operand.vmem [shape: f32[1,256], index: 5, kind: input, shape index: {}]
  %s6 = inlined_call_operand.vmem [shape: bf16[256,128], index: 6, kind: input, shape index: {}]
  %s7 = inlined_call_operand.vmem [shape: f32[1,128], index: 7, kind: input, shape index: {}]
  %s8 = inlined_call_operand.vmem [shape: bf16[128,64], index: 8, kind: input, shape index: {}]
  %s9 = inlined_call_operand.vmem [shape: f32[1,64], index: 9, kind: input, shape index: {}]
  %s10 = inlined_call_operand.vmem [shape: bf16[32,128], index: 10, kind: input, shape index: {}]
  %s11 = inlined_call_operand.vmem [shape: f32[1,128], index: 11, kind: input, shape index: {}]
  %s12 = inlined_call_operand.vmem [shape: bf16[128,256], index: 12, kind: input, shape index: {}]
  %s13 = inlined_call_operand.vmem [shape: f32[1,256], index: 13, kind: input, shape index: {}]
  %s14 = inlined_call_operand.hbm [shape: bf16[256,512], index: 14, kind: input, shape index: {}]
  %s15 = inlined_call_operand.vmem [shape: f32[1,512], index: 15, kind: input, shape index: {}]
  %s16 = inlined_call_operand.hbm [shape: bf16[512,1024], index: 16, kind: input, shape index: {}]
  %s17 = inlined_call_operand.vmem [shape: f32[1,1024], index: 17, kind: input, shape index: {}]
  %s18 = inlined_call_operand.vmem [shape: f32[2,96], index: 18, kind: output, shape index: {0}]
  %s19 = inlined_call_operand.vmem [shape: f32[2,1024], index: 19, kind: output, shape index: {1}]
  %20 = xla_tuple %s18, %s19
  %s21 = sld [smem:[#allocation0]]
  $region106: #{vae_forward.1} parent=0
    _
  %s23 = ssub.s32 1, %s21
  %s24 = scalar_select 0, %s23, %s21
  $region1: #{vae_forward.1} parent=0
    #allocation2 [shape = 'u8[1048576]{0}', space=vmem, size = 0x100000, scoped, tag = 'input window, operand 2, single buffered']
    #allocation3 [shape = 's32[1]{0}', space=sflag, size = 0x4, scoped, tag = 'scoped memory for vae_forward.1']
    #allocation4 [shape = 'u8[262144]{0}', space=vmem, size = 0x40000, scoped, tag = 'input window, operand 4, single buffered']
    #allocation5 [shape = 's32[1]{0}', space=sflag, size = 0x4, scoped, tag = 'scoped memory for vae_forward.1']
    #allocation6 [shape = 'u8[262144]{0}', space=vmem, size = 0x40000, scoped, tag = 'input window, operand 14, single buffered']
    #allocation7 [shape = 'u8[1048576]{0}', space=vmem, size = 0x100000, scoped, tag = 'input window, operand 16, single buffered']
    #allocation8 [shape = 's32[1]{0}', space=sflag, size = 0x4, scoped, tag = 'scoped memory for vae_forward.1']
    %25 = vsyncpa [#allocation3], 0
    %26 = vsyncpa [#allocation5], 0
    %27 = vsyncpa [#allocation8], 0
    // Predicated region
    $region2: #{vae_forward.1} parent=1 // pred_check
      _
    $region3: #{vae_forward.1} parent=1 // pred_check_branch
      %29 = sbr.rel (0) target = $region5
    $region4: #{vae_forward.1} parent=1 // pred_region
      _
    $region5: #{vae_forward.1} parent=1 // pred_fallthru
      _
    // Predicated region
    $region6: #{vae_forward.1} parent=1 // pred_check
      _
    $region7: #{vae_forward.1} parent=1 // pred_check_branch
      %31 = sbr.rel (0) target = $region9
    $region8: #{vae_forward.1} parent=1 // pred_region
      _
    $region9: #{vae_forward.1} parent=1 // pred_fallthru
      _
    // Predicated region
    $region10: #{vae_forward.1} parent=1 // pred_check
      _
    $region11: #{vae_forward.1} parent=1 // pred_check_branch
      %33 = sbr.rel (0) target = $region13
    $region12: #{vae_forward.1} parent=1 // pred_region
      %s35 = ssub.s32 32768, 32768
      %36 = vsyncadd [#allocation3], %s35
      %s37 = sshll.u32 [#allocation2], 4
      %s38 = int_to_ptr.vmem [resolvable:$true] %s37
      %43 = dma.hbm_to_vmem [thread:$0]  %s2, 32768, %s38, [#allocation3], 256, 256, 16
    $region13: #{vae_forward.1} parent=1 // pred_fallthru
      _
    // Predicated region
    $region14: #{vae_forward.1} parent=1 // pred_check
      _
    $region15: #{vae_forward.1} parent=1 // pred_check_branch
      %45 = sbr.rel (0) target = $region17
    $region16: #{vae_forward.1} parent=1 // pred_region
      _
    $region17: #{vae_forward.1} parent=1 // pred_fallthru
      _
    // Predicated region
    $region18: #{vae_forward.1} parent=1 // pred_check
      _
    $region19: #{vae_forward.1} parent=1 // pred_check_branch
      %47 = sbr.rel (0) target = $region21
    $region20: #{vae_forward.1} parent=1 // pred_region
      %s49 = ssub.s32 8192, 8192
      %50 = vsyncadd [#allocation5], %s49
      %s51 = sshll.u32 [#allocation4], 4
      %s52 = int_to_ptr.vmem [resolvable:$true] %s51
      %57 = dma.hbm_to_vmem [thread:$0]  %s4, 8192, %s52, [#allocation5], 128, 128, 8
    $region21: #{vae_forward.1} parent=1 // pred_fallthru
      _
    // Predicated region
    $region22: #{vae_forward.1} parent=1 // pred_check
      _
    $region23: #{vae_forward.1} parent=1 // pred_check_branch
      %59 = sbr.rel (0) target = $region25
    $region24: #{vae_forward.1} parent=1 // pred_region
      _
    $region25: #{vae_forward.1} parent=1 // pred_fallthru
      _
    // Predicated region
    $region26: #{vae_forward.1} parent=1 // pred_check
      _
    $region27: #{vae_forward.1} parent=1 // pred_check_branch
      %61 = sbr.rel (0) target = $region29
    $region28: #{vae_forward.1} parent=1 // pred_region
      _
    $region29: #{vae_forward.1} parent=1 // pred_fallthru
      _
    // Predicated region
    $region30: #{vae_forward.1} parent=1 // pred_check
      _
    $region31: #{vae_forward.1} parent=1 // pred_check_branch
      %63 = sbr.rel (0) target = $region33
    $region32: #{vae_forward.1} parent=1 // pred_region
      _
    $region33: #{vae_forward.1} parent=1 // pred_fallthru
      _
    // Predicated region
    $region34: #{vae_forward.1} parent=1 // pred_check
      _
    $region35: #{vae_forward.1} parent=1 // pred_check_branch
      %65 = sbr.rel (0) target = $region37
    $region36: #{vae_forward.1} parent=1 // pred_region
      _
    $region37: #{vae_forward.1} parent=1 // pred_fallthru
      _
    // Predicated region
    $region38: #{vae_forward.1} parent=1 // pred_check
      _
    $region39: #{vae_forward.1} parent=1 // pred_check_branch
      %67 = sbr.rel (0) target = $region41
    $region40: #{vae_forward.1} parent=1 // pred_region
      _
    $region41: #{vae_forward.1} parent=1 // pred_fallthru
      _
    // Predicated region
    $region42: #{vae_forward.1} parent=1 // pred_check
      _
    $region43: #{vae_forward.1} parent=1 // pred_check_branch
      %69 = sbr.rel (0) target = $region45
    $region44: #{vae_forward.1} parent=1 // pred_region
      _
    $region45: #{vae_forward.1} parent=1 // pred_fallthru
      _
    // Predicated region
    $region46: #{vae_forward.1} parent=1 // pred_check
      _
    $region47: #{vae_forward.1} parent=1 // pred_check_branch
      %71 = sbr.rel (0) target = $region49
    $region48: #{vae_forward.1} parent=1 // pred_region
      _
    $region49: #{vae_forward.1} parent=1 // pred_fallthru
      _
    // Predicated region
    $region50: #{vae_forward.1} parent=1 // pred_check
      _
    $region51: #{vae_forward.1} parent=1 // pred_check_branch
      %73 = sbr.rel (0) target = $region53
    $region52: #{vae_forward.1} parent=1 // pred_region
      _
    $region53: #{vae_forward.1} parent=1 // pred_fallthru
      _
    // Predicated region
    $region54: #{vae_forward.1} parent=1 // pred_check
      _
    $region55: #{vae_forward.1} parent=1 // pred_check_branch
      %75 = sbr.rel (0) target = $region57
    $region56: #{vae_forward.1} parent=1 // pred_region
      _
    $region57: #{vae_forward.1} parent=1 // pred_fallthru
      _
    // Predicated region
    $region58: #{vae_forward.1} parent=1 // pred_check
      _
    $region59: #{vae_forward.1} parent=1 // pred_check_branch
      %77 = sbr.rel (0) target = $region61
    $region60: #{vae_forward.1} parent=1 // pred_region
      %s79 = ssub.s32 8192, 8192
      %80 = vsyncadd [#allocation5], %s79
      %s81 = sshll.u32 [#allocation6], 4
      %s82 = int_to_ptr.vmem [resolvable:$true] %s81
      %87 = dma.hbm_to_vmem [thread:$0]  %s14, 8192, %s82, [#allocation5], 256, 256, 16
    $region61: #{vae_forward.1} parent=1 // pred_fallthru
      _
    // Predicated region
    $region62: #{vae_forward.1} parent=1 // pred_check
      _
    $region63: #{vae_forward.1} parent=1 // pred_check_branch
      %89 = sbr.rel (0) target = $region65
    $region64: #{vae_forward.1} parent=1 // pred_region
      _
    $region65: #{vae_forward.1} parent=1 // pred_fallthru
      _
    // Predicated region
    $region66: #{vae_forward.1} parent=1 // pred_check
      _
    $region67: #{vae_forward.1} parent=1 // pred_check_branch
      %91 = sbr.rel (0) target = $region69
    $region68: #{vae_forward.1} parent=1 // pred_region
      %s93 = ssub.s32 32768, 32768
      %94 = vsyncadd [#allocation8], %s93
      %s95 = sshll.u32 [#allocation7], 4
      %s96 = int_to_ptr.vmem [resolvable:$true] %s95
      %101 = dma.hbm_to_vmem [thread:$0]  %s16, 32768, %s96, [#allocation8], 512, 512, 32
    $region69: #{vae_forward.1} parent=1 // pred_fallthru
      _
    // Predicated region
    $region70: #{vae_forward.1} parent=1 // pred_check
      _
    $region71: #{vae_forward.1} parent=1 // pred_check_branch
      %103 = sbr.rel (0) target = $region73
    $region72: #{vae_forward.1} parent=1 // pred_region
      _
    $region73: #{vae_forward.1} parent=1 // pred_fallthru
      _
    // Predicated region
    $region74: #{vae_forward.1} parent=1 // pred_check
      _
    $region75: #{vae_forward.1} parent=1 // pred_check_branch
      %105 = sbr.rel (0) target = $region77
    $region76: #{vae_forward.1} parent=1 // pred_region
      %106 = dma.done [#allocation3], 32768
    $region77: #{vae_forward.1} parent=1 // pred_fallthru
      _
    // Predicated region
    $region78: #{vae_forward.1} parent=1 // pred_check
      _
    $region79: #{vae_forward.1} parent=1 // pred_check_branch
      %108 = sbr.rel (0) target = $region81
    $region80: #{vae_forward.1} parent=1 // pred_region
      %109 = dma.done [#allocation5], 8192
    $region81: #{vae_forward.1} parent=1 // pred_fallthru
      _
    // Predicated region
    $region82: #{vae_forward.1} parent=1 // pred_check
      _
    $region83: #{vae_forward.1} parent=1 // pred_check_branch
      %111 = sbr.rel (0) target = $region85
    $region84: #{vae_forward.1} parent=1 // pred_region
      %112 = dma.done [#allocation5], 8192
    $region85: #{vae_forward.1} parent=1 // pred_fallthru
      _
    // Predicated region
    $region86: #{vae_forward.1} parent=1 // pred_check
      _
    $region87: #{vae_forward.1} parent=1 // pred_check_branch
      %114 = sbr.rel (0) target = $region89
    $region88: #{vae_forward.1} parent=1 // pred_region
      %115 = dma.done [#allocation8], 32768
    $region89: #{vae_forward.1} parent=1 // pred_fallthru
      _
    %v117 = vld [vmem:[%s0] sm:$0xff]
    %v118 = vld [vmem:[#allocation2] sm:$0xff]
    %v119 = vld [vmem:[#allocation2 + $0x8] sm:$0xff]
    %v120 = vld [vmem:[#allocation2 + $0x10] sm:$0xff]
    %v121 = vld [vmem:[#allocation2 + $0x18] sm:$0xff]
    %v122 = vld [vmem:[#allocation2 + $0x20] sm:$0xff]
    %v123 = vld [vmem:[#allocation2 + $0x28] sm:$0xff]
    %v124 = vld [vmem:[#allocation2 + $0x30] sm:$0xff]
    %v125 = vld [vmem:[#allocation2 + $0x38] sm:$0xff]
    %v126 = vld [vmem:[#allocation2 + $0x40] sm:$0xff]
    %v127 = vld [vmem:[#allocation2 + $0x48] sm:$0xff]
    %v128 = vld [vmem:[#allocation2 + $0x50] sm:$0xff]
    %v129 = vld [vmem:[#allocation2 + $0x58] sm:$0xff]
    %v130 = vld [vmem:[#allocation2 + $0x60] sm:$0xff]
    %v131 = vld [vmem:[#allocation2 + $0x68] sm:$0xff]
    %v132 = vld [vmem:[#allocation2 + $0x70] sm:$0xff]
    %v133 = vld [vmem:[#allocation2 + $0x78] sm:$0xff]
    %v134 = vld [vmem:[#allocation2 + $0x80] sm:$0xff]
    %v135 = vld [vmem:[#allocation2 + $0x88] sm:$0xff]
    %v136 = vld [vmem:[#allocation2 + $0x90] sm:$0xff]
    %v137 = vld [vmem:[#allocation2 + $0x98] sm:$0xff]
    %v138 = vld [vmem:[#allocation2 + $0xa0] sm:$0xff]
    %v139 = vld [vmem:[#allocation2 + $0xa8] sm:$0xff]
    %v140 = vld [vmem:[#allocation2 + $0xb0] sm:$0xff]
    %v141 = vld [vmem:[#allocation2 + $0xb8] sm:$0xff]
    %v142 = vld [vmem:[#allocation2 + $0xc0] sm:$0xff]
    %v143 = vld [vmem:[#allocation2 + $0xc8] sm:$0xff]
    %v144 = vld [vmem:[#allocation2 + $0xd0] sm:$0xff]
    %v145 = vld [vmem:[#allocation2 + $0xd8] sm:$0xff]
    %v146 = vld [vmem:[#allocation2 + $0xe0] sm:$0xff]
    %v147 = vld [vmem:[#allocation2 + $0xe8] sm:$0xff]
    %v148 = vld [vmem:[#allocation2 + $0xf0] sm:$0xff]
    %v149 = vld [vmem:[#allocation2 + $0xf8] sm:$0xff]
    %v150 = vld [vmem:[#allocation2 + $0x100] sm:$0xff]
    %v151 = vld [vmem:[#allocation2 + $0x108] sm:$0xff]
    %v152 = vld [vmem:[#allocation2 + $0x110] sm:$0xff]
    %v153 = vld [vmem:[#allocation2 + $0x118] sm:$0xff]
    %v154 = vld [vmem:[#allocation2 + $0x120] sm:$0xff]
    %v155 = vld [vmem:[#allocation2 + $0x128] sm:$0xff]
    %v156 = vld [vmem:[#allocation2 + $0x130] sm:$0xff]
    %v157 = vld [vmem:[#allocation2 + $0x138] sm:$0xff]
    %v158 = vld [vmem:[#allocation2 + $0x140] sm:$0xff]
    %v159 = vld [vmem:[#allocation2 + $0x148] sm:$0xff]
    %v160 = vld [vmem:[#allocation2 + $0x150] sm:$0xff]
    %v161 = vld [vmem:[#allocation2 + $0x158] sm:$0xff]
    %v162 = vld [vmem:[#allocation2 + $0x160] sm:$0xff]
    %v163 = vld [vmem:[#allocation2 + $0x168] sm:$0xff]
    %v164 = vld [vmem:[#allocation2 + $0x170] sm:$0xff]
    %v165 = vld [vmem:[#allocation2 + $0x178] sm:$0xff]
    %v166 = vld [vmem:[#allocation2 + $0x180] sm:$0xff]
    %v167 = vld [vmem:[#allocation2 + $0x188] sm:$0xff]
    %v168 = vld [vmem:[#allocation2 + $0x190] sm:$0xff]
    %v169 = vld [vmem:[#allocation2 + $0x198] sm:$0xff]
    %v170 = vld [vmem:[#allocation2 + $0x1a0] sm:$0xff]
    %v171 = vld [vmem:[#allocation2 + $0x1a8] sm:$0xff]
    %v172 = vld [vmem:[#allocation2 + $0x1b0] sm:$0xff]
    %v173 = vld [vmem:[#allocation2 + $0x1b8] sm:$0xff]
    %v174 = vld [vmem:[#allocation2 + $0x1c0] sm:$0xff]
    %v175 = vld [vmem:[#allocation2 + $0x1c8] sm:$0xff]
    %v176 = vld [vmem:[#allocation2 + $0x1d0] sm:$0xff]
    %v177 = vld [vmem:[#allocation2 + $0x1d8] sm:$0xff]
    %v178 = vld [vmem:[#allocation2 + $0x1e0] sm:$0xff]
    %v179 = vld [vmem:[#allocation2 + $0x1e8] sm:$0xff]
    %v180 = vld [vmem:[#allocation2 + $0x1f0] sm:$0xff]
    %v181 = vld [vmem:[#allocation2 + $0x1f8] sm:$0xff]
    %v182 = vld [vmem:[#allocation2 + $0x200] sm:$0xff]
    %v183 = vld [vmem:[#allocation2 + $0x208] sm:$0xff]
    %v184 = vld [vmem:[#allocation2 + $0x210] sm:$0xff]
    %v185 = vld [vmem:[#allocation2 + $0x218] sm:$0xff]
    %v186 = vld [vmem:[#allocation2 + $0x220] sm:$0xff]
    %v187 = vld [vmem:[#allocation2 + $0x228] sm:$0xff]
    %v188 = vld [vmem:[#allocation2 + $0x230] sm:$0xff]
    %v189 = vld [vmem:[#allocation2 + $0x238] sm:$0xff]
    %v190 = vld [vmem:[#allocation2 + $0x240] sm:$0xff]
    %v191 = vld [vmem:[#allocation2 + $0x248] sm:$0xff]
    %v192 = vld [vmem:[#allocation2 + $0x250] sm:$0xff]
    %v193 = vld [vmem:[#allocation2 + $0x258] sm:$0xff]
    %v194 = vld [vmem:[#allocation2 + $0x260] sm:$0xff]
    %v195 = vld [vmem:[#allocation2 + $0x268] sm:$0xff]
    %v196 = vld [vmem:[#allocation2 + $0x270] sm:$0xff]
    %v197 = vld [vmem:[#allocation2 + $0x278] sm:$0xff]
    %v198 = vld [vmem:[#allocation2 + $0x280] sm:$0xff]
    %v199 = vld [vmem:[#allocation2 + $0x288] sm:$0xff]
    %v200 = vld [vmem:[#allocation2 + $0x290] sm:$0xff]
    %v201 = vld [vmem:[#allocation2 + $0x298] sm:$0xff]
    %v202 = vld [vmem:[#allocation2 + $0x2a0] sm:$0xff]
    %v203 = vld [vmem:[#allocation2 + $0x2a8] sm:$0xff]
    %v204 = vld [vmem:[#allocation2 + $0x2b0] sm:$0xff]
    %v205 = vld [vmem:[#allocation2 + $0x2b8] sm:$0xff]
    %v206 = vld [vmem:[#allocation2 + $0x2c0] sm:$0xff]
    %v207 = vld [vmem:[#allocation2 + $0x2c8] sm:$0xff]
    %v208 = vld [vmem:[#allocation2 + $0x2d0] sm:$0xff]
    %v209 = vld [vmem:[#allocation2 + $0x2d8] sm:$0xff]
    %v210 = vld [vmem:[#allocation2 + $0x2e0] sm:$0xff]
    %v211 = vld [vmem:[#allocation2 + $0x2e8] sm:$0xff]
    %v212 = vld [vmem:[#allocation2 + $0x2f0] sm:$0xff]
    %v213 = vld [vmem:[#allocation2 + $0x2f8] sm:$0xff]
    %v214 = vld [vmem:[#allocation2 + $0x300] sm:$0xff]
    %v215 = vld [vmem:[#allocation2 + $0x308] sm:$0xff]
    %v216 = vld [vmem:[#allocation2 + $0x310] sm:$0xff]
    %v217 = vld [vmem:[#allocation2 + $0x318] sm:$0xff]
    %v218 = vld [vmem:[#allocation2 + $0x320] sm:$0xff]
    %v219 = vld [vmem:[#allocation2 + $0x328] sm:$0xff]
    %v220 = vld [vmem:[#allocation2 + $0x330] sm:$0xff]
    %v221 = vld [vmem:[#allocation2 + $0x338] sm:$0xff]
    %v222 = vld [vmem:[#allocation2 + $0x340] sm:$0xff]
    %v223 = vld [vmem:[#allocation2 + $0x348] sm:$0xff]
    %v224 = vld [vmem:[#allocation2 + $0x350] sm:$0xff]
    %v225 = vld [vmem:[#allocation2 + $0x358] sm:$0xff]
    %v226 = vld [vmem:[#allocation2 + $0x360] sm:$0xff]
    %v227 = vld [vmem:[#allocation2 + $0x368] sm:$0xff]
    %v228 = vld [vmem:[#allocation2 + $0x370] sm:$0xff]
    %v229 = vld [vmem:[#allocation2 + $0x378] sm:$0xff]
    %v230 = vld [vmem:[#allocation2 + $0x380] sm:$0xff]
    %v231 = vld [vmem:[#allocation2 + $0x388] sm:$0xff]
    %v232 = vld [vmem:[#allocation2 + $0x390] sm:$0xff]
    %v233 = vld [vmem:[#allocation2 + $0x398] sm:$0xff]
    %v234 = vld [vmem:[#allocation2 + $0x3a0] sm:$0xff]
    %v235 = vld [vmem:[#allocation2 + $0x3a8] sm:$0xff]
    %v236 = vld [vmem:[#allocation2 + $0x3b0] sm:$0xff]
    %v237 = vld [vmem:[#allocation2 + $0x3b8] sm:$0xff]
    %v238 = vld [vmem:[#allocation2 + $0x3c0] sm:$0xff]
    %v239 = vld [vmem:[#allocation2 + $0x3c8] sm:$0xff]
    %v240 = vld [vmem:[#allocation2 + $0x3d0] sm:$0xff]
    %v241 = vld [vmem:[#allocation2 + $0x3d8] sm:$0xff]
    %v242 = vld [vmem:[#allocation2 + $0x3e0] sm:$0xff]
    %v243 = vld [vmem:[#allocation2 + $0x3e8] sm:$0xff]
    %v244 = vld [vmem:[#allocation2 + $0x3f0] sm:$0xff]
    %v245 = vld [vmem:[#allocation2 + $0x3f8] sm:$0xff]
    %v246 = vld [vmem:[#allocation2 + $0x400] sm:$0xff]
    %v247 = vld [vmem:[#allocation2 + $0x408] sm:$0xff]
    %v248 = vld [vmem:[#allocation2 + $0x410] sm:$0xff]
    %v249 = vld [vmem:[#allocation2 + $0x418] sm:$0xff]
    %v250 = vld [vmem:[#allocation2 + $0x420] sm:$0xff]
    %v251 = vld [vmem:[#allocation2 + $0x428] sm:$0xff]
    %v252 = vld [vmem:[#allocation2 + $0x430] sm:$0xff]
    %v253 = vld [vmem:[#allocation2 + $0x438] sm:$0xff]
    %v254 = vld [vmem:[#allocation2 + $0x440] sm:$0xff]
    %v255 = vld [vmem:[#allocation2 + $0x448] sm:$0xff]
    %v256 = vld [vmem:[#allocation2 + $0x450] sm:$0xff]
    %v257 = vld [vmem:[#allocation2 + $0x458] sm:$0xff]
    %v258 = vld [vmem:[#allocation2 + $0x460] sm:$0xff]
    %v259 = vld [vmem:[#allocation2 + $0x468] sm:$0xff]
    %v260 = vld [vmem:[#allocation2 + $0x470] sm:$0xff]
    %v261 = vld [vmem:[#allocation2 + $0x478] sm:$0xff]
    %v262 = vld [vmem:[#allocation2 + $0x480] sm:$0xff]
    %v263 = vld [vmem:[#allocation2 + $0x488] sm:$0xff]
    %v264 = vld [vmem:[#allocation2 + $0x490] sm:$0xff]
    %v265 = vld [vmem:[#allocation2 + $0x498] sm:$0xff]
    %v266 = vld [vmem:[#allocation2 + $0x4a0] sm:$0xff]
    %v267 = vld [vmem:[#allocation2 + $0x4a8] sm:$0xff]
    %v268 = vld [vmem:[#allocation2 + $0x4b0] sm:$0xff]
    %v269 = vld [vmem:[#allocation2 + $0x4b8] sm:$0xff]
    %v270 = vld [vmem:[#allocation2 + $0x4c0] sm:$0xff]
    %v271 = vld [vmem:[#allocation2 + $0x4c8] sm:$0xff]
    %v272 = vld [vmem:[#allocation2 + $0x4d0] sm:$0xff]
    %v273 = vld [vmem:[#allocation2 + $0x4d8] sm:$0xff]
    %v274 = vld [vmem:[#allocation2 + $0x4e0] sm:$0xff]
    %v275 = vld [vmem:[#allocation2 + $0x4e8] sm:$0xff]
    %v276 = vld [vmem:[#allocation2 + $0x4f0] sm:$0xff]
    %v277 = vld [vmem:[#allocation2 + $0x4f8] sm:$0xff]
    %v278 = vld [vmem:[#allocation2 + $0x500] sm:$0xff]
    %v279 = vld [vmem:[#allocation2 + $0x508] sm:$0xff]
    %v280 = vld [vmem:[#allocation2 + $0x510] sm:$0xff]
    %v281 = vld [vmem:[#allocation2 + $0x518] sm:$0xff]
    %v282 = vld [vmem:[#allocation2 + $0x520] sm:$0xff]
    %v283 = vld [vmem:[#allocation2 + $0x528] sm:$0xff]
    %v284 = vld [vmem:[#allocation2 + $0x530] sm:$0xff]
    %v285 = vld [vmem:[#allocation2 + $0x538] sm:$0xff]
    %v286 = vld [vmem:[#allocation2 + $0x540] sm:$0xff]
    %v287 = vld [vmem:[#allocation2 + $0x548] sm:$0xff]
    %v288 = vld [vmem:[#allocation2 + $0x550] sm:$0xff]
    %v289 = vld [vmem:[#allocation2 + $0x558] sm:$0xff]
    %v290 = vld [vmem:[#allocation2 + $0x560] sm:$0xff]
    %v291 = vld [vmem:[#allocation2 + $0x568] sm:$0xff]
    %v292 = vld [vmem:[#allocation2 + $0x570] sm:$0xff]
    %v293 = vld [vmem:[#allocation2 + $0x578] sm:$0xff]
    %v294 = vld [vmem:[#allocation2 + $0x580] sm:$0xff]
    %v295 = vld [vmem:[#allocation2 + $0x588] sm:$0xff]
    %v296 = vld [vmem:[#allocation2 + $0x590] sm:$0xff]
    %v297 = vld [vmem:[#allocation2 + $0x598] sm:$0xff]
    %v298 = vld [vmem:[#allocation2 + $0x5a0] sm:$0xff]
    %v299 = vld [vmem:[#allocation2 + $0x5a8] sm:$0xff]
    %v300 = vld [vmem:[#allocation2 + $0x5b0] sm:$0xff]
    %v301 = vld [vmem:[#allocation2 + $0x5b8] sm:$0xff]
    %v302 = vld [vmem:[#allocation2 + $0x5c0] sm:$0xff]
    %v303 = vld [vmem:[#allocation2 + $0x5c8] sm:$0xff]
    %v304 = vld [vmem:[#allocation2 + $0x5d0] sm:$0xff]
    %v305 = vld [vmem:[#allocation2 + $0x5d8] sm:$0xff]
    %v306 = vld [vmem:[#allocation2 + $0x5e0] sm:$0xff]
    %v307 = vld [vmem:[#allocation2 + $0x5e8] sm:$0xff]
    %v308 = vld [vmem:[#allocation2 + $0x5f0] sm:$0xff]
    %v309 = vld [vmem:[#allocation2 + $0x5f8] sm:$0xff]
    %v310 = vld [vmem:[#allocation2 + $0x600] sm:$0xff]
    %v311 = vld [vmem:[#allocation2 + $0x608] sm:$0xff]
    %v312 = vld [vmem:[#allocation2 + $0x610] sm:$0xff]
    %v313 = vld [vmem:[#allocation2 + $0x618] sm:$0xff]
    %v314 = vld [vmem:[#allocation2 + $0x620] sm:$0xff]
    %v315 = vld [vmem:[#allocation2 + $0x628] sm:$0xff]
    %v316 = vld [vmem:[#allocation2 + $0x630] sm:$0xff]
    %v317 = vld [vmem:[#allocation2 + $0x638] sm:$0xff]
    %v318 = vld [vmem:[#allocation2 + $0x640] sm:$0xff]
    %v319 = vld [vmem:[#allocation2 + $0x648] sm:$0xff]
    %v320 = vld [vmem:[#allocation2 + $0x650] sm:$0xff]
    %v321 = vld [vmem:[#allocation2 + $0x658] sm:$0xff]
    %v322 = vld [vmem:[#allocation2 + $0x660] sm:$0xff]
    %v323 = vld [vmem:[#allocation2 + $0x668] sm:$0xff]
    %v324 = vld [vmem:[#allocation2 + $0x670] sm:$0xff]
    %v325 = vld [vmem:[#allocation2 + $0x678] sm:$0xff]
    %v326 = vld [vmem:[#allocation2 + $0x680] sm:$0xff]
    %v327 = vld [vmem:[#allocation2 + $0x688] sm:$0xff]
    %v328 = vld [vmem:[#allocation2 + $0x690] sm:$0xff]
    %v329 = vld [vmem:[#allocation2 + $0x698] sm:$0xff]
    %v330 = vld [vmem:[#allocation2 + $0x6a0] sm:$0xff]
    %v331 = vld [vmem:[#allocation2 + $0x6a8] sm:$0xff]
    %v332 = vld [vmem:[#allocation2 + $0x6b0] sm:$0xff]
    %v333 = vld [vmem:[#allocation2 + $0x6b8] sm:$0xff]
    %v334 = vld [vmem:[#allocation2 + $0x6c0] sm:$0xff]
    %v335 = vld [vmem:[#allocation2 + $0x6c8] sm:$0xff]
    %v336 = vld [vmem:[#allocation2 + $0x6d0] sm:$0xff]
    %v337 = vld [vmem:[#allocation2 + $0x6d8] sm:$0xff]
    %v338 = vld [vmem:[#allocation2 + $0x6e0] sm:$0xff]
    %v339 = vld [vmem:[#allocation2 + $0x6e8] sm:$0xff]
    %v340 = vld [vmem:[#allocation2 + $0x6f0] sm:$0xff]
    %v341 = vld [vmem:[#allocation2 + $0x6f8] sm:$0xff]
    %v342 = vld [vmem:[#allocation2 + $0x700] sm:$0xff]
    %v343 = vld [vmem:[#allocation2 + $0x708] sm:$0xff]
    %v344 = vld [vmem:[#allocation2 + $0x710] sm:$0xff]
    %v345 = vld [vmem:[#allocation2 + $0x718] sm:$0xff]
    %v346 = vld [vmem:[#allocation2 + $0x720] sm:$0xff]
    %v347 = vld [vmem:[#allocation2 + $0x728] sm:$0xff]
    %v348 = vld [vmem:[#allocation2 + $0x730] sm:$0xff]
    %v349 = vld [vmem:[#allocation2 + $0x738] sm:$0xff]
    %v350 = vld [vmem:[#allocation2 + $0x740] sm:$0xff]
    %v351 = vld [vmem:[#allocation2 + $0x748] sm:$0xff]
    %v352 = vld [vmem:[#allocation2 + $0x750] sm:$0xff]
    %v353 = vld [vmem:[#allocation2 + $0x758] sm:$0xff]
    %v354 = vld [vmem:[#allocation2 + $0x760] sm:$0xff]
    %v355 = vld [vmem:[#allocation2 + $0x768] sm:$0xff]
    %v356 = vld [vmem:[#allocation2 + $0x770] sm:$0xff]
    %v357 = vld [vmem:[#allocation2 + $0x778] sm:$0xff]
    %v358 = vld [vmem:[#allocation2 + $0x780] sm:$0xff]
    %v359 = vld [vmem:[#allocation2 + $0x788] sm:$0xff]
    %v360 = vld [vmem:[#allocation2 + $0x790] sm:$0xff]
    %v361 = vld [vmem:[#allocation2 + $0x798] sm:$0xff]
    %v362 = vld [vmem:[#allocation2 + $0x7a0] sm:$0xff]
    %v363 = vld [vmem:[#allocation2 + $0x7a8] sm:$0xff]
    %v364 = vld [vmem:[#allocation2 + $0x7b0] sm:$0xff]
    %v365 = vld [vmem:[#allocation2 + $0x7b8] sm:$0xff]
    %v366 = vld [vmem:[#allocation2 + $0x7c0] sm:$0xff]
    %v367 = vld [vmem:[#allocation2 + $0x7c8] sm:$0xff]
    %v368 = vld [vmem:[#allocation2 + $0x7d0] sm:$0xff]
    %v369 = vld [vmem:[#allocation2 + $0x7d8] sm:$0xff]
    %v370 = vld [vmem:[#allocation2 + $0x7e0] sm:$0xff]
    %v371 = vld [vmem:[#allocation2 + $0x7e8] sm:$0xff]
    %v372 = vld [vmem:[#allocation2 + $0x7f0] sm:$0xff]
    %v373 = vld [vmem:[#allocation2 + $0x7f8] sm:$0xff]
    %v374 = vld [vmem:[%s3] sm:$0xf]
    %v376 = vlaneseq
    %v377 = vshrl.u32 %v376, 7
    %v378 = vsub.s32 0, %v377
    %v379 = vrot.slane %v374, %v378
    %v380 = vlaneseq
    %v381 = vshrl.u32 %v380, 7
    %v382 = vsub.s32 1, %v381
    %v383 = vrot.slane %v374, %v382
    %v384 = vlaneseq
    %v385 = vshrl.u32 %v384, 7
    %v386 = vsub.s32 2, %v385
    %v387 = vrot.slane %v374, %v386
    %v388 = vlaneseq
    %v389 = vshrl.u32 %v388, 7
    %v390 = vsub.s32 3, %v389
    %v391 = vrot.slane %v374, %v390
    %v397 = vcombine.high %v117, %v117
    %v399 = vunpack.c.l.s4 1966171168
    %v400 = vunpack.c.0.s8 %v399
    %v401 = vlaneseq
    %v402 = vshrl.u32 %v401, 7
    %v403 = vsub.s32 %v400, %v402
    %v404 = vrot.slane %v117, %v403
    %v406 = vunpack.c.l.s4 1966171168
    %v407 = vunpack.c.0.s8 %v406
    %v408 = vlaneseq
    %v409 = vshrl.u32 %v408, 7
    %v410 = vsub.s32 %v407, %v409
    %v411 = vrot.slane %v397, %v410
    %v412 = vcombine.high %v404, %v404
    %v413 = vcombine.high %v411, %v411
    %v415 = vunpack.c.l.s4 1966171168
    %v416 = vunpack.c.0.s8 %v415
    %v417 = vlaneseq
    %v418 = vshrl.u32 %v417, 7
    %v419 = vsub.s32 %v416, %v418
    %v420 = vrot.slane %v404, %v419
    %v422 = vunpack.c.l.s4 1966171168
    %v423 = vunpack.c.0.s8 %v422
    %v424 = vlaneseq
    %v425 = vshrl.u32 %v424, 7
    %v426 = vsub.s32 %v423, %v425
    %v427 = vrot.slane %v411, %v426
    %v429 = vunpack.c.l.s4 1966171168
    %v430 = vunpack.c.0.s8 %v429
    %v431 = vlaneseq
    %v432 = vshrl.u32 %v431, 7
    %v433 = vsub.s32 %v430, %v432
    %v434 = vrot.slane %v412, %v433
    %v436 = vunpack.c.l.s4 1966171168
    %v437 = vunpack.c.0.s8 %v436
    %v438 = vlaneseq
    %v439 = vshrl.u32 %v438, 7
    %v440 = vsub.s32 %v437, %v439
    %v441 = vrot.slane %v413, %v440
    %v442 = vcombine.high %v420, %v420
    %v443 = vcombine.high %v427, %v427
    %v444 = vcombine.high %v434, %v434
    %v445 = vcombine.high %v441, %v441
    %v710 = vunpack.c.l.b16 %v118
    %v711 = vunpack.c.h.b16 %v118
    %v712 = vunpack.c.l.b16 %v119
    %v713 = vunpack.c.h.b16 %v119
    %v714 = vunpack.c.l.b16 %v120
    %v715 = vunpack.c.h.b16 %v120
    %v716 = vunpack.c.l.b16 %v121
    %v717 = vunpack.c.h.b16 %v121
    %v718 = vunpack.c.l.b16 %v122
    %v719 = vunpack.c.h.b16 %v122
    %v720 = vunpack.c.l.b16 %v123
    %v721 = vunpack.c.h.b16 %v123
    %v722 = vunpack.c.l.b16 %v124
    %v723 = vunpack.c.h.b16 %v124
    %v724 = vunpack.c.l.b16 %v125
    %v725 = vunpack.c.h.b16 %v125
    %v726 = vunpack.c.l.b16 %v126
    %v727 = vunpack.c.h.b16 %v126
    %v728 = vunpack.c.l.b16 %v127
    %v729 = vunpack.c.h.b16 %v127
    %v730 = vunpack.c.l.b16 %v128
    %v731 = vunpack.c.h.b16 %v128
    %v732 = vunpack.c.l.b16 %v129
    %v733 = vunpack.c.h.b16 %v129
    %v734 = vunpack.c.l.b16 %v130
    %v735 = vunpack.c.h.b16 %v130
    %v736 = vunpack.c.l.b16 %v131
    %v737 = vunpack.c.h.b16 %v131
    %v738 = vunpack.c.l.b16 %v132
    %v739 = vunpack.c.h.b16 %v132
    %v740 = vunpack.c.l.b16 %v133
    %v741 = vunpack.c.h.b16 %v133
    %v742 = vunpack.c.l.b16 %v134
    %v743 = vunpack.c.h.b16 %v134
    %v744 = vunpack.c.l.b16 %v135
    %v745 = vunpack.c.h.b16 %v135
    %v746 = vunpack.c.l.b16 %v136
    %v747 = vunpack.c.h.b16 %v136
    %v748 = vunpack.c.l.b16 %v137
    %v749 = vunpack.c.h.b16 %v137
    %v750 = vunpack.c.l.b16 %v138
    %v751 = vunpack.c.h.b16 %v138
    %v752 = vunpack.c.l.b16 %v139
    %v753 = vunpack.c.h.b16 %v139
    %v754 = vunpack.c.l.b16 %v140
    %v755 = vunpack.c.h.b16 %v140
    %v756 = vunpack.c.l.b16 %v141
    %v757 = vunpack.c.h.b16 %v141
    %v758 = vunpack.c.l.b16 %v142
    %v759 = vunpack.c.h.b16 %v142
    %v760 = vunpack.c.l.b16 %v143
    %v761 = vunpack.c.h.b16 %v143
    %v762 = vunpack.c.l.b16 %v144
    %v763 = vunpack.c.h.b16 %v144
    %v764 = vunpack.c.l.b16 %v145
    %v765 = vunpack.c.h.b16 %v145
    %v766 = vunpack.c.l.b16 %v146
    %v767 = vunpack.c.h.b16 %v146
    %v768 = vunpack.c.l.b16 %v147
    %v769 = vunpack.c.h.b16 %v147
    %v770 = vunpack.c.l.b16 %v148
    %v771 = vunpack.c.h.b16 %v148
    %v772 = vunpack.c.l.b16 %v149
    %v773 = vunpack.c.h.b16 %v149
    %v774 = vunpack.c.l.b16 %v150
    %v775 = vunpack.c.h.b16 %v150
    %v776 = vunpack.c.l.b16 %v151
    %v777 = vunpack.c.h.b16 %v151
    %v778 = vunpack.c.l.b16 %v152
    %v779 = vunpack.c.h.b16 %v152
    %v780 = vunpack.c.l.b16 %v153
    %v781 = vunpack.c.h.b16 %v153
    %v782 = vunpack.c.l.b16 %v154
    %v783 = vunpack.c.h.b16 %v154
    %v784 = vunpack.c.l.b16 %v155
    %v785 = vunpack.c.h.b16 %v155
    %v786 = vunpack.c.l.b16 %v156
    %v787 = vunpack.c.h.b16 %v156
    %v788 = vunpack.c.l.b16 %v157
    %v789 = vunpack.c.h.b16 %v157
    %v790 = vunpack.c.l.b16 %v158
    %v791 = vunpack.c.h.b16 %v158
    %v792 = vunpack.c.l.b16 %v159
    %v793 = vunpack.c.h.b16 %v159
    %v794 = vunpack.c.l.b16 %v160
    %v795 = vunpack.c.h.b16 %v160
    %v796 = vunpack.c.l.b16 %v161
    %v797 = vunpack.c.h.b16 %v161
    %v798 = vunpack.c.l.b16 %v162
    %v799 = vunpack.c.h.b16 %v162
    %v800 = vunpack.c.l.b16 %v163
    %v801 = vunpack.c.h.b16 %v163
    %v802 = vunpack.c.l.b16 %v164
    %v803 = vunpack.c.h.b16 %v164
    %v804 = vunpack.c.l.b16 %v165
    %v805 = vunpack.c.h.b16 %v165
    %v806 = vunpack.c.l.b16 %v166
    %v807 = vunpack.c.h.b16 %v166
    %v808 = vunpack.c.l.b16 %v167
    %v809 = vunpack.c.h.b16 %v167
    %v810 = vunpack.c.l.b16 %v168
    %v811 = vunpack.c.h.b16 %v168
    %v812 = vunpack.c.l.b16 %v169
    %v813 = vunpack.c.h.b16 %v169
    %v814 = vunpack.c.l.b16 %v170
    %v815 = vunpack.c.h.b16 %v170
    %v816 = vunpack.c.l.b16 %v171
    %v817 = vunpack.c.h.b16 %v171
    %v818 = vunpack.c.l.b16 %v172
    %v819 = vunpack.c.h.b16 %v172
    %v820 = vunpack.c.l.b16 %v173
    %v821 = vunpack.c.h.b16 %v173
    %v822 = vunpack.c.l.b16 %v174
    %v823 = vunpack.c.h.b16 %v174
    %v824 = vunpack.c.l.b16 %v175
    %v825 = vunpack.c.h.b16 %v175
    %v826 = vunpack.c.l.b16 %v176
    %v827 = vunpack.c.h.b16 %v176
    %v828 = vunpack.c.l.b16 %v177
    %v829 = vunpack.c.h.b16 %v177
    %v830 = vunpack.c.l.b16 %v178
    %v831 = vunpack.c.h.b16 %v178
    %v832 = vunpack.c.l.b16 %v179
    %v833 = vunpack.c.h.b16 %v179
    %v834 = vunpack.c.l.b16 %v180
    %v835 = vunpack.c.h.b16 %v180
    %v836 = vunpack.c.l.b16 %v181
    %v837 = vunpack.c.h.b16 %v181
    %v838 = vunpack.c.l.b16 %v182
    %v839 = vunpack.c.h.b16 %v182
    %v840 = vunpack.c.l.b16 %v183
    %v841 = vunpack.c.h.b16 %v183
    %v842 = vunpack.c.l.b16 %v184
    %v843 = vunpack.c.h.b16 %v184
    %v844 = vunpack.c.l.b16 %v185
    %v845 = vunpack.c.h.b16 %v185
    %v846 = vunpack.c.l.b16 %v186
    %v847 = vunpack.c.h.b16 %v186
    %v848 = vunpack.c.l.b16 %v187
    %v849 = vunpack.c.h.b16 %v187
    %v850 = vunpack.c.l.b16 %v188
    %v851 = vunpack.c.h.b16 %v188
    %v852 = vunpack.c.l.b16 %v189
    %v853 = vunpack.c.h.b16 %v189
    %v854 = vunpack.c.l.b16 %v190
    %v855 = vunpack.c.h.b16 %v190
    %v856 = vunpack.c.l.b16 %v191
    %v857 = vunpack.c.h.b16 %v191
    %v858 = vunpack.c.l.b16 %v192
    %v859 = vunpack.c.h.b16 %v192
    %v860 = vunpack.c.l.b16 %v193
    %v861 = vunpack.c.h.b16 %v193
    %v862 = vunpack.c.l.b16 %v194
    %v863 = vunpack.c.h.b16 %v194
    %v864 = vunpack.c.l.b16 %v195
    %v865 = vunpack.c.h.b16 %v195
    %v866 = vunpack.c.l.b16 %v196
    %v867 = vunpack.c.h.b16 %v196
    %v868 = vunpack.c.l.b16 %v197
    %v869 = vunpack.c.h.b16 %v197
    %v870 = vunpack.c.l.b16 %v198
    %v871 = vunpack.c.h.b16 %v198
    %v872 = vunpack.c.l.b16 %v199
    %v873 = vunpack.c.h.b16 %v199
    %v874 = vunpack.c.l.b16 %v200
    %v875 = vunpack.c.h.b16 %v200
    %v876 = vunpack.c.l.b16 %v201
    %v877 = vunpack.c.h.b16 %v201
    %v878 = vunpack.c.l.b16 %v202
    %v879 = vunpack.c.h.b16 %v202
    %v880 = vunpack.c.l.b16 %v203
    %v881 = vunpack.c.h.b16 %v203
    %v882 = vunpack.c.l.b16 %v204
    %v883 = vunpack.c.h.b16 %v204
    %v884 = vunpack.c.l.b16 %v205
    %v885 = vunpack.c.h.b16 %v205
    %v886 = vunpack.c.l.b16 %v206
    %v887 = vunpack.c.h.b16 %v206
    %v888 = vunpack.c.l.b16 %v207
    %v889 = vunpack.c.h.b16 %v207
    %v890 = vunpack.c.l.b16 %v208
    %v891 = vunpack.c.h.b16 %v208
    %v892 = vunpack.c.l.b16 %v209
    %v893 = vunpack.c.h.b16 %v209
    %v894 = vunpack.c.l.b16 %v210
    %v895 = vunpack.c.h.b16 %v210
    %v896 = vunpack.c.l.b16 %v211
    %v897 = vunpack.c.h.b16 %v211
    %v898 = vunpack.c.l.b16 %v212
    %v899 = vunpack.c.h.b16 %v212
    %v900 = vunpack.c.l.b16 %v213
    %v901 = vunpack.c.h.b16 %v213
    %v902 = vunpack.c.l.b16 %v214
    %v903 = vunpack.c.h.b16 %v214
    %v904 = vunpack.c.l.b16 %v215
    %v905 = vunpack.c.h.b16 %v215
    %v906 = vunpack.c.l.b16 %v216
    %v907 = vunpack.c.h.b16 %v216
    %v908 = vunpack.c.l.b16 %v217
    %v909 = vunpack.c.h.b16 %v217
    %v910 = vunpack.c.l.b16 %v218
    %v911 = vunpack.c.h.b16 %v218
    %v912 = vunpack.c.l.b16 %v219
    %v913 = vunpack.c.h.b16 %v219
    %v914 = vunpack.c.l.b16 %v220
    %v915 = vunpack.c.h.b16 %v220
    %v916 = vunpack.c.l.b16 %v221
    %v917 = vunpack.c.h.b16 %v221
    %v918 = vunpack.c.l.b16 %v222
    %v919 = vunpack.c.h.b16 %v222
    %v920 = vunpack.c.l.b16 %v223
    %v921 = vunpack.c.h.b16 %v223
    %v922 = vunpack.c.l.b16 %v224
    %v923 = vunpack.c.h.b16 %v224
    %v924 = vunpack.c.l.b16 %v225
    %v925 = vunpack.c.h.b16 %v225
    %v926 = vunpack.c.l.b16 %v226
    %v927 = vunpack.c.h.b16 %v226
    %v928 = vunpack.c.l.b16 %v227
    %v929 = vunpack.c.h.b16 %v227
    %v930 = vunpack.c.l.b16 %v228
    %v931 = vunpack.c.h.b16 %v228
    %v932 = vunpack.c.l.b16 %v229
    %v933 = vunpack.c.h.b16 %v229
    %v934 = vunpack.c.l.b16 %v230
    %v935 = vunpack.c.h.b16 %v230
    %v936 = vunpack.c.l.b16 %v231
    %v937 = vunpack.c.h.b16 %v231
    %v938 = vunpack.c.l.b16 %v232
    %v939 = vunpack.c.h.b16 %v232
    %v940 = vunpack.c.l.b16 %v233
    %v941 = vunpack.c.h.b16 %v233
    %v942 = vunpack.c.l.b16 %v234
    %v943 = vunpack.c.h.b16 %v234
    %v944 = vunpack.c.l.b16 %v235
    %v945 = vunpack.c.h.b16 %v235
    %v946 = vunpack.c.l.b16 %v236
    %v947 = vunpack.c.h.b16 %v236
    %v948 = vunpack.c.l.b16 %v237
    %v949 = vunpack.c.h.b16 %v237
    %v950 = vunpack.c.l.b16 %v238
    %v951 = vunpack.c.h.b16 %v238
    %v952 = vunpack.c.l.b16 %v239
    %v953 = vunpack.c.h.b16 %v239
    %v954 = vunpack.c.l.b16 %v240
    %v955 = vunpack.c.h.b16 %v240
    %v956 = vunpack.c.l.b16 %v241
    %v957 = vunpack.c.h.b16 %v241
    %v958 = vunpack.c.l.b16 %v242
    %v959 = vunpack.c.h.b16 %v242
    %v960 = vunpack.c.l.b16 %v243
    %v961 = vunpack.c.h.b16 %v243
    %v962 = vunpack.c.l.b16 %v244
    %v963 = vunpack.c.h.b16 %v244
    %v964 = vunpack.c.l.b16 %v245
    %v965 = vunpack.c.h.b16 %v245
    %v966 = vunpack.c.l.b16 %v246
    %v967 = vunpack.c.h.b16 %v246
    %v968 = vunpack.c.l.b16 %v247
    %v969 = vunpack.c.h.b16 %v247
    %v970 = vunpack.c.l.b16 %v248
    %v971 = vunpack.c.h.b16 %v248
    %v972 = vunpack.c.l.b16 %v249
    %v973 = vunpack.c.h.b16 %v249
    %v974 = vunpack.c.l.b16 %v250
    %v975 = vunpack.c.h.b16 %v250
    %v976 = vunpack.c.l.b16 %v251
    %v977 = vunpack.c.h.b16 %v251
    %v978 = vunpack.c.l.b16 %v252
    %v979 = vunpack.c.h.b16 %v252
    %v980 = vunpack.c.l.b16 %v253
    %v981 = vunpack.c.h.b16 %v253
    %v982 = vunpack.c.l.b16 %v254
    %v983 = vunpack.c.h.b16 %v254
    %v984 = vunpack.c.l.b16 %v255
    %v985 = vunpack.c.h.b16 %v255
    %v986 = vunpack.c.l.b16 %v256
    %v987 = vunpack.c.h.b16 %v256
    %v988 = vunpack.c.l.b16 %v257
    %v989 = vunpack.c.h.b16 %v257
    %v990 = vunpack.c.l.b16 %v258
    %v991 = vunpack.c.h.b16 %v258
    %v992 = vunpack.c.l.b16 %v259
    %v993 = vunpack.c.h.b16 %v259
    %v994 = vunpack.c.l.b16 %v260
    %v995 = vunpack.c.h.b16 %v260
    %v996 = vunpack.c.l.b16 %v261
    %v997 = vunpack.c.h.b16 %v261
    %v998 = vunpack.c.l.b16 %v262
    %v999 = vunpack.c.h.b16 %v262
    %v1000 = vunpack.c.l.b16 %v263
    %v1001 = vunpack.c.h.b16 %v263
    %v1002 = vunpack.c.l.b16 %v264
    %v1003 = vunpack.c.h.b16 %v264
    %v1004 = vunpack.c.l.b16 %v265
    %v1005 = vunpack.c.h.b16 %v265
    %v1006 = vunpack.c.l.b16 %v266
    %v1007 = vunpack.c.h.b16 %v266
    %v1008 = vunpack.c.l.b16 %v267
    %v1009 = vunpack.c.h.b16 %v267
    %v1010 = vunpack.c.l.b16 %v268
    %v1011 = vunpack.c.h.b16 %v268
    %v1012 = vunpack.c.l.b16 %v269
    %v1013 = vunpack.c.h.b16 %v269
    %v1014 = vunpack.c.l.b16 %v270
    %v1015 = vunpack.c.h.b16 %v270
    %v1016 = vunpack.c.l.b16 %v271
    %v1017 = vunpack.c.h.b16 %v271
    %v1018 = vunpack.c.l.b16 %v272
    %v1019 = vunpack.c.h.b16 %v272
    %v1020 = vunpack.c.l.b16 %v273
    %v1021 = vunpack.c.h.b16 %v273
    %v1022 = vunpack.c.l.b16 %v274
    %v1023 = vunpack.c.h.b16 %v274
    %v1024 = vunpack.c.l.b16 %v275
    %v1025 = vunpack.c.h.b16 %v275
    %v1026 = vunpack.c.l.b16 %v276
    %v1027 = vunpack.c.h.b16 %v276
    %v1028 = vunpack.c.l.b16 %v277
    %v1029 = vunpack.c.h.b16 %v277
    %v1030 = vunpack.c.l.b16 %v278
    %v1031 = vunpack.c.h.b16 %v278
    %v1032 = vunpack.c.l.b16 %v279
    %v1033 = vunpack.c.h.b16 %v279
    %v1034 = vunpack.c.l.b16 %v280
    %v1035 = vunpack.c.h.b16 %v280
    %v1036 = vunpack.c.l.b16 %v281
    %v1037 = vunpack.c.h.b16 %v281
    %v1038 = vunpack.c.l.b16 %v282
    %v1039 = vunpack.c.h.b16 %v282
    %v1040 = vunpack.c.l.b16 %v283
    %v1041 = vunpack.c.h.b16 %v283
    %v1042 = vunpack.c.l.b16 %v284
    %v1043 = vunpack.c.h.b16 %v284
    %v1044 = vunpack.c.l.b16 %v285
    %v1045 = vunpack.c.h.b16 %v285
    %v1046 = vunpack.c.l.b16 %v286
    %v1047 = vunpack.c.h.b16 %v286
    %v1048 = vunpack.c.l.b16 %v287
    %v1049 = vunpack.c.h.b16 %v287
    %v1050 = vunpack.c.l.b16 %v288
    %v1051 = vunpack.c.h.b16 %v288
    %v1052 = vunpack.c.l.b16 %v289
    %v1053 = vunpack.c.h.b16 %v289
    %v1054 = vunpack.c.l.b16 %v290
    %v1055 = vunpack.c.h.b16 %v290
    %v1056 = vunpack.c.l.b16 %v291
    %v1057 = vunpack.c.h.b16 %v291
    %v1058 = vunpack.c.l.b16 %v292
    %v1059 = vunpack.c.h.b16 %v292
    %v1060 = vunpack.c.l.b16 %v293
    %v1061 = vunpack.c.h.b16 %v293
    %v1062 = vunpack.c.l.b16 %v294
    %v1063 = vunpack.c.h.b16 %v294
    %v1064 = vunpack.c.l.b16 %v295
    %v1065 = vunpack.c.h.b16 %v295
    %v1066 = vunpack.c.l.b16 %v296
    %v1067 = vunpack.c.h.b16 %v296
    %v1068 = vunpack.c.l.b16 %v297
    %v1069 = vunpack.c.h.b16 %v297
    %v1070 = vunpack.c.l.b16 %v298
    %v1071 = vunpack.c.h.b16 %v298
    %v1072 = vunpack.c.l.b16 %v299
    %v1073 = vunpack.c.h.b16 %v299
    %v1074 = vunpack.c.l.b16 %v300
    %v1075 = vunpack.c.h.b16 %v300
    %v1076 = vunpack.c.l.b16 %v301
    %v1077 = vunpack.c.h.b16 %v301
    %v1078 = vunpack.c.l.b16 %v302
    %v1079 = vunpack.c.h.b16 %v302
    %v1080 = vunpack.c.l.b16 %v303
    %v1081 = vunpack.c.h.b16 %v303
    %v1082 = vunpack.c.l.b16 %v304
    %v1083 = vunpack.c.h.b16 %v304
    %v1084 = vunpack.c.l.b16 %v305
    %v1085 = vunpack.c.h.b16 %v305
    %v1086 = vunpack.c.l.b16 %v306
    %v1087 = vunpack.c.h.b16 %v306
    %v1088 = vunpack.c.l.b16 %v307
    %v1089 = vunpack.c.h.b16 %v307
    %v1090 = vunpack.c.l.b16 %v308
    %v1091 = vunpack.c.h.b16 %v308
    %v1092 = vunpack.c.l.b16 %v309
    %v1093 = vunpack.c.h.b16 %v309
    %v1094 = vunpack.c.l.b16 %v310
    %v1095 = vunpack.c.h.b16 %v310
    %v1096 = vunpack.c.l.b16 %v311
    %v1097 = vunpack.c.h.b16 %v311
    %v1098 = vunpack.c.l.b16 %v312
    %v1099 = vunpack.c.h.b16 %v312
    %v1100 = vunpack.c.l.b16 %v313
    %v1101 = vunpack.c.h.b16 %v313
    %v1102 = vunpack.c.l.b16 %v314
    %v1103 = vunpack.c.h.b16 %v314
    %v1104 = vunpack.c.l.b16 %v315
    %v1105 = vunpack.c.h.b16 %v315
    %v1106 = vunpack.c.l.b16 %v316
    %v1107 = vunpack.c.h.b16 %v316
    %v1108 = vunpack.c.l.b16 %v317
    %v1109 = vunpack.c.h.b16 %v317
    %v1110 = vunpack.c.l.b16 %v318
    %v1111 = vunpack.c.h.b16 %v318
    %v1112 = vunpack.c.l.b16 %v319
    %v1113 = vunpack.c.h.b16 %v319
    %v1114 = vunpack.c.l.b16 %v320
    %v1115 = vunpack.c.h.b16 %v320
    %v1116 = vunpack.c.l.b16 %v321
    %v1117 = vunpack.c.h.b16 %v321
    %v1118 = vunpack.c.l.b16 %v322
    %v1119 = vunpack.c.h.b16 %v322
    %v1120 = vunpack.c.l.b16 %v323
    %v1121 = vunpack.c.h.b16 %v323
    %v1122 = vunpack.c.l.b16 %v324
    %v1123 = vunpack.c.h.b16 %v324
    %v1124 = vunpack.c.l.b16 %v325
    %v1125 = vunpack.c.h.b16 %v325
    %v1126 = vunpack.c.l.b16 %v326
    %v1127 = vunpack.c.h.b16 %v326
    %v1128 = vunpack.c.l.b16 %v327
    %v1129 = vunpack.c.h.b16 %v327
    %v1130 = vunpack.c.l.b16 %v328
    %v1131 = vunpack.c.h.b16 %v328
    %v1132 = vunpack.c.l.b16 %v329
    %v1133 = vunpack.c.h.b16 %v329
    %v1134 = vunpack.c.l.b16 %v330
    %v1135 = vunpack.c.h.b16 %v330
    %v1136 = vunpack.c.l.b16 %v331
    %v1137 = vunpack.c.h.b16 %v331
    %v1138 = vunpack.c.l.b16 %v332
    %v1139 = vunpack.c.h.b16 %v332
    %v1140 = vunpack.c.l.b16 %v333
    %v1141 = vunpack.c.h.b16 %v333
    %v1142 = vunpack.c.l.b16 %v334
    %v1143 = vunpack.c.h.b16 %v334
    %v1144 = vunpack.c.l.b16 %v335
    %v1145 = vunpack.c.h.b16 %v335
    %v1146 = vunpack.c.l.b16 %v336
    %v1147 = vunpack.c.h.b16 %v336
    %v1148 = vunpack.c.l.b16 %v337
    %v1149 = vunpack.c.h.b16 %v337
    %v1150 = vunpack.c.l.b16 %v338
    %v1151 = vunpack.c.h.b16 %v338
    %v1152 = vunpack.c.l.b16 %v339
    %v1153 = vunpack.c.h.b16 %v339
    %v1154 = vunpack.c.l.b16 %v340
    %v1155 = vunpack.c.h.b16 %v340
    %v1156 = vunpack.c.l.b16 %v341
    %v1157 = vunpack.c.h.b16 %v341
    %v1158 = vunpack.c.l.b16 %v342
    %v1159 = vunpack.c.h.b16 %v342
    %v1160 = vunpack.c.l.b16 %v343
    %v1161 = vunpack.c.h.b16 %v343
    %v1162 = vunpack.c.l.b16 %v344
    %v1163 = vunpack.c.h.b16 %v344
    %v1164 = vunpack.c.l.b16 %v345
    %v1165 = vunpack.c.h.b16 %v345
    %v1166 = vunpack.c.l.b16 %v346
    %v1167 = vunpack.c.h.b16 %v346
    %v1168 = vunpack.c.l.b16 %v347
    %v1169 = vunpack.c.h.b16 %v347
    %v1170 = vunpack.c.l.b16 %v348
    %v1171 = vunpack.c.h.b16 %v348
    %v1172 = vunpack.c.l.b16 %v349
    %v1173 = vunpack.c.h.b16 %v349
    %v1174 = vunpack.c.l.b16 %v350
    %v1175 = vunpack.c.h.b16 %v350
    %v1176 = vunpack.c.l.b16 %v351
    %v1177 = vunpack.c.h.b16 %v351
    %v1178 = vunpack.c.l.b16 %v352
    %v1179 = vunpack.c.h.b16 %v352
    %v1180 = vunpack.c.l.b16 %v353
    %v1181 = vunpack.c.h.b16 %v353
    %v1182 = vunpack.c.l.b16 %v354
    %v1183 = vunpack.c.h.b16 %v354
    %v1184 = vunpack.c.l.b16 %v355
    %v1185 = vunpack.c.h.b16 %v355
    %v1186 = vunpack.c.l.b16 %v356
    %v1187 = vunpack.c.h.b16 %v356
    %v1188 = vunpack.c.l.b16 %v357
    %v1189 = vunpack.c.h.b16 %v357
    %v1190 = vunpack.c.l.b16 %v358
    %v1191 = vunpack.c.h.b16 %v358
    %v1192 = vunpack.c.l.b16 %v359
    %v1193 = vunpack.c.h.b16 %v359
    %v1194 = vunpack.c.l.b16 %v360
    %v1195 = vunpack.c.h.b16 %v360
    %v1196 = vunpack.c.l.b16 %v361
    %v1197 = vunpack.c.h.b16 %v361
    %v1198 = vunpack.c.l.b16 %v362
    %v1199 = vunpack.c.h.b16 %v362
    %v1200 = vunpack.c.l.b16 %v363
    %v1201 = vunpack.c.h.b16 %v363
    %v1202 = vunpack.c.l.b16 %v364
    %v1203 = vunpack.c.h.b16 %v364
    %v1204 = vunpack.c.l.b16 %v365
    %v1205 = vunpack.c.h.b16 %v365
    %v1206 = vunpack.c.l.b16 %v366
    %v1207 = vunpack.c.h.b16 %v366
    %v1208 = vunpack.c.l.b16 %v367
    %v1209 = vunpack.c.h.b16 %v367
    %v1210 = vunpack.c.l.b16 %v368
    %v1211 = vunpack.c.h.b16 %v368
    %v1212 = vunpack.c.l.b16 %v369
    %v1213 = vunpack.c.h.b16 %v369
    %v1214 = vunpack.c.l.b16 %v370
    %v1215 = vunpack.c.h.b16 %v370
    %v1216 = vunpack.c.l.b16 %v371
    %v1217 = vunpack.c.h.b16 %v371
    %v1218 = vunpack.c.l.b16 %v372
    %v1219 = vunpack.c.h.b16 %v372
    %v1220 = vunpack.c.l.b16 %v373
    %v1221 = vunpack.c.h.b16 %v373
    %v1222 = vpack.c.b16 %v714, %v710
    %v1223 = vpack.c.b16 %v715, %v711
    %v1224 = vpack.c.b16 %v716, %v712
    %v1225 = vpack.c.b16 %v717, %v713
    %v1226 = vpack.c.b16 %v722, %v718
    %v1227 = vpack.c.b16 %v723, %v719
    %v1228 = vpack.c.b16 %v724, %v720
    %v1229 = vpack.c.b16 %v725, %v721
    %v1230 = vpack.c.b16 %v730, %v726
    %v1231 = vpack.c.b16 %v731, %v727
    %v1232 = vpack.c.b16 %v732, %v728
    %v1233 = vpack.c.b16 %v733, %v729
    %v1234 = vpack.c.b16 %v738, %v734
    %v1235 = vpack.c.b16 %v739, %v735
    %v1236 = vpack.c.b16 %v740, %v736
    %v1237 = vpack.c.b16 %v741, %v737
    %v1238 = vpack.c.b16 %v746, %v742
    %v1239 = vpack.c.b16 %v747, %v743
    %v1240 = vpack.c.b16 %v748, %v744
    %v1241 = vpack.c.b16 %v749, %v745
    %v1242 = vpack.c.b16 %v754, %v750
    %v1243 = vpack.c.b16 %v755, %v751
    %v1244 = vpack.c.b16 %v756, %v752
    %v1245 = vpack.c.b16 %v757, %v753
    %v1246 = vpack.c.b16 %v762, %v758
    %v1247 = vpack.c.b16 %v763, %v759
    %v1248 = vpack.c.b16 %v764, %v760
    %v1249 = vpack.c.b16 %v765, %v761
    %v1250 = vpack.c.b16 %v770, %v766
    %v1251 = vpack.c.b16 %v771, %v767
    %v1252 = vpack.c.b16 %v772, %v768
    %v1253 = vpack.c.b16 %v773, %v769
    %v1254 = vpack.c.b16 %v778, %v774
    %v1255 = vpack.c.b16 %v779, %v775
    %v1256 = vpack.c.b16 %v780, %v776
    %v1257 = vpack.c.b16 %v781, %v777
    %v1258 = vpack.c.b16 %v786, %v782
    %v1259 = vpack.c.b16 %v787, %v783
    %v1260 = vpack.c.b16 %v788, %v784
    %v1261 = vpack.c.b16 %v789, %v785
    %v1262 = vpack.c.b16 %v794, %v790
    %v1263 = vpack.c.b16 %v795, %v791
    %v1264 = vpack.c.b16 %v796, %v792
    %v1265 = vpack.c.b16 %v797, %v793
    %v1266 = vpack.c.b16 %v802, %v798
    %v1267 = vpack.c.b16 %v803, %v799
    %v1268 = vpack.c.b16 %v804, %v800
    %v1269 = vpack.c.b16 %v805, %v801
    %v1270 = vpack.c.b16 %v810, %v806
    %v1271 = vpack.c.b16 %v811, %v807
    %v1272 = vpack.c.b16 %v812, %v808
    %v1273 = vpack.c.b16 %v813, %v809
    %v1274 = vpack.c.b16 %v818, %v814
    %v1275 = vpack.c.b16 %v819, %v815
    %v1276 = vpack.c.b16 %v820, %v816
    %v1277 = vpack.c.b16 %v821, %v817
    %v1278 = vpack.c.b16 %v826, %v822
    %v1279 = vpack.c.b16 %v827, %v823
    %v1280 = vpack.c.b16 %v828, %v824
    %v1281 = vpack.c.b16 %v829, %v825
    %v1282 = vpack.c.b16 %v834, %v830
    %v1283 = vpack.c.b16 %v835, %v831
    %v1284 = vpack.c.b16 %v836, %v832
    %v1285 = vpack.c.b16 %v837, %v833
    %v1286 = vpack.c.b16 %v842, %v838
    %v1287 = vpack.c.b16 %v843, %v839
    %v1288 = vpack.c.b16 %v844, %v840
    %v1289 = vpack.c.b16 %v845, %v841
    %v1290 = vpack.c.b16 %v850, %v846
    %v1291 = vpack.c.b16 %v851, %v847
    %v1292 = vpack.c.b16 %v852, %v848
    %v1293 = vpack.c.b16 %v853, %v849
    %v1294 = vpack.c.b16 %v858, %v854
    %v1295 = vpack.c.b16 %v859, %v855
    %v1296 = vpack.c.b16 %v860, %v856
    %v1297 = vpack.c.b16 %v861, %v857
    %v1298 = vpack.c.b16 %v866, %v862
    %v1299 = vpack.c.b16 %v867, %v863
    %v1300 = vpack.c.b16 %v868, %v864
    %v1301 = vpack.c.b16 %v869, %v865
    %v1302 = vpack.c.b16 %v874, %v870
    %v1303 = vpack.c.b16 %v875, %v871
    %v1304 = vpack.c.b16 %v876, %v872
    %v1305 = vpack.c.b16 %v877, %v873
    %v1306 = vpack.c.b16 %v882, %v878
    %v1307 = vpack.c.b16 %v883, %v879
    %v1308 = vpack.c.b16 %v884, %v880
    %v1309 = vpack.c.b16 %v885, %v881
    %v1310 = vpack.c.b16 %v890, %v886
    %v1311 = vpack.c.b16 %v891, %v887
    %v1312 = vpack.c.b16 %v892, %v888
    %v1313 = vpack.c.b16 %v893, %v889
    %v1314 = vpack.c.b16 %v898, %v894
    %v1315 = vpack.c.b16 %v899, %v895
    %v1316 = vpack.c.b16 %v900, %v896
    %v1317 = vpack.c.b16 %v901, %v897
    %v1318 = vpack.c.b16 %v906, %v902
    %v1319 = vpack.c.b16 %v907, %v903
    %v1320 = vpack.c.b16 %v908, %v904
    %v1321 = vpack.c.b16 %v909, %v905
    %v1322 = vpack.c.b16 %v914, %v910
    %v1323 = vpack.c.b16 %v915, %v911
    %v1324 = vpack.c.b16 %v916, %v912
    %v1325 = vpack.c.b16 %v917, %v913
    %v1326 = vpack.c.b16 %v922, %v918
    %v1327 = vpack.c.b16 %v923, %v919
    %v1328 = vpack.c.b16 %v924, %v920
    %v1329 = vpack.c.b16 %v925, %v921
    %v1330 = vpack.c.b16 %v930, %v926
    %v1331 = vpack.c.b16 %v931, %v927
    %v1332 = vpack.c.b16 %v932, %v928
    %v1333 = vpack.c.b16 %v933, %v929
    %v1334 = vpack.c.b16 %v938, %v934
    %v1335 = vpack.c.b16 %v939, %v935
    %v1336 = vpack.c.b16 %v940, %v936
    %v1337 = vpack.c.b16 %v941, %v937
    %v1338 = vpack.c.b16 %v946, %v942
    %v1339 = vpack.c.b16 %v947, %v943
    %v1340 = vpack.c.b16 %v948, %v944
    %v1341 = vpack.c.b16 %v949, %v945
    %v1342 = vpack.c.b16 %v954, %v950
    %v1343 = vpack.c.b16 %v955, %v951
    %v1344 = vpack.c.b16 %v956, %v952
    %v1345 = vpack.c.b16 %v957, %v953
    %v1346 = vpack.c.b16 %v962, %v958
    %v1347 = vpack.c.b16 %v963, %v959
    %v1348 = vpack.c.b16 %v964, %v960
    %v1349 = vpack.c.b16 %v965, %v961
    %v1350 = vpack.c.b16 %v970, %v966
    %v1351 = vpack.c.b16 %v971, %v967
    %v1352 = vpack.c.b16 %v972, %v968
    %v1353 = vpack.c.b16 %v973, %v969
    %v1354 = vpack.c.b16 %v978, %v974
    %v1355 = vpack.c.b16 %v979, %v975
    %v1356 = vpack.c.b16 %v980, %v976
    %v1357 = vpack.c.b16 %v981, %v977
    %v1358 = vpack.c.b16 %v986, %v982
    %v1359 = vpack.c.b16 %v987, %v983
    %v1360 = vpack.c.b16 %v988, %v984
    %v1361 = vpack.c.b16 %v989, %v985
    %v1362 = vpack.c.b16 %v994, %v990
    %v1363 = vpack.c.b16 %v995, %v991
    %v1364 = vpack.c.b16 %v996, %v992
    %v1365 = vpack.c.b16 %v997, %v993
    %v1366 = vpack.c.b16 %v1002, %v998
    %v1367 = vpack.c.b16 %v1003, %v999
    %v1368 = vpack.c.b16 %v1004, %v1000
    %v1369 = vpack.c.b16 %v1005, %v1001
    %v1370 = vpack.c.b16 %v1010, %v1006
    %v1371 = vpack.c.b16 %v1011, %v1007
    %v1372 = vpack.c.b16 %v1012, %v1008
    %v1373 = vpack.c.b16 %v1013, %v1009
    %v1374 = vpack.c.b16 %v1018, %v1014
    %v1375 = vpack.c.b16 %v1019, %v1015
    %v1376 = vpack.c.b16 %v1020, %v1016
    %v1377 = vpack.c.b16 %v1021, %v1017
    %v1378 = vpack.c.b16 %v1026, %v1022
    %v1379 = vpack.c.b16 %v1027, %v1023
    %v1380 = vpack.c.b16 %v1028, %v1024
    %v1381 = vpack.c.b16 %v1029, %v1025
    %v1382 = vpack.c.b16 %v1034, %v1030
    %v1383 = vpack.c.b16 %v1035, %v1031
    %v1384 = vpack.c.b16 %v1036, %v1032
    %v1385 = vpack.c.b16 %v1037, %v1033
    %v1386 = vpack.c.b16 %v1042, %v1038
    %v1387 = vpack.c.b16 %v1043, %v1039
    %v1388 = vpack.c.b16 %v1044, %v1040
    %v1389 = vpack.c.b16 %v1045, %v1041
    %v1390 = vpack.c.b16 %v1050, %v1046
    %v1391 = vpack.c.b16 %v1051, %v1047
    %v1392 = vpack.c.b16 %v1052, %v1048
    %v1393 = vpack.c.b16 %v1053, %v1049
    %v1394 = vpack.c.b16 %v1058, %v1054
    %v1395 = vpack.c.b16 %v1059, %v1055
    %v1396 = vpack.c.b16 %v1060, %v1056
    %v1397 = vpack.c.b16 %v1061, %v1057
    %v1398 = vpack.c.b16 %v1066, %v1062
    %v1399 = vpack.c.b16 %v1067, %v1063
    %v1400 = vpack.c.b16 %v1068, %v1064
    %v1401 = vpack.c.b16 %v1069, %v1065
    %v1402 = vpack.c.b16 %v1074, %v1070
    %v1403 = vpack.c.b16 %v1075, %v1071
    %v1404 = vpack.c.b16 %v1076, %v1072
    %v1405 = vpack.c.b16 %v1077, %v1073
    %v1406 = vpack.c.b16 %v1082, %v1078
    %v1407 = vpack.c.b16 %v1083, %v1079
    %v1408 = vpack.c.b16 %v1084, %v1080
    %v1409 = vpack.c.b16 %v1085, %v1081
    %v1410 = vpack.c.b16 %v1090, %v1086
    %v1411 = vpack.c.b16 %v1091, %v1087
    %v1412 = vpack.c.b16 %v1092, %v1088
    %v1413 = vpack.c.b16 %v1093, %v1089
    %v1414 = vpack.c.b16 %v1098, %v1094
    %v1415 = vpack.c.b16 %v1099, %v1095
    %v1416 = vpack.c.b16 %v1100, %v1096
    %v1417 = vpack.c.b16 %v1101, %v1097
    %v1418 = vpack.c.b16 %v1106, %v1102
    %v1419 = vpack.c.b16 %v1107, %v1103
    %v1420 = vpack.c.b16 %v1108, %v1104
    %v1421 = vpack.c.b16 %v1109, %v1105
    %v1422 = vpack.c.b16 %v1114, %v1110
    %v1423 = vpack.c.b16 %v1115, %v1111
    %v1424 = vpack.c.b16 %v1116, %v1112
    %v1425 = vpack.c.b16 %v1117, %v1113
    %v1426 = vpack.c.b16 %v1122, %v1118
    %v1427 = vpack.c.b16 %v1123, %v1119
    %v1428 = vpack.c.b16 %v1124, %v1120
    %v1429 = vpack.c.b16 %v1125, %v1121
    %v1430 = vpack.c.b16 %v1130, %v1126
    %v1431 = vpack.c.b16 %v1131, %v1127
    %v1432 = vpack.c.b16 %v1132, %v1128
    %v1433 = vpack.c.b16 %v1133, %v1129
    %v1434 = vpack.c.b16 %v1138, %v1134
    %v1435 = vpack.c.b16 %v1139, %v1135
    %v1436 = vpack.c.b16 %v1140, %v1136
    %v1437 = vpack.c.b16 %v1141, %v1137
    %v1438 = vpack.c.b16 %v1146, %v1142
    %v1439 = vpack.c.b16 %v1147, %v1143
    %v1440 = vpack.c.b16 %v1148, %v1144
    %v1441 = vpack.c.b16 %v1149, %v1145
    %v1442 = vpack.c.b16 %v1154, %v1150
    %v1443 = vpack.c.b16 %v1155, %v1151
    %v1444 = vpack.c.b16 %v1156, %v1152
    %v1445 = vpack.c.b16 %v1157, %v1153
    %v1446 = vpack.c.b16 %v1162, %v1158
    %v1447 = vpack.c.b16 %v1163, %v1159
    %v1448 = vpack.c.b16 %v1164, %v1160
    %v1449 = vpack.c.b16 %v1165, %v1161
    %v1450 = vpack.c.b16 %v1170, %v1166
    %v1451 = vpack.c.b16 %v1171, %v1167
    %v1452 = vpack.c.b16 %v1172, %v1168
    %v1453 = vpack.c.b16 %v1173, %v1169
    %v1454 = vpack.c.b16 %v1178, %v1174
    %v1455 = vpack.c.b16 %v1179, %v1175
    %v1456 = vpack.c.b16 %v1180, %v1176
    %v1457 = vpack.c.b16 %v1181, %v1177
    %v1458 = vpack.c.b16 %v1186, %v1182
    %v1459 = vpack.c.b16 %v1187, %v1183
    %v1460 = vpack.c.b16 %v1188, %v1184
    %v1461 = vpack.c.b16 %v1189, %v1185
    %v1462 = vpack.c.b16 %v1194, %v1190
    %v1463 = vpack.c.b16 %v1195, %v1191
    %v1464 = vpack.c.b16 %v1196, %v1192
    %v1465 = vpack.c.b16 %v1197, %v1193
    %v1466 = vpack.c.b16 %v1202, %v1198
    %v1467 = vpack.c.b16 %v1203, %v1199
    %v1468 = vpack.c.b16 %v1204, %v1200
    %v1469 = vpack.c.b16 %v1205, %v1201
    %v1470 = vpack.c.b16 %v1210, %v1206
    %v1471 = vpack.c.b16 %v1211, %v1207
    %v1472 = vpack.c.b16 %v1212, %v1208
    %v1473 = vpack.c.b16 %v1213, %v1209
    %v1474 = vpack.c.b16 %v1218, %v1214
    %v1475 = vpack.c.b16 %v1219, %v1215
    %v1476 = vpack.c.b16 %v1220, %v1216
    %v1477 = vpack.c.b16 %v1221, %v1217
    %1734 = vmatprep.subr.bf16.mxu0 %v1223
    %1735 = vmatpush1.bf16.msra.mxu0 %v1222
    %1736 = vmatprep.subr.bf16.mxu0 %v1227
    %1737 = vmatpush1.bf16.msra.mxu0 %v1226
    %1738 = vmatprep.subr.bf16.mxu0 %v1231
    %1739 = vmatpush1.bf16.msra.mxu0 %v1230
    %1740 = vmatprep.subr.bf16.mxu0 %v1235
    %1741 = vmatpush1.bf16.msra.mxu0 %v1234
    %1742 = vmatprep.subr.bf16.mxu0 %v1239
    %1743 = vmatpush1.bf16.msra.mxu0 %v1238
    %1744 = vmatprep.subr.bf16.mxu0 %v1243
    %1745 = vmatpush1.bf16.msra.mxu0 %v1242
    %1746 = vmatprep.subr.bf16.mxu0 %v1247
    %1747 = vmatpush1.bf16.msra.mxu0 %v1246
    %1748 = vmatprep.subr.bf16.mxu0 %v1251
    %1749 = vmatpush1.bf16.msra.mxu0 %v1250
    %1750 = vmatprep.subr.bf16.mxu0 %v1255
    %1751 = vmatpush1.bf16.msra.mxu0 %v1254
    %1752 = vmatprep.subr.bf16.mxu0 %v1259
    %1753 = vmatpush1.bf16.msra.mxu0 %v1258
    %1754 = vmatprep.subr.bf16.mxu0 %v1263
    %1755 = vmatpush1.bf16.msra.mxu0 %v1262
    %1756 = vmatprep.subr.bf16.mxu0 %v1267
    %1757 = vmatpush1.bf16.msra.mxu0 %v1266
    %1758 = vmatprep.subr.bf16.mxu0 %v1271
    %1759 = vmatpush1.bf16.msra.mxu0 %v1270
    %1760 = vmatprep.subr.bf16.mxu0 %v1275
    %1761 = vmatpush1.bf16.msra.mxu0 %v1274
    %1762 = vmatprep.subr.bf16.mxu0 %v1279
    %1763 = vmatpush1.bf16.msra.mxu0 %v1278
    %1764 = vmatprep.subr.bf16.mxu0 %v1283
    %1765 = vmatpush1.bf16.msra.mxu0 %v1282
    %1766 = vmatprep.mubr.bf16.mxu0 %v434
    %1767 = vmatmul.mubr.bf16.gmra.mrb[0].mxu0 %v420
    %v1768 = vpop.f32.mrb[0].mxu0
    %v1769 = vadd.f32 %v379, %v1768
    %v1770 = vpop.f32.mrb[0].mxu0
    %v1771 = vadd.f32 %v383, %v1770
    %v1772 = vpop.f32.mrb[0].mxu0
    %v1773 = vpop.f32.mrb[0].mxu0
    %1774 = vdwg.mxu0
    %1775 = vmatprep.subr.bf16.mxu0 %v1287
    %1776 = vmatpush1.bf16.msra.mxu0 %v1286
    %1777 = vmatprep.subr.bf16.mxu0 %v1291
    %1778 = vmatpush1.bf16.msra.mxu0 %v1290
    %1779 = vmatprep.subr.bf16.mxu0 %v1295
    %1780 = vmatpush1.bf16.msra.mxu0 %v1294
    %1781 = vmatprep.subr.bf16.mxu0 %v1299
    %1782 = vmatpush1.bf16.msra.mxu0 %v1298
    %1783 = vmatprep.subr.bf16.mxu0 %v1303
    %1784 = vmatpush1.bf16.msra.mxu0 %v1302
    %1785 = vmatprep.subr.bf16.mxu0 %v1307
    %1786 = vmatpush1.bf16.msra.mxu0 %v1306
    %1787 = vmatprep.subr.bf16.mxu0 %v1311
    %1788 = vmatpush1.bf16.msra.mxu0 %v1310
    %1789 = vmatprep.subr.bf16.mxu0 %v1315
    %1790 = vmatpush1.bf16.msra.mxu0 %v1314
    %1791 = vmatprep.subr.bf16.mxu0 %v1319
    %1792 = vmatpush1.bf16.msra.mxu0 %v1318
    %1793 = vmatprep.subr.bf16.mxu0 %v1323
    %1794 = vmatpush1.bf16.msra.mxu0 %v1322
    %1795 = vmatprep.subr.bf16.mxu0 %v1327
    %1796 = vmatpush1.bf16.msra.mxu0 %v1326
    %1797 = vmatprep.subr.bf16.mxu0 %v1331
    %1798 = vmatpush1.bf16.msra.mxu0 %v1330
    %1799 = vmatprep.subr.bf16.mxu0 %v1335
    %1800 = vmatpush1.bf16.msra.mxu0 %v1334
    %1801 = vmatprep.subr.bf16.mxu0 %v1339
    %1802 = vmatpush1.bf16.msra.mxu0 %v1338
    %1803 = vmatprep.subr.bf16.mxu0 %v1343
    %1804 = vmatpush1.bf16.msra.mxu0 %v1342
    %1805 = vmatprep.subr.bf16.mxu0 %v1347
    %1806 = vmatpush1.bf16.msra.mxu0 %v1346
    %1807 = vmatprep.mubr.bf16.mxu0 %v444
    %1808 = vmatmul.mubr.bf16.gmra.mrb[0].mxu0 %v442
    %v1809 = vpop.f32.mrb[0].mxu0
    %v1810 = vadd.f32 %v1769, %v1809
    %v1811 = vpop.f32.mrb[0].mxu0
    %v1812 = vadd.f32 %v1771, %v1811
    %v1813 = vpop.f32.mrb[0].mxu0
    %v1814 = vpop.f32.mrb[0].mxu0
    %1815 = vdwg.mxu0
    %1816 = vmatprep.subr.bf16.mxu0 %v1351
    %1817 = vmatpush1.bf16.msra.mxu0 %v1350
    %1818 = vmatprep.subr.bf16.mxu0 %v1355
    %1819 = vmatpush1.bf16.msra.mxu0 %v1354
    %1820 = vmatprep.subr.bf16.mxu0 %v1359
    %1821 = vmatpush1.bf16.msra.mxu0 %v1358
    %1822 = vmatprep.subr.bf16.mxu0 %v1363
    %1823 = vmatpush1.bf16.msra.mxu0 %v1362
    %1824 = vmatprep.subr.bf16.mxu0 %v1367
    %1825 = vmatpush1.bf16.msra.mxu0 %v1366
    %1826 = vmatprep.subr.bf16.mxu0 %v1371
    %1827 = vmatpush1.bf16.msra.mxu0 %v1370
    %1828 = vmatprep.subr.bf16.mxu0 %v1375
    %1829 = vmatpush1.bf16.msra.mxu0 %v1374
    %1830 = vmatprep.subr.bf16.mxu0 %v1379
    %1831 = vmatpush1.bf16.msra.mxu0 %v1378
    %1832 = vmatprep.subr.bf16.mxu0 %v1383
    %1833 = vmatpush1.bf16.msra.mxu0 %v1382
    %1834 = vmatprep.subr.bf16.mxu0 %v1387
    %1835 = vmatpush1.bf16.msra.mxu0 %v1386
    %1836 = vmatprep.subr.bf16.mxu0 %v1391
    %1837 = vmatpush1.bf16.msra.mxu0 %v1390
    %1838 = vmatprep.subr.bf16.mxu0 %v1395
    %1839 = vmatpush1.bf16.msra.mxu0 %v1394
    %1840 = vmatprep.subr.bf16.mxu0 %v1399
    %1841 = vmatpush1.bf16.msra.mxu0 %v1398
    %1842 = vmatprep.subr.bf16.mxu0 %v1403
    %1843 = vmatpush1.bf16.msra.mxu0 %v1402
    %1844 = vmatprep.subr.bf16.mxu0 %v1407
    %1845 = vmatpush1.bf16.msra.mxu0 %v1406
    %1846 = vmatprep.subr.bf16.mxu0 %v1411
    %1847 = vmatpush1.bf16.msra.mxu0 %v1410
    %1848 = vmatprep.mubr.bf16.mxu0 %v441
    %1849 = vmatmul.mubr.bf16.gmra.mrb[0].mxu0 %v427
    %v1850 = vpop.f32.mrb[0].mxu0
    %v1851 = vadd.f32 %v1810, %v1850
    %v1852 = vpop.f32.mrb[0].mxu0
    %v1853 = vadd.f32 %v1812, %v1852
    %v1854 = vpop.f32.mrb[0].mxu0
    %v1855 = vpop.f32.mrb[0].mxu0
    %1856 = vdwg.mxu0
    %1857 = vmatprep.subr.bf16.mxu0 %v1415
    %1858 = vmatpush1.bf16.msra.mxu0 %v1414
    %1859 = vmatprep.subr.bf16.mxu0 %v1419
    %1860 = vmatpush1.bf16.msra.mxu0 %v1418
    %1861 = vmatprep.subr.bf16.mxu0 %v1423
    %1862 = vmatpush1.bf16.msra.mxu0 %v1422
    %1863 = vmatprep.subr.bf16.mxu0 %v1427
    %1864 = vmatpush1.bf16.msra.mxu0 %v1426
    %1865 = vmatprep.subr.bf16.mxu0 %v1431
    %1866 = vmatpush1.bf16.msra.mxu0 %v1430
    %1867 = vmatprep.subr.bf16.mxu0 %v1435
    %1868 = vmatpush1.bf16.msra.mxu0 %v1434
    %1869 = vmatprep.subr.bf16.mxu0 %v1439
    %1870 = vmatpush1.bf16.msra.mxu0 %v1438
    %1871 = vmatprep.subr.bf16.mxu0 %v1443
    %1872 = vmatpush1.bf16.msra.mxu0 %v1442
    %1873 = vmatprep.subr.bf16.mxu0 %v1447
    %1874 = vmatpush1.bf16.msra.mxu0 %v1446
    %1875 = vmatprep.subr.bf16.mxu0 %v1451
    %1876 = vmatpush1.bf16.msra.mxu0 %v1450
    %1877 = vmatprep.subr.bf16.mxu0 %v1455
    %1878 = vmatpush1.bf16.msra.mxu0 %v1454
    %1879 = vmatprep.subr.bf16.mxu0 %v1459
    %1880 = vmatpush1.bf16.msra.mxu0 %v1458
    %1881 = vmatprep.subr.bf16.mxu0 %v1463
    %1882 = vmatpush1.bf16.msra.mxu0 %v1462
    %1883 = vmatprep.subr.bf16.mxu0 %v1467
    %1884 = vmatpush1.bf16.msra.mxu0 %v1466
    %1885 = vmatprep.subr.bf16.mxu0 %v1471
    %1886 = vmatpush1.bf16.msra.mxu0 %v1470
    %1887 = vmatprep.subr.bf16.mxu0 %v1475
    %1888 = vmatpush1.bf16.msra.mxu0 %v1474
    %1889 = vmatprep.mubr.bf16.mxu0 %v445
    %1890 = vmatmul.mubr.bf16.gmra.mrb[0].mxu0 %v443
    %v1891 = vpop.f32.mrb[0].mxu0
    %v1892 = vadd.f32 %v1851, %v1891
    %v1893 = vpop.f32.mrb[0].mxu0
    %v1894 = vadd.f32 %v1853, %v1893
    %v1895 = vpop.f32.mrb[0].mxu0
    %v1896 = vpop.f32.mrb[0].mxu0
    %1897 = vdwg.mxu0
    %1898 = vmatprep.subr.bf16.mxu0 %v1225
    %1899 = vmatpush1.bf16.msra.mxu0 %v1224
    %1900 = vmatprep.subr.bf16.mxu0 %v1229
    %1901 = vmatpush1.bf16.msra.mxu0 %v1228
    %1902 = vmatprep.subr.bf16.mxu0 %v1233
    %1903 = vmatpush1.bf16.msra.mxu0 %v1232
    %1904 = vmatprep.subr.bf16.mxu0 %v1237
    %1905 = vmatpush1.bf16.msra.mxu0 %v1236
    %1906 = vmatprep.subr.bf16.mxu0 %v1241
    %1907 = vmatpush1.bf16.msra.mxu0 %v1240
    %1908 = vmatprep.subr.bf16.mxu0 %v1245
    %1909 = vmatpush1.bf16.msra.mxu0 %v1244
    %1910 = vmatprep.subr.bf16.mxu0 %v1249
    %1911 = vmatpush1.bf16.msra.mxu0 %v1248
    %1912 = vmatprep.subr.bf16.mxu0 %v1253
    %1913 = vmatpush1.bf16.msra.mxu0 %v1252
    %1914 = vmatprep.subr.bf16.mxu0 %v1257
    %1915 = vmatpush1.bf16.msra.mxu0 %v1256
    %1916 = vmatprep.subr.bf16.mxu0 %v1261
    %1917 = vmatpush1.bf16.msra.mxu0 %v1260
    %1918 = vmatprep.subr.bf16.mxu0 %v1265
    %1919 = vmatpush1.bf16.msra.mxu0 %v1264
    %1920 = vmatprep.subr.bf16.mxu0 %v1269
    %1921 = vmatpush1.bf16.msra.mxu0 %v1268
    %1922 = vmatprep.subr.bf16.mxu0 %v1273
    %1923 = vmatpush1.bf16.msra.mxu0 %v1272
    %1924 = vmatprep.subr.bf16.mxu0 %v1277
    %1925 = vmatpush1.bf16.msra.mxu0 %v1276
    %1926 = vmatprep.subr.bf16.mxu0 %v1281
    %1927 = vmatpush1.bf16.msra.mxu0 %v1280
    %1928 = vmatprep.subr.bf16.mxu0 %v1285
    %1929 = vmatpush1.bf16.msra.mxu0 %v1284
    %1930 = vmatprep.mubr.bf16.mxu0 %v434
    %1931 = vmatmul.mubr.bf16.gmra.mrb[0].mxu0 %v420
    %v1932 = vpop.f32.mrb[0].mxu0
    %v1933 = vadd.f32 %v387, %v1932
    %v1934 = vpop.f32.mrb[0].mxu0
    %v1935 = vadd.f32 %v391, %v1934
    %v1936 = vpop.f32.mrb[0].mxu0
    %v1937 = vpop.f32.mrb[0].mxu0
    %1938 = vdwg.mxu0
    %1939 = vmatprep.subr.bf16.mxu0 %v1289
    %1940 = vmatpush1.bf16.msra.mxu0 %v1288
    %1941 = vmatprep.subr.bf16.mxu0 %v1293
    %1942 = vmatpush1.bf16.msra.mxu0 %v1292
    %1943 = vmatprep.subr.bf16.mxu0 %v1297
    %1944 = vmatpush1.bf16.msra.mxu0 %v1296
    %1945 = vmatprep.subr.bf16.mxu0 %v1301
    %1946 = vmatpush1.bf16.msra.mxu0 %v1300
    %1947 = vmatprep.subr.bf16.mxu0 %v1305
    %1948 = vmatpush1.bf16.msra.mxu0 %v1304
    %1949 = vmatprep.subr.bf16.mxu0 %v1309
    %1950 = vmatpush1.bf16.msra.mxu0 %v1308
    %1951 = vmatprep.subr.bf16.mxu0 %v1313
    %1952 = vmatpush1.bf16.msra.mxu0 %v1312
    %1953 = vmatprep.subr.bf16.mxu0 %v1317
    %1954 = vmatpush1.bf16.msra.mxu0 %v1316
    %1955 = vmatprep.subr.bf16.mxu0 %v1321
    %1956 = vmatpush1.bf16.msra.mxu0 %v1320
    %1957 = vmatprep.subr.bf16.mxu0 %v1325
    %1958 = vmatpush1.bf16.msra.mxu0 %v1324
    %1959 = vmatprep.subr.bf16.mxu0 %v1329
    %1960 = vmatpush1.bf16.msra.mxu0 %v1328
    %1961 = vmatprep.subr.bf16.mxu0 %v1333
    %1962 = vmatpush1.bf16.msra.mxu0 %v1332
    %1963 = vmatprep.subr.bf16.mxu0 %v1337
    %1964 = vmatpush1.bf16.msra.mxu0 %v1336
    %1965 = vmatprep.subr.bf16.mxu0 %v1341
    %1966 = vmatpush1.bf16.msra.mxu0 %v1340
    %1967 = vmatprep.subr.bf16.mxu0 %v1345
    %1968 = vmatpush1.bf16.msra.mxu0 %v1344
    %1969 = vmatprep.subr.bf16.mxu0 %v1349
    %1970 = vmatpush1.bf16.msra.mxu0 %v1348
    %1971 = vmatprep.mubr.bf16.mxu0 %v444
    %1972 = vmatmul.mubr.bf16.gmra.mrb[0].mxu0 %v442
    %v1973 = vpop.f32.mrb[0].mxu0
    %v1974 = vadd.f32 %v1933, %v1973
    %v1975 = vpop.f32.mrb[0].mxu0
    %v1976 = vadd.f32 %v1935, %v1975
    %v1977 = vpop.f32.mrb[0].mxu0
    %v1978 = vpop.f32.mrb[0].mxu0
    %1979 = vdwg.mxu0
    %1980 = vmatprep.subr.bf16.mxu0 %v1353
    %1981 = vmatpush1.bf16.msra.mxu0 %v1352
    %1982 = vmatprep.subr.bf16.mxu0 %v1357
    %1983 = vmatpush1.bf16.msra.mxu0 %v1356
    %1984 = vmatprep.subr.bf16.mxu0 %v1361
    %1985 = vmatpush1.bf16.msra.mxu0 %v1360
    %1986 = vmatprep.subr.bf16.mxu0 %v1365
    %1987 = vmatpush1.bf16.msra.mxu0 %v1364
    %1988 = vmatprep.subr.bf16.mxu0 %v1369
    %1989 = vmatpush1.bf16.msra.mxu0 %v1368
    %1990 = vmatprep.subr.bf16.mxu0 %v1373
    %1991 = vmatpush1.bf16.msra.mxu0 %v1372
    %1992 = vmatprep.subr.bf16.mxu0 %v1377
    %1993 = vmatpush1.bf16.msra.mxu0 %v1376
    %1994 = vmatprep.subr.bf16.mxu0 %v1381
    %1995 = vmatpush1.bf16.msra.mxu0 %v1380
    %1996 = vmatprep.subr.bf16.mxu0 %v1385
    %1997 = vmatpush1.bf16.msra.mxu0 %v1384
    %1998 = vmatprep.subr.bf16.mxu0 %v1389
    %1999 = vmatpush1.bf16.msra.mxu0 %v1388
    %2000 = vmatprep.subr.bf16.mxu0 %v1393
    %2001 = vmatpush1.bf16.msra.mxu0 %v1392
    %2002 = vmatprep.subr.bf16.mxu0 %v1397
    %2003 = vmatpush1.bf16.msra.mxu0 %v1396
    %2004 = vmatprep.subr.bf16.mxu0 %v1401
    %2005 = vmatpush1.bf16.msra.mxu0 %v1400
    %2006 = vmatprep.subr.bf16.mxu0 %v1405
    %2007 = vmatpush1.bf16.msra.mxu0 %v1404
    %2008 = vmatprep.subr.bf16.mxu0 %v1409
    %2009 = vmatpush1.bf16.msra.mxu0 %v1408
    %2010 = vmatprep.subr.bf16.mxu0 %v1413
    %2011 = vmatpush1.bf16.msra.mxu0 %v1412
    %2012 = vmatprep.mubr.bf16.mxu0 %v441
    %2013 = vmatmul.mubr.bf16.gmra.mrb[0].mxu0 %v427
    %v2014 = vpop.f32.mrb[0].mxu0
    %v2015 = vadd.f32 %v1974, %v2014
    %v2016 = vpop.f32.mrb[0].mxu0
    %v2017 = vadd.f32 %v1976, %v2016
    %v2018 = vpop.f32.mrb[0].mxu0
    %v2019 = vpop.f32.mrb[0].mxu0
    %2020 = vdwg.mxu0
    %2021 = vmatprep.subr.bf16.mxu0 %v1417
    %2022 = vmatpush1.bf16.msra.mxu0 %v1416
    %2023 = vmatprep.subr.bf16.mxu0 %v1421
    %2024 = vmatpush1.bf16.msra.mxu0 %v1420
    %2025 = vmatprep.subr.bf16.mxu0 %v1425
    %2026 = vmatpush1.bf16.msra.mxu0 %v1424
    %2027 = vmatprep.subr.bf16.mxu0 %v1429
    %2028 = vmatpush1.bf16.msra.mxu0 %v1428
    %2029 = vmatprep.subr.bf16.mxu0 %v1433
    %2030 = vmatpush1.bf16.msra.mxu0 %v1432
    %2031 = vmatprep.subr.bf16.mxu0 %v1437
    %2032 = vmatpush1.bf16.msra.mxu0 %v1436
    %2033 = vmatprep.subr.bf16.mxu0 %v1441
    %2034 = vmatpush1.bf16.msra.mxu0 %v1440
    %2035 = vmatprep.subr.bf16.mxu0 %v1445
    %2036 = vmatpush1.bf16.msra.mxu0 %v1444
    %2037 = vmatprep.subr.bf16.mxu0 %v1449
    %2038 = vmatpush1.bf16.msra.mxu0 %v1448
    %2039 = vmatprep.subr.bf16.mxu0 %v1453
    %2040 = vmatpush1.bf16.msra.mxu0 %v1452
    %2041 = vmatprep.subr.bf16.mxu0 %v1457
    %2042 = vmatpush1.bf16.msra.mxu0 %v1456
    %2043 = vmatprep.subr.bf16.mxu0 %v1461
    %2044 = vmatpush1.bf16.msra.mxu0 %v1460
    %2045 = vmatprep.subr.bf16.mxu0 %v1465
    %2046 = vmatpush1.bf16.msra.mxu0 %v1464
    %2047 = vmatprep.subr.bf16.mxu0 %v1469
    %2048 = vmatpush1.bf16.msra.mxu0 %v1468
    %2049 = vmatprep.subr.bf16.mxu0 %v1473
    %2050 = vmatpush1.bf16.msra.mxu0 %v1472
    %2051 = vmatprep.subr.bf16.mxu0 %v1477
    %2052 = vmatpush1.bf16.msra.mxu0 %v1476
    %2053 = vmatprep.mubr.bf16.mxu0 %v445
    %2054 = vmatmul.mubr.bf16.gmra.mrb[0].mxu0 %v443
    %v2055 = vpop.f32.mrb[0].mxu0
    %v2056 = vadd.f32 %v2015, %v2055
    %v2057 = vpop.f32.mrb[0].mxu0
    %v2058 = vadd.f32 %v2017, %v2057
    %v2059 = vpop.f32.mrb[0].mxu0
    %v2060 = vpop.f32.mrb[0].mxu0
    %2061 = vdwg.mxu0
    %v2062 = vmax.f32 %v1892, 0.0
    %v2063 = vmax.f32 %v1894, 0.0
    %v2064 = vmax.f32 %v2056, 0.0
    %v2065 = vmax.f32 %v2058, 0.0
    %v2066 = vpack.c.bf16 %v2062, %v2062
    %v2067 = vpack.c.bf16 %v2063, %v2063
    %v2068 = vpack.c.bf16 %v2064, %v2064
    %v2069 = vpack.c.bf16 %v2065, %v2065
    %v2070 = vld [vmem:[#allocation4] sm:$0xff]
    %v2071 = vld [vmem:[#allocation4 + $0x8] sm:$0xff]
    %v2072 = vld [vmem:[#allocation4 + $0x10] sm:$0xff]
    %v2073 = vld [vmem:[#allocation4 + $0x18] sm:$0xff]
    %v2074 = vld [vmem:[#allocation4 + $0x20] sm:$0xff]
    %v2075 = vld [vmem:[#allocation4 + $0x28] sm:$0xff]
    %v2076 = vld [vmem:[#allocation4 + $0x30] sm:$0xff]
    %v2077 = vld [vmem:[#allocation4 + $0x38] sm:$0xff]
    %v2078 = vld [vmem:[#allocation4 + $0x40] sm:$0xff]
    %v2079 = vld [vmem:[#allocation4 + $0x48] sm:$0xff]
    %v2080 = vld [vmem:[#allocation4 + $0x50] sm:$0xff]
    %v2081 = vld [vmem:[#allocation4 + $0x58] sm:$0xff]
    %v2082 = vld [vmem:[#allocation4 + $0x60] sm:$0xff]
    %v2083 = vld [vmem:[#allocation4 + $0x68] sm:$0xff]
    %v2084 = vld [vmem:[#allocation4 + $0x70] sm:$0xff]
    %v2085 = vld [vmem:[#allocation4 + $0x78] sm:$0xff]
    %v2086 = vld [vmem:[#allocation4 + $0x80] sm:$0xff]
    %v2087 = vld [vmem:[#allocation4 + $0x88] sm:$0xff]
    %v2088 = vld [vmem:[#allocation4 + $0x90] sm:$0xff]
    %v2089 = vld [vmem:[#allocation4 + $0x98] sm:$0xff]
    %v2090 = vld [vmem:[#allocation4 + $0xa0] sm:$0xff]
    %v2091 = vld [vmem:[#allocation4 + $0xa8] sm:$0xff]
    %v2092 = vld [vmem:[#allocation4 + $0xb0] sm:$0xff]
    %v2093 = vld [vmem:[#allocation4 + $0xb8] sm:$0xff]
    %v2094 = vld [vmem:[#allocation4 + $0xc0] sm:$0xff]
    %v2095 = vld [vmem:[#allocation4 + $0xc8] sm:$0xff]
    %v2096 = vld [vmem:[#allocation4 + $0xd0] sm:$0xff]
    %v2097 = vld [vmem:[#allocation4 + $0xd8] sm:$0xff]
    %v2098 = vld [vmem:[#allocation4 + $0xe0] sm:$0xff]
    %v2099 = vld [vmem:[#allocation4 + $0xe8] sm:$0xff]
    %v2100 = vld [vmem:[#allocation4 + $0xf0] sm:$0xff]
    %v2101 = vld [vmem:[#allocation4 + $0xf8] sm:$0xff]
    %v2102 = vld [vmem:[#allocation4 + $0x100] sm:$0xff]
    %v2103 = vld [vmem:[#allocation4 + $0x108] sm:$0xff]
    %v2104 = vld [vmem:[#allocation4 + $0x110] sm:$0xff]
    %v2105 = vld [vmem:[#allocation4 + $0x118] sm:$0xff]
    %v2106 = vld [vmem:[#allocation4 + $0x120] sm:$0xff]
    %v2107 = vld [vmem:[#allocation4 + $0x128] sm:$0xff]
    %v2108 = vld [vmem:[#allocation4 + $0x130] sm:$0xff]
    %v2109 = vld [vmem:[#allocation4 + $0x138] sm:$0xff]
    %v2110 = vld [vmem:[#allocation4 + $0x140] sm:$0xff]
    %v2111 = vld [vmem:[#allocation4 + $0x148] sm:$0xff]
    %v2112 = vld [vmem:[#allocation4 + $0x150] sm:$0xff]
    %v2113 = vld [vmem:[#allocation4 + $0x158] sm:$0xff]
    %v2114 = vld [vmem:[#allocation4 + $0x160] sm:$0xff]
    %v2115 = vld [vmem:[#allocation4 + $0x168] sm:$0xff]
    %v2116 = vld [vmem:[#allocation4 + $0x170] sm:$0xff]
    %v2117 = vld [vmem:[#allocation4 + $0x178] sm:$0xff]
    %v2118 = vld [vmem:[#allocation4 + $0x180] sm:$0xff]
    %v2119 = vld [vmem:[#allocation4 + $0x188] sm:$0xff]
    %v2120 = vld [vmem:[#allocation4 + $0x190] sm:$0xff]
    %v2121 = vld [vmem:[#allocation4 + $0x198] sm:$0xff]
    %v2122 = vld [vmem:[#allocation4 + $0x1a0] sm:$0xff]
    %v2123 = vld [vmem:[#allocation4 + $0x1a8] sm:$0xff]
    %v2124 = vld [vmem:[#allocation4 + $0x1b0] sm:$0xff]
    %v2125 = vld [vmem:[#allocation4 + $0x1b8] sm:$0xff]
    %v2126 = vld [vmem:[#allocation4 + $0x1c0] sm:$0xff]
    %v2127 = vld [vmem:[#allocation4 + $0x1c8] sm:$0xff]
    %v2128 = vld [vmem:[#allocation4 + $0x1d0] sm:$0xff]
    %v2129 = vld [vmem:[#allocation4 + $0x1d8] sm:$0xff]
    %v2130 = vld [vmem:[#allocation4 + $0x1e0] sm:$0xff]
    %v2131 = vld [vmem:[#allocation4 + $0x1e8] sm:$0xff]
    %v2132 = vld [vmem:[#allocation4 + $0x1f0] sm:$0xff]
    %v2133 = vld [vmem:[#allocation4 + $0x1f8] sm:$0xff]
    %v2134 = vld [vmem:[%s5] sm:$0x3]
    %v2136 = vlaneseq
    %v2137 = vshrl.u32 %v2136, 7
    %v2138 = vsub.s32 0, %v2137
    %v2139 = vrot.slane %v2134, %v2138
    %v2140 = vlaneseq
    %v2141 = vshrl.u32 %v2140, 7
    %v2142 = vsub.s32 1, %v2141
    %v2143 = vrot.slane %v2134, %v2142
    %v2210 = vunpack.c.l.b16 %v2070
    %v2211 = vunpack.c.h.b16 %v2070
    %v2212 = vunpack.c.l.b16 %v2071
    %v2213 = vunpack.c.h.b16 %v2071
    %v2214 = vunpack.c.l.b16 %v2072
    %v2215 = vunpack.c.h.b16 %v2072
    %v2216 = vunpack.c.l.b16 %v2073
    %v2217 = vunpack.c.h.b16 %v2073
    %v2218 = vunpack.c.l.b16 %v2074
    %v2219 = vunpack.c.h.b16 %v2074
    %v2220 = vunpack.c.l.b16 %v2075
    %v2221 = vunpack.c.h.b16 %v2075
    %v2222 = vunpack.c.l.b16 %v2076
    %v2223 = vunpack.c.h.b16 %v2076
    %v2224 = vunpack.c.l.b16 %v2077
    %v2225 = vunpack.c.h.b16 %v2077
    %v2226 = vunpack.c.l.b16 %v2078
    %v2227 = vunpack.c.h.b16 %v2078
    %v2228 = vunpack.c.l.b16 %v2079
    %v2229 = vunpack.c.h.b16 %v2079
    %v2230 = vunpack.c.l.b16 %v2080
    %v2231 = vunpack.c.h.b16 %v2080
    %v2232 = vunpack.c.l.b16 %v2081
    %v2233 = vunpack.c.h.b16 %v2081
    %v2234 = vunpack.c.l.b16 %v2082
    %v2235 = vunpack.c.h.b16 %v2082
    %v2236 = vunpack.c.l.b16 %v2083
    %v2237 = vunpack.c.h.b16 %v2083
    %v2238 = vunpack.c.l.b16 %v2084
    %v2239 = vunpack.c.h.b16 %v2084
    %v2240 = vunpack.c.l.b16 %v2085
    %v2241 = vunpack.c.h.b16 %v2085
    %v2242 = vunpack.c.l.b16 %v2086
    %v2243 = vunpack.c.h.b16 %v2086
    %v2244 = vunpack.c.l.b16 %v2087
    %v2245 = vunpack.c.h.b16 %v2087
    %v2246 = vunpack.c.l.b16 %v2088
    %v2247 = vunpack.c.h.b16 %v2088
    %v2248 = vunpack.c.l.b16 %v2089
    %v2249 = vunpack.c.h.b16 %v2089
    %v2250 = vunpack.c.l.b16 %v2090
    %v2251 = vunpack.c.h.b16 %v2090
    %v2252 = vunpack.c.l.b16 %v2091
    %v2253 = vunpack.c.h.b16 %v2091
    %v2254 = vunpack.c.l.b16 %v2092
    %v2255 = vunpack.c.h.b16 %v2092
    %v2256 = vunpack.c.l.b16 %v2093
    %v2257 = vunpack.c.h.b16 %v2093
    %v2258 = vunpack.c.l.b16 %v2094
    %v2259 = vunpack.c.h.b16 %v2094
    %v2260 = vunpack.c.l.b16 %v2095
    %v2261 = vunpack.c.h.b16 %v2095
    %v2262 = vunpack.c.l.b16 %v2096
    %v2263 = vunpack.c.h.b16 %v2096
    %v2264 = vunpack.c.l.b16 %v2097
    %v2265 = vunpack.c.h.b16 %v2097
    %v2266 = vunpack.c.l.b16 %v2098
    %v2267 = vunpack.c.h.b16 %v2098
    %v2268 = vunpack.c.l.b16 %v2099
    %v2269 = vunpack.c.h.b16 %v2099
    %v2270 = vunpack.c.l.b16 %v2100
    %v2271 = vunpack.c.h.b16 %v2100
    %v2272 = vunpack.c.l.b16 %v2101
    %v2273 = vunpack.c.h.b16 %v2101
    %v2274 = vunpack.c.l.b16 %v2102
    %v2275 = vunpack.c.h.b16 %v2102
    %v2276 = vunpack.c.l.b16 %v2103
    %v2277 = vunpack.c.h.b16 %v2103
    %v2278 = vunpack.c.l.b16 %v2104
    %v2279 = vunpack.c.h.b16 %v2104
    %v2280 = vunpack.c.l.b16 %v2105
    %v2281 = vunpack.c.h.b16 %v2105
    %v2282 = vunpack.c.l.b16 %v2106
    %v2283 = vunpack.c.h.b16 %v2106
    %v2284 = vunpack.c.l.b16 %v2107
    %v2285 = vunpack.c.h.b16 %v2107
    %v2286 = vunpack.c.l.b16 %v2108
    %v2287 = vunpack.c.h.b16 %v2108
    %v2288 = vunpack.c.l.b16 %v2109
    %v2289 = vunpack.c.h.b16 %v2109
    %v2290 = vunpack.c.l.b16 %v2110
    %v2291 = vunpack.c.h.b16 %v2110
    %v2292 = vunpack.c.l.b16 %v2111
    %v2293 = vunpack.c.h.b16 %v2111
    %v2294 = vunpack.c.l.b16 %v2112
    %v2295 = vunpack.c.h.b16 %v2112
    %v2296 = vunpack.c.l.b16 %v2113
    %v2297 = vunpack.c.h.b16 %v2113
    %v2298 = vunpack.c.l.b16 %v2114
    %v2299 = vunpack.c.h.b16 %v2114
    %v2300 = vunpack.c.l.b16 %v2115
    %v2301 = vunpack.c.h.b16 %v2115
    %v2302 = vunpack.c.l.b16 %v2116
    %v2303 = vunpack.c.h.b16 %v2116
    %v2304 = vunpack.c.l.b16 %v2117
    %v2305 = vunpack.c.h.b16 %v2117
    %v2306 = vunpack.c.l.b16 %v2118
    %v2307 = vunpack.c.h.b16 %v2118
    %v2308 = vunpack.c.l.b16 %v2119
    %v2309 = vunpack.c.h.b16 %v2119
    %v2310 = vunpack.c.l.b16 %v2120
    %v2311 = vunpack.c.h.b16 %v2120
    %v2312 = vunpack.c.l.b16 %v2121
    %v2313 = vunpack.c.h.b16 %v2121
    %v2314 = vunpack.c.l.b16 %v2122
    %v2315 = vunpack.c.h.b16 %v2122
    %v2316 = vunpack.c.l.b16 %v2123
    %v2317 = vunpack.c.h.b16 %v2123
    %v2318 = vunpack.c.l.b16 %v2124
    %v2319 = vunpack.c.h.b16 %v2124
    %v2320 = vunpack.c.l.b16 %v2125
    %v2321 = vunpack.c.h.b16 %v2125
    %v2322 = vunpack.c.l.b16 %v2126
    %v2323 = vunpack.c.h.b16 %v2126
    %v2324 = vunpack.c.l.b16 %v2127
    %v2325 = vunpack.c.h.b16 %v2127
    %v2326 = vunpack.c.l.b16 %v2128
    %v2327 = vunpack.c.h.b16 %v2128
    %v2328 = vunpack.c.l.b16 %v2129
    %v2329 = vunpack.c.h.b16 %v2129
    %v2330 = vunpack.c.l.b16 %v2130
    %v2331 = vunpack.c.h.b16 %v2130
    %v2332 = vunpack.c.l.b16 %v2131
    %v2333 = vunpack.c.h.b16 %v2131
    %v2334 = vunpack.c.l.b16 %v2132
    %v2335 = vunpack.c.h.b16 %v2132
    %v2336 = vunpack.c.l.b16 %v2133
    %v2337 = vunpack.c.h.b16 %v2133
    %v2338 = vpack.c.b16 %v2212, %v2210
    %v2339 = vpack.c.b16 %v2213, %v2211
    %v2340 = vpack.c.b16 %v2216, %v2214
    %v2341 = vpack.c.b16 %v2217, %v2215
    %v2342 = vpack.c.b16 %v2220, %v2218
    %v2343 = vpack.c.b16 %v2221, %v2219
    %v2344 = vpack.c.b16 %v2224, %v2222
    %v2345 = vpack.c.b16 %v2225, %v2223
    %v2346 = vpack.c.b16 %v2228, %v2226
    %v2347 = vpack.c.b16 %v2229, %v2227
    %v2348 = vpack.c.b16 %v2232, %v2230
    %v2349 = vpack.c.b16 %v2233, %v2231
    %v2350 = vpack.c.b16 %v2236, %v2234
    %v2351 = vpack.c.b16 %v2237, %v2235
    %v2352 = vpack.c.b16 %v2240, %v2238
    %v2353 = vpack.c.b16 %v2241, %v2239
    %v2354 = vpack.c.b16 %v2244, %v2242
    %v2355 = vpack.c.b16 %v2245, %v2243
    %v2356 = vpack.c.b16 %v2248, %v2246
    %v2357 = vpack.c.b16 %v2249, %v2247
    %v2358 = vpack.c.b16 %v2252, %v2250
    %v2359 = vpack.c.b16 %v2253, %v2251
    %v2360 = vpack.c.b16 %v2256, %v2254
    %v2361 = vpack.c.b16 %v2257, %v2255
    %v2362 = vpack.c.b16 %v2260, %v2258
    %v2363 = vpack.c.b16 %v2261, %v2259
    %v2364 = vpack.c.b16 %v2264, %v2262
    %v2365 = vpack.c.b16 %v2265, %v2263
    %v2366 = vpack.c.b16 %v2268, %v2266
    %v2367 = vpack.c.b16 %v2269, %v2267
    %v2368 = vpack.c.b16 %v2272, %v2270
    %v2369 = vpack.c.b16 %v2273, %v2271
    %v2370 = vpack.c.b16 %v2276, %v2274
    %v2371 = vpack.c.b16 %v2277, %v2275
    %v2372 = vpack.c.b16 %v2280, %v2278
    %v2373 = vpack.c.b16 %v2281, %v2279
    %v2374 = vpack.c.b16 %v2284, %v2282
    %v2375 = vpack.c.b16 %v2285, %v2283
    %v2376 = vpack.c.b16 %v2288, %v2286
    %v2377 = vpack.c.b16 %v2289, %v2287
    %v2378 = vpack.c.b16 %v2292, %v2290
    %v2379 = vpack.c.b16 %v2293, %v2291
    %v2380 = vpack.c.b16 %v2296, %v2294
    %v2381 = vpack.c.b16 %v2297, %v2295
    %v2382 = vpack.c.b16 %v2300, %v2298
    %v2383 = vpack.c.b16 %v2301, %v2299
    %v2384 = vpack.c.b16 %v2304, %v2302
    %v2385 = vpack.c.b16 %v2305, %v2303
    %v2386 = vpack.c.b16 %v2308, %v2306
    %v2387 = vpack.c.b16 %v2309, %v2307
    %v2388 = vpack.c.b16 %v2312, %v2310
    %v2389 = vpack.c.b16 %v2313, %v2311
    %v2390 = vpack.c.b16 %v2316, %v2314
    %v2391 = vpack.c.b16 %v2317, %v2315
    %v2392 = vpack.c.b16 %v2320, %v2318
    %v2393 = vpack.c.b16 %v2321, %v2319
    %v2394 = vpack.c.b16 %v2324, %v2322
    %v2395 = vpack.c.b16 %v2325, %v2323
    %v2396 = vpack.c.b16 %v2328, %v2326
    %v2397 = vpack.c.b16 %v2329, %v2327
    %v2398 = vpack.c.b16 %v2332, %v2330
    %v2399 = vpack.c.b16 %v2333, %v2331
    %v2400 = vpack.c.b16 %v2336, %v2334
    %v2401 = vpack.c.b16 %v2337, %v2335
    %2466 = vmatprep.subr.bf16.mxu0 %v2339
    %2467 = vmatpush1.bf16.msra.mxu0 %v2338
    %2468 = vmatprep.subr.bf16.mxu0 %v2341
    %2469 = vmatpush1.bf16.msra.mxu0 %v2340
    %2470 = vmatprep.subr.bf16.mxu0 %v2343
    %2471 = vmatpush1.bf16.msra.mxu0 %v2342
    %2472 = vmatprep.subr.bf16.mxu0 %v2345
    %2473 = vmatpush1.bf16.msra.mxu0 %v2344
    %2474 = vmatprep.subr.bf16.mxu0 %v2347
    %2475 = vmatpush1.bf16.msra.mxu0 %v2346
    %2476 = vmatprep.subr.bf16.mxu0 %v2349
    %2477 = vmatpush1.bf16.msra.mxu0 %v2348
    %2478 = vmatprep.subr.bf16.mxu0 %v2351
    %2479 = vmatpush1.bf16.msra.mxu0 %v2350
    %2480 = vmatprep.subr.bf16.mxu0 %v2353
    %2481 = vmatpush1.bf16.msra.mxu0 %v2352
    %2482 = vmatprep.subr.bf16.mxu0 %v2355
    %2483 = vmatpush1.bf16.msra.mxu0 %v2354
    %2484 = vmatprep.subr.bf16.mxu0 %v2357
    %2485 = vmatpush1.bf16.msra.mxu0 %v2356
    %2486 = vmatprep.subr.bf16.mxu0 %v2359
    %2487 = vmatpush1.bf16.msra.mxu0 %v2358
    %2488 = vmatprep.subr.bf16.mxu0 %v2361
    %2489 = vmatpush1.bf16.msra.mxu0 %v2360
    %2490 = vmatprep.subr.bf16.mxu0 %v2363
    %2491 = vmatpush1.bf16.msra.mxu0 %v2362
    %2492 = vmatprep.subr.bf16.mxu0 %v2365
    %2493 = vmatpush1.bf16.msra.mxu0 %v2364
    %2494 = vmatprep.subr.bf16.mxu0 %v2367
    %2495 = vmatpush1.bf16.msra.mxu0 %v2366
    %2496 = vmatprep.subr.bf16.mxu0 %v2369
    %2497 = vmatpush1.bf16.msra.mxu0 %v2368
    %2498 = vmatprep.mubr.bf16.mxu0 %v2067
    %2499 = vmatmul.mubr.bf16.gmra.mrb[0].mxu0 %v2066
    %v2500 = vpop.f32.mrb[0].mxu0
    %v2501 = vadd.f32 %v2139, %v2500
    %v2502 = vpop.f32.mrb[0].mxu0
    %v2503 = vadd.f32 %v2143, %v2502
    %v2504 = vpop.f32.mrb[0].mxu0
    %v2505 = vpop.f32.mrb[0].mxu0
    %2506 = vdwg.mxu0
    %2507 = vmatprep.subr.bf16.mxu0 %v2371
    %2508 = vmatpush1.bf16.msra.mxu0 %v2370
    %2509 = vmatprep.subr.bf16.mxu0 %v2373
    %2510 = vmatpush1.bf16.msra.mxu0 %v2372
    %2511 = vmatprep.subr.bf16.mxu0 %v2375
    %2512 = vmatpush1.bf16.msra.mxu0 %v2374
    %2513 = vmatprep.subr.bf16.mxu0 %v2377
    %2514 = vmatpush1.bf16.msra.mxu0 %v2376
    %2515 = vmatprep.subr.bf16.mxu0 %v2379
    %2516 = vmatpush1.bf16.msra.mxu0 %v2378
    %2517 = vmatprep.subr.bf16.mxu0 %v2381
    %2518 = vmatpush1.bf16.msra.mxu0 %v2380
    %2519 = vmatprep.subr.bf16.mxu0 %v2383
    %2520 = vmatpush1.bf16.msra.mxu0 %v2382
    %2521 = vmatprep.subr.bf16.mxu0 %v2385
    %2522 = vmatpush1.bf16.msra.mxu0 %v2384
    %2523 = vmatprep.subr.bf16.mxu0 %v2387
    %2524 = vmatpush1.bf16.msra.mxu0 %v2386
    %2525 = vmatprep.subr.bf16.mxu0 %v2389
    %2526 = vmatpush1.bf16.msra.mxu0 %v2388
    %2527 = vmatprep.subr.bf16.mxu0 %v2391
    %2528 = vmatpush1.bf16.msra.mxu0 %v2390
    %2529 = vmatprep.subr.bf16.mxu0 %v2393
    %2530 = vmatpush1.bf16.msra.mxu0 %v2392
    %2531 = vmatprep.subr.bf16.mxu0 %v2395
    %2532 = vmatpush1.bf16.msra.mxu0 %v2394
    %2533 = vmatprep.subr.bf16.mxu0 %v2397
    %2534 = vmatpush1.bf16.msra.mxu0 %v2396
    %2535 = vmatprep.subr.bf16.mxu0 %v2399
    %2536 = vmatpush1.bf16.msra.mxu0 %v2398
    %2537 = vmatprep.subr.bf16.mxu0 %v2401
    %2538 = vmatpush1.bf16.msra.mxu0 %v2400
    %2539 = vmatprep.mubr.bf16.mxu0 %v2069
    %2540 = vmatmul.mubr.bf16.gmra.mrb[0].mxu0 %v2068
    %v2541 = vpop.f32.mrb[0].mxu0
    %v2542 = vadd.f32 %v2501, %v2541
    %v2543 = vpop.f32.mrb[0].mxu0
    %v2544 = vadd.f32 %v2503, %v2543
    %v2545 = vpop.f32.mrb[0].mxu0
    %v2546 = vpop.f32.mrb[0].mxu0
    %2547 = vdwg.mxu0
    %v2548 = vmax.f32 %v2542, 0.0
    %v2549 = vmax.f32 %v2544, 0.0
    %v2550 = vpack.c.bf16 %v2548, %v2548
    %v2551 = vpack.c.bf16 %v2549, %v2549
    %v2552 = vld [vmem:[%s6] sm:$0xf]
    %v2553 = vld [vmem:[%s6 + $0x4] sm:$0xf]
    %v2554 = vld [vmem:[%s6 + $0x8] sm:$0xf]
    %v2555 = vld [vmem:[%s6 + $0xc] sm:$0xf]
    %v2556 = vld [vmem:[%s6 + $0x10] sm:$0xf]
    %v2557 = vld [vmem:[%s6 + $0x14] sm:$0xf]
    %v2558 = vld [vmem:[%s6 + $0x18] sm:$0xf]
    %v2559 = vld [vmem:[%s6 + $0x1c] sm:$0xf]
    %v2560 = vld [vmem:[%s6 + $0x20] sm:$0xf]
    %v2561 = vld [vmem:[%s6 + $0x24] sm:$0xf]
    %v2562 = vld [vmem:[%s6 + $0x28] sm:$0xf]
    %v2563 = vld [vmem:[%s6 + $0x2c] sm:$0xf]
    %v2564 = vld [vmem:[%s6 + $0x30] sm:$0xf]
    %v2565 = vld [vmem:[%s6 + $0x34] sm:$0xf]
    %v2566 = vld [vmem:[%s6 + $0x38] sm:$0xf]
    %v2567 = vld [vmem:[%s6 + $0x3c] sm:$0xf]
    %v2568 = vld [vmem:[%s6 + $0x40] sm:$0xf]
    %v2569 = vld [vmem:[%s6 + $0x44] sm:$0xf]
    %v2570 = vld [vmem:[%s6 + $0x48] sm:$0xf]
    %v2571 = vld [vmem:[%s6 + $0x4c] sm:$0xf]
    %v2572 = vld [vmem:[%s6 + $0x50] sm:$0xf]
    %v2573 = vld [vmem:[%s6 + $0x54] sm:$0xf]
    %v2574 = vld [vmem:[%s6 + $0x58] sm:$0xf]
    %v2575 = vld [vmem:[%s6 + $0x5c] sm:$0xf]
    %v2576 = vld [vmem:[%s6 + $0x60] sm:$0xf]
    %v2577 = vld [vmem:[%s6 + $0x64] sm:$0xf]
    %v2578 = vld [vmem:[%s6 + $0x68] sm:$0xf]
    %v2579 = vld [vmem:[%s6 + $0x6c] sm:$0xf]
    %v2580 = vld [vmem:[%s6 + $0x70] sm:$0xf]
    %v2581 = vld [vmem:[%s6 + $0x74] sm:$0xf]
    %v2582 = vld [vmem:[%s6 + $0x78] sm:$0xf]
    %v2583 = vld [vmem:[%s6 + $0x7c] sm:$0xf]
    %v2584 = vld [vmem:[%s7] sm:$0x1]
    %v2586 = vlaneseq
    %v2587 = vshrl.u32 %v2586, 7
    %v2588 = vsub.s32 0, %v2587
    %v2589 = vrot.slane %v2584, %v2588
    %v2623 = vunpack.c.l.b16 %v2552
    %v2624 = vunpack.c.l.b16 %v2553
    %v2625 = vunpack.c.l.b16 %v2554
    %v2626 = vunpack.c.l.b16 %v2555
    %v2627 = vunpack.c.l.b16 %v2556
    %v2628 = vunpack.c.l.b16 %v2557
    %v2629 = vunpack.c.l.b16 %v2558
    %v2630 = vunpack.c.l.b16 %v2559
    %v2631 = vunpack.c.l.b16 %v2560
    %v2632 = vunpack.c.l.b16 %v2561
    %v2633 = vunpack.c.l.b16 %v2562
    %v2634 = vunpack.c.l.b16 %v2563
    %v2635 = vunpack.c.l.b16 %v2564
    %v2636 = vunpack.c.l.b16 %v2565
    %v2637 = vunpack.c.l.b16 %v2566
    %v2638 = vunpack.c.l.b16 %v2567
    %v2639 = vunpack.c.l.b16 %v2568
    %v2640 = vunpack.c.l.b16 %v2569
    %v2641 = vunpack.c.l.b16 %v2570
    %v2642 = vunpack.c.l.b16 %v2571
    %v2643 = vunpack.c.l.b16 %v2572
    %v2644 = vunpack.c.l.b16 %v2573
    %v2645 = vunpack.c.l.b16 %v2574
    %v2646 = vunpack.c.l.b16 %v2575
    %v2647 = vunpack.c.l.b16 %v2576
    %v2648 = vunpack.c.l.b16 %v2577
    %v2649 = vunpack.c.l.b16 %v2578
    %v2650 = vunpack.c.l.b16 %v2579
    %v2651 = vunpack.c.l.b16 %v2580
    %v2652 = vunpack.c.l.b16 %v2581
    %v2653 = vunpack.c.l.b16 %v2582
    %v2654 = vunpack.c.l.b16 %v2583
    %v2655 = vpack.c.b16 %v2624, %v2623
    %v2656 = vpack.c.b16 %v2626, %v2625
    %v2657 = vpack.c.b16 %v2628, %v2627
    %v2658 = vpack.c.b16 %v2630, %v2629
    %v2659 = vpack.c.b16 %v2632, %v2631
    %v2660 = vpack.c.b16 %v2634, %v2633
    %v2661 = vpack.c.b16 %v2636, %v2635
    %v2662 = vpack.c.b16 %v2638, %v2637
    %v2663 = vpack.c.b16 %v2640, %v2639
    %v2664 = vpack.c.b16 %v2642, %v2641
    %v2665 = vpack.c.b16 %v2644, %v2643
    %v2666 = vpack.c.b16 %v2646, %v2645
    %v2667 = vpack.c.b16 %v2648, %v2647
    %v2668 = vpack.c.b16 %v2650, %v2649
    %v2669 = vpack.c.b16 %v2652, %v2651
    %v2670 = vpack.c.b16 %v2654, %v2653
    %2687 = vmatprep.subr.bf16.mxu0 0
    %2688 = vmatpush1.bf16.msra.mxu0 %v2655
    %2689 = vmatprep.subr.bf16.mxu0 0
    %2690 = vmatpush1.bf16.msra.mxu0 %v2656
    %2691 = vmatprep.subr.bf16.mxu0 0
    %2692 = vmatpush1.bf16.msra.mxu0 %v2657
    %2693 = vmatprep.subr.bf16.mxu0 0
    %2694 = vmatpush1.bf16.msra.mxu0 %v2658
    %2695 = vmatprep.subr.bf16.mxu0 0
    %2696 = vmatpush1.bf16.msra.mxu0 %v2659
    %2697 = vmatprep.subr.bf16.mxu0 0
    %2698 = vmatpush1.bf16.msra.mxu0 %v2660
    %2699 = vmatprep.subr.bf16.mxu0 0
    %2700 = vmatpush1.bf16.msra.mxu0 %v2661
    %2701 = vmatprep.subr.bf16.mxu0 0
    %2702 = vmatpush1.bf16.msra.mxu0 %v2662
    %2703 = vmatprep.subr.bf16.mxu0 0
    %2704 = vmatpush1.bf16.msra.mxu0 %v2663
    %2705 = vmatprep.subr.bf16.mxu0 0
    %2706 = vmatpush1.bf16.msra.mxu0 %v2664
    %2707 = vmatprep.subr.bf16.mxu0 0
    %2708 = vmatpush1.bf16.msra.mxu0 %v2665
    %2709 = vmatprep.subr.bf16.mxu0 0
    %2710 = vmatpush1.bf16.msra.mxu0 %v2666
    %2711 = vmatprep.subr.bf16.mxu0 0
    %2712 = vmatpush1.bf16.msra.mxu0 %v2667
    %2713 = vmatprep.subr.bf16.mxu0 0
    %2714 = vmatpush1.bf16.msra.mxu0 %v2668
    %2715 = vmatprep.subr.bf16.mxu0 0
    %2716 = vmatpush1.bf16.msra.mxu0 %v2669
    %2717 = vmatprep.subr.bf16.mxu0 0
    %2718 = vmatpush1.bf16.msra.mxu0 %v2670
    %2719 = vmatprep.mubr.bf16.mxu0 %v2551
    %2720 = vmatmul.mubr.bf16.gmra.mrb[0].mxu0 %v2550
    %v2721 = vpop.f32.mrb[0].mxu0
    %v2722 = vadd.f32 %v2589, %v2721
    %v2723 = vpop.f32.mrb[0].mxu0
    %v2724 = vpop.f32.mrb[0].mxu0
    %v2725 = vpop.f32.mrb[0].mxu0
    %2726 = vdwg.mxu0
    %v2727 = vmax.f32 %v2722, 0.0
    %v2728 = vpack.c.bf16 %v2727, %v2727
    %v2729 = vld [vmem:[%s8] sm:$0xf]
    %v2730 = vld [vmem:[%s8 + $0x4] sm:$0xf]
    %v2731 = vld [vmem:[%s8 + $0x8] sm:$0xf]
    %v2732 = vld [vmem:[%s8 + $0xc] sm:$0xf]
    %v2733 = vld [vmem:[%s8 + $0x10] sm:$0xf]
    %v2734 = vld [vmem:[%s8 + $0x14] sm:$0xf]
    %v2735 = vld [vmem:[%s8 + $0x18] sm:$0xf]
    %v2736 = vld [vmem:[%s8 + $0x1c] sm:$0xf]
    %v2737 = vld [vmem:[%s8 + $0x20] sm:$0xf]
    %v2738 = vld [vmem:[%s8 + $0x24] sm:$0xf]
    %v2739 = vld [vmem:[%s8 + $0x28] sm:$0xf]
    %v2740 = vld [vmem:[%s8 + $0x2c] sm:$0xf]
    %v2741 = vld [vmem:[%s8 + $0x30] sm:$0xf]
    %v2742 = vld [vmem:[%s8 + $0x34] sm:$0xf]
    %v2743 = vld [vmem:[%s8 + $0x38] sm:$0xf]
    %v2744 = vld [vmem:[%s8 + $0x3c] sm:$0xf]
    %v2745 = vld [vmem:[%s9] sm:$0x1]
    %v2747 = vlaneseq
    %v2748 = vshrl.u32 %v2747, 7
    %v2749 = vsub.s32 0, %v2748
    %v2750 = vrot.slane %v2745, %v2749
    %v2768 = vunpack.c.l.b16 %v2729
    %v2769 = vunpack.c.l.b16 %v2730
    %v2770 = vunpack.c.l.b16 %v2731
    %v2771 = vunpack.c.l.b16 %v2732
    %v2772 = vunpack.c.l.b16 %v2733
    %v2773 = vunpack.c.l.b16 %v2734
    %v2774 = vunpack.c.l.b16 %v2735
    %v2775 = vunpack.c.l.b16 %v2736
    %v2776 = vunpack.c.l.b16 %v2737
    %v2777 = vunpack.c.l.b16 %v2738
    %v2778 = vunpack.c.l.b16 %v2739
    %v2779 = vunpack.c.l.b16 %v2740
    %v2780 = vunpack.c.l.b16 %v2741
    %v2781 = vunpack.c.l.b16 %v2742
    %v2782 = vunpack.c.l.b16 %v2743
    %v2783 = vunpack.c.l.b16 %v2744
    %v2784 = vpack.c.b16 %v2769, %v2768
    %v2785 = vpack.c.b16 %v2771, %v2770
    %v2786 = vpack.c.b16 %v2773, %v2772
    %v2787 = vpack.c.b16 %v2775, %v2774
    %v2788 = vpack.c.b16 %v2777, %v2776
    %v2789 = vpack.c.b16 %v2779, %v2778
    %v2790 = vpack.c.b16 %v2781, %v2780
    %v2791 = vpack.c.b16 %v2783, %v2782
    %2800 = vmatprep.subr.bf16.mxu0 0
    %2801 = vmatpush1.bf16.msra.mxu0 %v2784
    %2802 = vmatprep.subr.bf16.mxu0 0
    %2803 = vmatpush1.bf16.msra.mxu0 %v2785
    %2804 = vmatprep.subr.bf16.mxu0 0
    %2805 = vmatpush1.bf16.msra.mxu0 %v2786
    %2806 = vmatprep.subr.bf16.mxu0 0
    %2807 = vmatpush1.bf16.msra.mxu0 %v2787
    %2808 = vmatprep.subr.bf16.mxu0 0
    %2809 = vmatpush1.bf16.msra.mxu0 %v2788
    %2810 = vmatprep.subr.bf16.mxu0 0
    %2811 = vmatpush1.bf16.msra.mxu0 %v2789
    %2812 = vmatprep.subr.bf16.mxu0 0
    %2813 = vmatpush1.bf16.msra.mxu0 %v2790
    %2814 = vmatprep.subr.bf16.mxu0 0
    %2815 = vmatpush1.bf16.msra.mxu0 %v2791
    %2816 = vmatprep.subr.bf16.mxu0 0
    %2817 = vmatpush1.bf16.msra.mxu0 0
    %2818 = vmatprep.subr.bf16.mxu0 0
    %2819 = vmatpush1.bf16.msra.mxu0 0
    %2820 = vmatprep.subr.bf16.mxu0 0
    %2821 = vmatpush1.bf16.msra.mxu0 0
    %2822 = vmatprep.subr.bf16.mxu0 0
    %2823 = vmatpush1.bf16.msra.mxu0 0
    %2824 = vmatprep.subr.bf16.mxu0 0
    %2825 = vmatpush1.bf16.msra.mxu0 0
    %2826 = vmatprep.subr.bf16.mxu0 0
    %2827 = vmatpush1.bf16.msra.mxu0 0
    %2828 = vmatprep.subr.bf16.mxu0 0
    %2829 = vmatpush1.bf16.msra.mxu0 0
    %2830 = vmatprep.subr.bf16.mxu0 0
    %2831 = vmatpush1.bf16.msra.mxu0 0
    %2832 = vmatprep.mubr.bf16.mxu0 0
    %2833 = vmatmul.mubr.bf16.gmra.mrb[0].mxu0 %v2728
    %v2834 = vpop.f32.mrb[0].mxu0
    %v2835 = vadd.f32 %v2750, %v2834
    %v2836 = vpop.f32.mrb[0].mxu0
    %v2837 = vpop.f32.mrb[0].mxu0
    %v2838 = vpop.f32.mrb[0].mxu0
    %2839 = vdwg.mxu0
    %v2840 = vld [vmem:[%s1] sm:$0x3]
    %v2841 = vmul.f32 %v2835, 0.5
    %v2842 = vmul.f32 %v2841, 1.442695
    %v2843 = vpow.pop %v2842
    %2845 = vrot.lane.b32.xlu0 %v2843, 96
    %v2846 = vpop.permute.xlu0 %2845
    %v2848 = vmul.f32 %v2840, %v2846
    %v2849 = vadd.f32 %v2835, %v2848
    %v2850 = vpack.c.bf16 %v2849, %v2849
    %v2851 = vld [vmem:[%s10] sm:$0xf]
    %v2852 = vld [vmem:[%s10 + $0x4] sm:$0xf]
    %v2853 = vld [vmem:[%s10 + $0x8] sm:$0xf]
    %v2854 = vld [vmem:[%s10 + $0xc] sm:$0xf]
    %v2855 = vld [vmem:[%s11] sm:$0x1]
    %v2857 = vlaneseq
    %v2858 = vshrl.u32 %v2857, 7
    %v2859 = vsub.s32 0, %v2858
    %v2860 = vrot.slane %v2855, %v2859
    %v2866 = vunpack.c.l.b16 %v2851
    %v2867 = vunpack.c.l.b16 %v2852
    %v2868 = vunpack.c.l.b16 %v2853
    %v2869 = vunpack.c.l.b16 %v2854
    %v2870 = vpack.c.b16 %v2867, %v2866
    %v2871 = vpack.c.b16 %v2869, %v2868
    %vm2874 = vcmask 261120
    %v2876 = vsel %vm2874, %v2850, 0
    %2878 = vmatprep.subr.bf16.mxu0 0
    %2879 = vmatpush1.bf16.msra.mxu0 %v2870
    %2880 = vmatprep.subr.bf16.mxu0 0
    %2881 = vmatpush1.bf16.msra.mxu0 %v2871
    %2882 = vmatprep.subr.bf16.mxu0 0
    %2883 = vmatpush1.bf16.msra.mxu0 0
    %2884 = vmatprep.subr.bf16.mxu0 0
    %2885 = vmatpush1.bf16.msra.mxu0 0
    %2886 = vmatprep.subr.bf16.mxu0 0
    %2887 = vmatpush1.bf16.msra.mxu0 0
    %2888 = vmatprep.subr.bf16.mxu0 0
    %2889 = vmatpush1.bf16.msra.mxu0 0
    %2890 = vmatprep.subr.bf16.mxu0 0
    %2891 = vmatpush1.bf16.msra.mxu0 0
    %2892 = vmatprep.subr.bf16.mxu0 0
    %2893 = vmatpush1.bf16.msra.mxu0 0
    %2894 = vmatprep.subr.bf16.mxu0 0
    %2895 = vmatpush1.bf16.msra.mxu0 0
    %2896 = vmatprep.subr.bf16.mxu0 0
    %2897 = vmatpush1.bf16.msra.mxu0 0
    %2898 = vmatprep.subr.bf16.mxu0 0
    %2899 = vmatpush1.bf16.msra.mxu0 0
    %2900 = vmatprep.subr.bf16.mxu0 0
    %2901 = vmatpush1.bf16.msra.mxu0 0
    %2902 = vmatprep.subr.bf16.mxu0 0
    %2903 = vmatpush1.bf16.msra.mxu0 0
    %2904 = vmatprep.subr.bf16.mxu0 0
    %2905 = vmatpush1.bf16.msra.mxu0 0
    %2906 = vmatprep.subr.bf16.mxu0 0
    %2907 = vmatpush1.bf16.msra.mxu0 0
    %2908 = vmatprep.subr.bf16.mxu0 0
    %2909 = vmatpush1.bf16.msra.mxu0 0
    %2910 = vmatprep.mubr.bf16.mxu0 0
    %2911 = vmatmul.mubr.bf16.gmra.mrb[0].mxu0 %v2876
    %v2912 = vpop.f32.mrb[0].mxu0
    %v2913 = vadd.f32 %v2860, %v2912
    %v2914 = vpop.f32.mrb[0].mxu0
    %v2915 = vpop.f32.mrb[0].mxu0
    %v2916 = vpop.f32.mrb[0].mxu0
    %2917 = vdwg.mxu0
    %v2918 = vmax.f32 %v2913, 0.0
    %v2919 = vpack.c.bf16 %v2918, %v2918
    %v2920 = vld [vmem:[%s12] sm:$0xff]
    %v2921 = vld [vmem:[%s12 + $0x8] sm:$0xff]
    %v2922 = vld [vmem:[%s12 + $0x10] sm:$0xff]
    %v2923 = vld [vmem:[%s12 + $0x18] sm:$0xff]
    %v2924 = vld [vmem:[%s12 + $0x20] sm:$0xff]
    %v2925 = vld [vmem:[%s12 + $0x28] sm:$0xff]
    %v2926 = vld [vmem:[%s12 + $0x30] sm:$0xff]
    %v2927 = vld [vmem:[%s12 + $0x38] sm:$0xff]
    %v2928 = vld [vmem:[%s12 + $0x40] sm:$0xff]
    %v2929 = vld [vmem:[%s12 + $0x48] sm:$0xff]
    %v2930 = vld [vmem:[%s12 + $0x50] sm:$0xff]
    %v2931 = vld [vmem:[%s12 + $0x58] sm:$0xff]
    %v2932 = vld [vmem:[%s12 + $0x60] sm:$0xff]
    %v2933 = vld [vmem:[%s12 + $0x68] sm:$0xff]
    %v2934 = vld [vmem:[%s12 + $0x70] sm:$0xff]
    %v2935 = vld [vmem:[%s12 + $0x78] sm:$0xff]
    %v2936 = vld [vmem:[%s13] sm:$0x3]
    %v2938 = vlaneseq
    %v2939 = vshrl.u32 %v2938, 7
    %v2940 = vsub.s32 0, %v2939
    %v2941 = vrot.slane %v2936, %v2940
    %v2942 = vlaneseq
    %v2943 = vshrl.u32 %v2942, 7
    %v2944 = vsub.s32 1, %v2943
    %v2945 = vrot.slane %v2936, %v2944
    %v2964 = vunpack.c.l.b16 %v2920
    %v2965 = vunpack.c.h.b16 %v2920
    %v2966 = vunpack.c.l.b16 %v2921
    %v2967 = vunpack.c.h.b16 %v2921
    %v2968 = vunpack.c.l.b16 %v2922
    %v2969 = vunpack.c.h.b16 %v2922
    %v2970 = vunpack.c.l.b16 %v2923
    %v2971 = vunpack.c.h.b16 %v2923
    %v2972 = vunpack.c.l.b16 %v2924
    %v2973 = vunpack.c.h.b16 %v2924
    %v2974 = vunpack.c.l.b16 %v2925
    %v2975 = vunpack.c.h.b16 %v2925
    %v2976 = vunpack.c.l.b16 %v2926
    %v2977 = vunpack.c.h.b16 %v2926
    %v2978 = vunpack.c.l.b16 %v2927
    %v2979 = vunpack.c.h.b16 %v2927
    %v2980 = vunpack.c.l.b16 %v2928
    %v2981 = vunpack.c.h.b16 %v2928
    %v2982 = vunpack.c.l.b16 %v2929
    %v2983 = vunpack.c.h.b16 %v2929
    %v2984 = vunpack.c.l.b16 %v2930
    %v2985 = vunpack.c.h.b16 %v2930
    %v2986 = vunpack.c.l.b16 %v2931
    %v2987 = vunpack.c.h.b16 %v2931
    %v2988 = vunpack.c.l.b16 %v2932
    %v2989 = vunpack.c.h.b16 %v2932
    %v2990 = vunpack.c.l.b16 %v2933
    %v2991 = vunpack.c.h.b16 %v2933
    %v2992 = vunpack.c.l.b16 %v2934
    %v2993 = vunpack.c.h.b16 %v2934
    %v2994 = vunpack.c.l.b16 %v2935
    %v2995 = vunpack.c.h.b16 %v2935
    %v2996 = vpack.c.b16 %v2966, %v2964
    %v2997 = vpack.c.b16 %v2967, %v2965
    %v2998 = vpack.c.b16 %v2970, %v2968
    %v2999 = vpack.c.b16 %v2971, %v2969
    %v3000 = vpack.c.b16 %v2974, %v2972
    %v3001 = vpack.c.b16 %v2975, %v2973
    %v3002 = vpack.c.b16 %v2978, %v2976
    %v3003 = vpack.c.b16 %v2979, %v2977
    %v3004 = vpack.c.b16 %v2982, %v2980
    %v3005 = vpack.c.b16 %v2983, %v2981
    %v3006 = vpack.c.b16 %v2986, %v2984
    %v3007 = vpack.c.b16 %v2987, %v2985
    %v3008 = vpack.c.b16 %v2990, %v2988
    %v3009 = vpack.c.b16 %v2991, %v2989
    %v3010 = vpack.c.b16 %v2994, %v2992
    %v3011 = vpack.c.b16 %v2995, %v2993
    %3028 = vmatprep.subr.bf16.mxu0 %v2997
    %3029 = vmatpush1.bf16.msra.mxu0 %v2996
    %3030 = vmatprep.subr.bf16.mxu0 %v2999
    %3031 = vmatpush1.bf16.msra.mxu0 %v2998
    %3032 = vmatprep.subr.bf16.mxu0 %v3001
    %3033 = vmatpush1.bf16.msra.mxu0 %v3000
    %3034 = vmatprep.subr.bf16.mxu0 %v3003
    %3035 = vmatpush1.bf16.msra.mxu0 %v3002
    %3036 = vmatprep.subr.bf16.mxu0 %v3005
    %3037 = vmatpush1.bf16.msra.mxu0 %v3004
    %3038 = vmatprep.subr.bf16.mxu0 %v3007
    %3039 = vmatpush1.bf16.msra.mxu0 %v3006
    %3040 = vmatprep.subr.bf16.mxu0 %v3009
    %3041 = vmatpush1.bf16.msra.mxu0 %v3008
    %3042 = vmatprep.subr.bf16.mxu0 %v3011
    %3043 = vmatpush1.bf16.msra.mxu0 %v3010
    %3044 = vmatprep.subr.bf16.mxu0 0
    %3045 = vmatpush1.bf16.msra.mxu0 0
    %3046 = vmatprep.subr.bf16.mxu0 0
    %3047 = vmatpush1.bf16.msra.mxu0 0
    %3048 = vmatprep.subr.bf16.mxu0 0
    %3049 = vmatpush1.bf16.msra.mxu0 0
    %3050 = vmatprep.subr.bf16.mxu0 0
    %3051 = vmatpush1.bf16.msra.mxu0 0
    %3052 = vmatprep.subr.bf16.mxu0 0
    %3053 = vmatpush1.bf16.msra.mxu0 0
    %3054 = vmatprep.subr.bf16.mxu0 0
    %3055 = vmatpush1.bf16.msra.mxu0 0
    %3056 = vmatprep.subr.bf16.mxu0 0
    %3057 = vmatpush1.bf16.msra.mxu0 0
    %3058 = vmatprep.subr.bf16.mxu0 0
    %3059 = vmatpush1.bf16.msra.mxu0 0
    %3060 = vmatprep.mubr.bf16.mxu0 0
    %3061 = vmatmul.mubr.bf16.gmra.mrb[0].mxu0 %v2919
    %v3062 = vpop.f32.mrb[0].mxu0
    %v3063 = vadd.f32 %v2941, %v3062
    %v3064 = vpop.f32.mrb[0].mxu0
    %v3065 = vadd.f32 %v2945, %v3064
    %v3066 = vpop.f32.mrb[0].mxu0
    %v3067 = vpop.f32.mrb[0].mxu0
    %3068 = vdwg.mxu0
    %v3069 = vmax.f32 %v3063, 0.0
    %v3070 = vmax.f32 %v3065, 0.0
    %v3071 = vpack.c.bf16 %v3069, %v3069
    %v3072 = vpack.c.bf16 %v3070, %v3070
    %v3073 = vld [vmem:[#allocation6] sm:$0xff]
    %v3074 = vld [vmem:[#allocation6 + $0x8] sm:$0xff]
    %v3075 = vld [vmem:[#allocation6 + $0x10] sm:$0xff]
    %v3076 = vld [vmem:[#allocation6 + $0x18] sm:$0xff]
    %v3077 = vld [vmem:[#allocation6 + $0x20] sm:$0xff]
    %v3078 = vld [vmem:[#allocation6 + $0x28] sm:$0xff]
    %v3079 = vld [vmem:[#allocation6 + $0x30] sm:$0xff]
    %v3080 = vld [vmem:[#allocation6 + $0x38] sm:$0xff]
    %v3081 = vld [vmem:[#allocation6 + $0x40] sm:$0xff]
    %v3082 = vld [vmem:[#allocation6 + $0x48] sm:$0xff]
    %v3083 = vld [vmem:[#allocation6 + $0x50] sm:$0xff]
    %v3084 = vld [vmem:[#allocation6 + $0x58] sm:$0xff]
    %v3085 = vld [vmem:[#allocation6 + $0x60] sm:$0xff]
    %v3086 = vld [vmem:[#allocation6 + $0x68] sm:$0xff]
    %v3087 = vld [vmem:[#allocation6 + $0x70] sm:$0xff]
    %v3088 = vld [vmem:[#allocation6 + $0x78] sm:$0xff]
    %v3089 = vld [vmem:[#allocation6 + $0x80] sm:$0xff]
    %v3090 = vld [vmem:[#allocation6 + $0x88] sm:$0xff]
    %v3091 = vld [vmem:[#allocation6 + $0x90] sm:$0xff]
    %v3092 = vld [vmem:[#allocation6 + $0x98] sm:$0xff]
    %v3093 = vld [vmem:[#allocation6 + $0xa0] sm:$0xff]
    %v3094 = vld [vmem:[#allocation6 + $0xa8] sm:$0xff]
    %v3095 = vld [vmem:[#allocation6 + $0xb0] sm:$0xff]
    %v3096 = vld [vmem:[#allocation6 + $0xb8] sm:$0xff]
    %v3097 = vld [vmem:[#allocation6 + $0xc0] sm:$0xff]
    %v3098 = vld [vmem:[#allocation6 + $0xc8] sm:$0xff]
    %v3099 = vld [vmem:[#allocation6 + $0xd0] sm:$0xff]
    %v3100 = vld [vmem:[#allocation6 + $0xd8] sm:$0xff]
    %v3101 = vld [vmem:[#allocation6 + $0xe0] sm:$0xff]
    %v3102 = vld [vmem:[#allocation6 + $0xe8] sm:$0xff]
    %v3103 = vld [vmem:[#allocation6 + $0xf0] sm:$0xff]
    %v3104 = vld [vmem:[#allocation6 + $0xf8] sm:$0xff]
    %v3105 = vld [vmem:[#allocation6 + $0x100] sm:$0xff]
    %v3106 = vld [vmem:[#allocation6 + $0x108] sm:$0xff]
    %v3107 = vld [vmem:[#allocation6 + $0x110] sm:$0xff]
    %v3108 = vld [vmem:[#allocation6 + $0x118] sm:$0xff]
    %v3109 = vld [vmem:[#allocation6 + $0x120] sm:$0xff]
    %v3110 = vld [vmem:[#allocation6 + $0x128] sm:$0xff]
    %v3111 = vld [vmem:[#allocation6 + $0x130] sm:$0xff]
    %v3112 = vld [vmem:[#allocation6 + $0x138] sm:$0xff]
    %v3113 = vld [vmem:[#allocation6 + $0x140] sm:$0xff]
    %v3114 = vld [vmem:[#allocation6 + $0x148] sm:$0xff]
    %v3115 = vld [vmem:[#allocation6 + $0x150] sm:$0xff]
    %v3116 = vld [vmem:[#allocation6 + $0x158] sm:$0xff]
    %v3117 = vld [vmem:[#allocation6 + $0x160] sm:$0xff]
    %v3118 = vld [vmem:[#allocation6 + $0x168] sm:$0xff]
    %v3119 = vld [vmem:[#allocation6 + $0x170] sm:$0xff]
    %v3120 = vld [vmem:[#allocation6 + $0x178] sm:$0xff]
    %v3121 = vld [vmem:[#allocation6 + $0x180] sm:$0xff]
    %v3122 = vld [vmem:[#allocation6 + $0x188] sm:$0xff]
    %v3123 = vld [vmem:[#allocation6 + $0x190] sm:$0xff]
    %v3124 = vld [vmem:[#allocation6 + $0x198] sm:$0xff]
    %v3125 = vld [vmem:[#allocation6 + $0x1a0] sm:$0xff]
    %v3126 = vld [vmem:[#allocation6 + $0x1a8] sm:$0xff]
    %v3127 = vld [vmem:[#allocation6 + $0x1b0] sm:$0xff]
    %v3128 = vld [vmem:[#allocation6 + $0x1b8] sm:$0xff]
    %v3129 = vld [vmem:[#allocation6 + $0x1c0] sm:$0xff]
    %v3130 = vld [vmem:[#allocation6 + $0x1c8] sm:$0xff]
    %v3131 = vld [vmem:[#allocation6 + $0x1d0] sm:$0xff]
    %v3132 = vld [vmem:[#allocation6 + $0x1d8] sm:$0xff]
    %v3133 = vld [vmem:[#allocation6 + $0x1e0] sm:$0xff]
    %v3134 = vld [vmem:[#allocation6 + $0x1e8] sm:$0xff]
    %v3135 = vld [vmem:[#allocation6 + $0x1f0] sm:$0xff]
    %v3136 = vld [vmem:[#allocation6 + $0x1f8] sm:$0xff]
    %v3137 = vld [vmem:[%s15] sm:$0xf]
    %v3139 = vlaneseq
    %v3140 = vshrl.u32 %v3139, 7
    %v3141 = vsub.s32 0, %v3140
    %v3142 = vrot.slane %v3137, %v3141
    %v3143 = vlaneseq
    %v3144 = vshrl.u32 %v3143, 7
    %v3145 = vsub.s32 1, %v3144
    %v3146 = vrot.slane %v3137, %v3145
    %v3147 = vlaneseq
    %v3148 = vshrl.u32 %v3147, 7
    %v3149 = vsub.s32 2, %v3148
    %v3150 = vrot.slane %v3137, %v3149
    %v3151 = vlaneseq
    %v3152 = vshrl.u32 %v3151, 7
    %v3153 = vsub.s32 3, %v3152
    %v3154 = vrot.slane %v3137, %v3153
    %v3223 = vunpack.c.l.b16 %v3073
    %v3224 = vunpack.c.h.b16 %v3073
    %v3225 = vunpack.c.l.b16 %v3074
    %v3226 = vunpack.c.h.b16 %v3074
    %v3227 = vunpack.c.l.b16 %v3075
    %v3228 = vunpack.c.h.b16 %v3075
    %v3229 = vunpack.c.l.b16 %v3076
    %v3230 = vunpack.c.h.b16 %v3076
    %v3231 = vunpack.c.l.b16 %v3077
    %v3232 = vunpack.c.h.b16 %v3077
    %v3233 = vunpack.c.l.b16 %v3078
    %v3234 = vunpack.c.h.b16 %v3078
    %v3235 = vunpack.c.l.b16 %v3079
    %v3236 = vunpack.c.h.b16 %v3079
    %v3237 = vunpack.c.l.b16 %v3080
    %v3238 = vunpack.c.h.b16 %v3080
    %v3239 = vunpack.c.l.b16 %v3081
    %v3240 = vunpack.c.h.b16 %v3081
    %v3241 = vunpack.c.l.b16 %v3082
    %v3242 = vunpack.c.h.b16 %v3082
    %v3243 = vunpack.c.l.b16 %v3083
    %v3244 = vunpack.c.h.b16 %v3083
    %v3245 = vunpack.c.l.b16 %v3084
    %v3246 = vunpack.c.h.b16 %v3084
    %v3247 = vunpack.c.l.b16 %v3085
    %v3248 = vunpack.c.h.b16 %v3085
    %v3249 = vunpack.c.l.b16 %v3086
    %v3250 = vunpack.c.h.b16 %v3086
    %v3251 = vunpack.c.l.b16 %v3087
    %v3252 = vunpack.c.h.b16 %v3087
    %v3253 = vunpack.c.l.b16 %v3088
    %v3254 = vunpack.c.h.b16 %v3088
    %v3255 = vunpack.c.l.b16 %v3089
    %v3256 = vunpack.c.h.b16 %v3089
    %v3257 = vunpack.c.l.b16 %v3090
    %v3258 = vunpack.c.h.b16 %v3090
    %v3259 = vunpack.c.l.b16 %v3091
    %v3260 = vunpack.c.h.b16 %v3091
    %v3261 = vunpack.c.l.b16 %v3092
    %v3262 = vunpack.c.h.b16 %v3092
    %v3263 = vunpack.c.l.b16 %v3093
    %v3264 = vunpack.c.h.b16 %v3093
    %v3265 = vunpack.c.l.b16 %v3094
    %v3266 = vunpack.c.h.b16 %v3094
    %v3267 = vunpack.c.l.b16 %v3095
    %v3268 = vunpack.c.h.b16 %v3095
    %v3269 = vunpack.c.l.b16 %v3096
    %v3270 = vunpack.c.h.b16 %v3096
    %v3271 = vunpack.c.l.b16 %v3097
    %v3272 = vunpack.c.h.b16 %v3097
    %v3273 = vunpack.c.l.b16 %v3098
    %v3274 = vunpack.c.h.b16 %v3098
    %v3275 = vunpack.c.l.b16 %v3099
    %v3276 = vunpack.c.h.b16 %v3099
    %v3277 = vunpack.c.l.b16 %v3100
    %v3278 = vunpack.c.h.b16 %v3100
    %v3279 = vunpack.c.l.b16 %v3101
    %v3280 = vunpack.c.h.b16 %v3101
    %v3281 = vunpack.c.l.b16 %v3102
    %v3282 = vunpack.c.h.b16 %v3102
    %v3283 = vunpack.c.l.b16 %v3103
    %v3284 = vunpack.c.h.b16 %v3103
    %v3285 = vunpack.c.l.b16 %v3104
    %v3286 = vunpack.c.h.b16 %v3104
    %v3287 = vunpack.c.l.b16 %v3105
    %v3288 = vunpack.c.h.b16 %v3105
    %v3289 = vunpack.c.l.b16 %v3106
    %v3290 = vunpack.c.h.b16 %v3106
    %v3291 = vunpack.c.l.b16 %v3107
    %v3292 = vunpack.c.h.b16 %v3107
    %v3293 = vunpack.c.l.b16 %v3108
    %v3294 = vunpack.c.h.b16 %v3108
    %v3295 = vunpack.c.l.b16 %v3109
    %v3296 = vunpack.c.h.b16 %v3109
    %v3297 = vunpack.c.l.b16 %v3110
    %v3298 = vunpack.c.h.b16 %v3110
    %v3299 = vunpack.c.l.b16 %v3111
    %v3300 = vunpack.c.h.b16 %v3111
    %v3301 = vunpack.c.l.b16 %v3112
    %v3302 = vunpack.c.h.b16 %v3112
    %v3303 = vunpack.c.l.b16 %v3113
    %v3304 = vunpack.c.h.b16 %v3113
    %v3305 = vunpack.c.l.b16 %v3114
    %v3306 = vunpack.c.h.b16 %v3114
    %v3307 = vunpack.c.l.b16 %v3115
    %v3308 = vunpack.c.h.b16 %v3115
    %v3309 = vunpack.c.l.b16 %v3116
    %v3310 = vunpack.c.h.b16 %v3116
    %v3311 = vunpack.c.l.b16 %v3117
    %v3312 = vunpack.c.h.b16 %v3117
    %v3313 = vunpack.c.l.b16 %v3118
    %v3314 = vunpack.c.h.b16 %v3118
    %v3315 = vunpack.c.l.b16 %v3119
    %v3316 = vunpack.c.h.b16 %v3119
    %v3317 = vunpack.c.l.b16 %v3120
    %v3318 = vunpack.c.h.b16 %v3120
    %v3319 = vunpack.c.l.b16 %v3121
    %v3320 = vunpack.c.h.b16 %v3121
    %v3321 = vunpack.c.l.b16 %v3122
    %v3322 = vunpack.c.h.b16 %v3122
    %v3323 = vunpack.c.l.b16 %v3123
    %v3324 = vunpack.c.h.b16 %v3123
    %v3325 = vunpack.c.l.b16 %v3124
    %v3326 = vunpack.c.h.b16 %v3124
    %v3327 = vunpack.c.l.b16 %v3125
    %v3328 = vunpack.c.h.b16 %v3125
    %v3329 = vunpack.c.l.b16 %v3126
    %v3330 = vunpack.c.h.b16 %v3126
    %v3331 = vunpack.c.l.b16 %v3127
    %v3332 = vunpack.c.h.b16 %v3127
    %v3333 = vunpack.c.l.b16 %v3128
    %v3334 = vunpack.c.h.b16 %v3128
    %v3335 = vunpack.c.l.b16 %v3129
    %v3336 = vunpack.c.h.b16 %v3129
    %v3337 = vunpack.c.l.b16 %v3130
    %v3338 = vunpack.c.h.b16 %v3130
    %v3339 = vunpack.c.l.b16 %v3131
    %v3340 = vunpack.c.h.b16 %v3131
    %v3341 = vunpack.c.l.b16 %v3132
    %v3342 = vunpack.c.h.b16 %v3132
    %v3343 = vunpack.c.l.b16 %v3133
    %v3344 = vunpack.c.h.b16 %v3133
    %v3345 = vunpack.c.l.b16 %v3134
    %v3346 = vunpack.c.h.b16 %v3134
    %v3347 = vunpack.c.l.b16 %v3135
    %v3348 = vunpack.c.h.b16 %v3135
    %v3349 = vunpack.c.l.b16 %v3136
    %v3350 = vunpack.c.h.b16 %v3136
    %v3351 = vpack.c.b16 %v3227, %v3223
    %v3352 = vpack.c.b16 %v3228, %v3224
    %v3353 = vpack.c.b16 %v3229, %v3225
    %v3354 = vpack.c.b16 %v3230, %v3226
    %v3355 = vpack.c.b16 %v3235, %v3231
    %v3356 = vpack.c.b16 %v3236, %v3232
    %v3357 = vpack.c.b16 %v3237, %v3233
    %v3358 = vpack.c.b16 %v3238, %v3234
    %v3359 = vpack.c.b16 %v3243, %v3239
    %v3360 = vpack.c.b16 %v3244, %v3240
    %v3361 = vpack.c.b16 %v3245, %v3241
    %v3362 = vpack.c.b16 %v3246, %v3242
    %v3363 = vpack.c.b16 %v3251, %v3247
    %v3364 = vpack.c.b16 %v3252, %v3248
    %v3365 = vpack.c.b16 %v3253, %v3249
    %v3366 = vpack.c.b16 %v3254, %v3250
    %v3367 = vpack.c.b16 %v3259, %v3255
    %v3368 = vpack.c.b16 %v3260, %v3256
    %v3369 = vpack.c.b16 %v3261, %v3257
    %v3370 = vpack.c.b16 %v3262, %v3258
    %v3371 = vpack.c.b16 %v3267, %v3263
    %v3372 = vpack.c.b16 %v3268, %v3264
    %v3373 = vpack.c.b16 %v3269, %v3265
    %v3374 = vpack.c.b16 %v3270, %v3266
    %v3375 = vpack.c.b16 %v3275, %v3271
    %v3376 = vpack.c.b16 %v3276, %v3272
    %v3377 = vpack.c.b16 %v3277, %v3273
    %v3378 = vpack.c.b16 %v3278, %v3274
    %v3379 = vpack.c.b16 %v3283, %v3279
    %v3380 = vpack.c.b16 %v3284, %v3280
    %v3381 = vpack.c.b16 %v3285, %v3281
    %v3382 = vpack.c.b16 %v3286, %v3282
    %v3383 = vpack.c.b16 %v3291, %v3287
    %v3384 = vpack.c.b16 %v3292, %v3288
    %v3385 = vpack.c.b16 %v3293, %v3289
    %v3386 = vpack.c.b16 %v3294, %v3290
    %v3387 = vpack.c.b16 %v3299, %v3295
    %v3388 = vpack.c.b16 %v3300, %v3296
    %v3389 = vpack.c.b16 %v3301, %v3297
    %v3390 = vpack.c.b16 %v3302, %v3298
    %v3391 = vpack.c.b16 %v3307, %v3303
    %v3392 = vpack.c.b16 %v3308, %v3304
    %v3393 = vpack.c.b16 %v3309, %v3305
    %v3394 = vpack.c.b16 %v3310, %v3306
    %v3395 = vpack.c.b16 %v3315, %v3311
    %v3396 = vpack.c.b16 %v3316, %v3312
    %v3397 = vpack.c.b16 %v3317, %v3313
    %v3398 = vpack.c.b16 %v3318, %v3314
    %v3399 = vpack.c.b16 %v3323, %v3319
    %v3400 = vpack.c.b16 %v3324, %v3320
    %v3401 = vpack.c.b16 %v3325, %v3321
    %v3402 = vpack.c.b16 %v3326, %v3322
    %v3403 = vpack.c.b16 %v3331, %v3327
    %v3404 = vpack.c.b16 %v3332, %v3328
    %v3405 = vpack.c.b16 %v3333, %v3329
    %v3406 = vpack.c.b16 %v3334, %v3330
    %v3407 = vpack.c.b16 %v3339, %v3335
    %v3408 = vpack.c.b16 %v3340, %v3336
    %v3409 = vpack.c.b16 %v3341, %v3337
    %v3410 = vpack.c.b16 %v3342, %v3338
    %v3411 = vpack.c.b16 %v3347, %v3343
    %v3412 = vpack.c.b16 %v3348, %v3344
    %v3413 = vpack.c.b16 %v3349, %v3345
    %v3414 = vpack.c.b16 %v3350, %v3346
    %3479 = vmatprep.subr.bf16.mxu0 %v3352
    %3480 = vmatpush1.bf16.msra.mxu0 %v3351
    %3481 = vmatprep.subr.bf16.mxu0 %v3356
    %3482 = vmatpush1.bf16.msra.mxu0 %v3355
    %3483 = vmatprep.subr.bf16.mxu0 %v3360
    %3484 = vmatpush1.bf16.msra.mxu0 %v3359
    %3485 = vmatprep.subr.bf16.mxu0 %v3364
    %3486 = vmatpush1.bf16.msra.mxu0 %v3363
    %3487 = vmatprep.subr.bf16.mxu0 %v3368
    %3488 = vmatpush1.bf16.msra.mxu0 %v3367
    %3489 = vmatprep.subr.bf16.mxu0 %v3372
    %3490 = vmatpush1.bf16.msra.mxu0 %v3371
    %3491 = vmatprep.subr.bf16.mxu0 %v3376
    %3492 = vmatpush1.bf16.msra.mxu0 %v3375
    %3493 = vmatprep.subr.bf16.mxu0 %v3380
    %3494 = vmatpush1.bf16.msra.mxu0 %v3379
    %3495 = vmatprep.subr.bf16.mxu0 %v3384
    %3496 = vmatpush1.bf16.msra.mxu0 %v3383
    %3497 = vmatprep.subr.bf16.mxu0 %v3388
    %3498 = vmatpush1.bf16.msra.mxu0 %v3387
    %3499 = vmatprep.subr.bf16.mxu0 %v3392
    %3500 = vmatpush1.bf16.msra.mxu0 %v3391
    %3501 = vmatprep.subr.bf16.mxu0 %v3396
    %3502 = vmatpush1.bf16.msra.mxu0 %v3395
    %3503 = vmatprep.subr.bf16.mxu0 %v3400
    %3504 = vmatpush1.bf16.msra.mxu0 %v3399
    %3505 = vmatprep.subr.bf16.mxu0 %v3404
    %3506 = vmatpush1.bf16.msra.mxu0 %v3403
    %3507 = vmatprep.subr.bf16.mxu0 %v3408
    %3508 = vmatpush1.bf16.msra.mxu0 %v3407
    %3509 = vmatprep.subr.bf16.mxu0 %v3412
    %3510 = vmatpush1.bf16.msra.mxu0 %v3411
    %3511 = vmatprep.mubr.bf16.mxu0 %v3072
    %3512 = vmatmul.mubr.bf16.gmra.mrb[0].mxu0 %v3071
    %v3513 = vpop.f32.mrb[0].mxu0
    %v3514 = vadd.f32 %v3142, %v3513
    %v3515 = vpop.f32.mrb[0].mxu0
    %v3516 = vadd.f32 %v3146, %v3515
    %v3517 = vpop.f32.mrb[0].mxu0
    %v3518 = vpop.f32.mrb[0].mxu0
    %3519 = vdwg.mxu0
    %3520 = vmatprep.subr.bf16.mxu0 %v3354
    %3521 = vmatpush1.bf16.msra.mxu0 %v3353
    %3522 = vmatprep.subr.bf16.mxu0 %v3358
    %3523 = vmatpush1.bf16.msra.mxu0 %v3357
    %3524 = vmatprep.subr.bf16.mxu0 %v3362
    %3525 = vmatpush1.bf16.msra.mxu0 %v3361
    %3526 = vmatprep.subr.bf16.mxu0 %v3366
    %3527 = vmatpush1.bf16.msra.mxu0 %v3365
    %3528 = vmatprep.subr.bf16.mxu0 %v3370
    %3529 = vmatpush1.bf16.msra.mxu0 %v3369
    %3530 = vmatprep.subr.bf16.mxu0 %v3374
    %3531 = vmatpush1.bf16.msra.mxu0 %v3373
    %3532 = vmatprep.subr.bf16.mxu0 %v3378
    %3533 = vmatpush1.bf16.msra.mxu0 %v3377
    %3534 = vmatprep.subr.bf16.mxu0 %v3382
    %3535 = vmatpush1.bf16.msra.mxu0 %v3381
    %3536 = vmatprep.subr.bf16.mxu0 %v3386
    %3537 = vmatpush1.bf16.msra.mxu0 %v3385
    %3538 = vmatprep.subr.bf16.mxu0 %v3390
    %3539 = vmatpush1.bf16.msra.mxu0 %v3389
    %3540 = vmatprep.subr.bf16.mxu0 %v3394
    %3541 = vmatpush1.bf16.msra.mxu0 %v3393
    %3542 = vmatprep.subr.bf16.mxu0 %v3398
    %3543 = vmatpush1.bf16.msra.mxu0 %v3397
    %3544 = vmatprep.subr.bf16.mxu0 %v3402
    %3545 = vmatpush1.bf16.msra.mxu0 %v3401
    %3546 = vmatprep.subr.bf16.mxu0 %v3406
    %3547 = vmatpush1.bf16.msra.mxu0 %v3405
    %3548 = vmatprep.subr.bf16.mxu0 %v3410
    %3549 = vmatpush1.bf16.msra.mxu0 %v3409
    %3550 = vmatprep.subr.bf16.mxu0 %v3414
    %3551 = vmatpush1.bf16.msra.mxu0 %v3413
    %3552 = vmatprep.mubr.bf16.mxu0 %v3072
    %3553 = vmatmul.mubr.bf16.gmra.mrb[0].mxu0 %v3071
    %v3554 = vpop.f32.mrb[0].mxu0
    %v3555 = vadd.f32 %v3150, %v3554
    %v3556 = vpop.f32.mrb[0].mxu0
    %v3557 = vadd.f32 %v3154, %v3556
    %v3558 = vpop.f32.mrb[0].mxu0
    %v3559 = vpop.f32.mrb[0].mxu0
    %3560 = vdwg.mxu0
    %v3561 = vmax.f32 %v3514, 0.0
    %v3562 = vmax.f32 %v3516, 0.0
    %v3563 = vmax.f32 %v3555, 0.0
    %v3564 = vmax.f32 %v3557, 0.0
    %v3565 = vpack.c.bf16 %v3561, %v3561
    %v3566 = vpack.c.bf16 %v3562, %v3562
    %v3567 = vpack.c.bf16 %v3563, %v3563
    %v3568 = vpack.c.bf16 %v3564, %v3564
    %v3569 = vld [vmem:[#allocation7] sm:$0xff]
    %v3570 = vld [vmem:[#allocation7 + $0x8] sm:$0xff]
    %v3571 = vld [vmem:[#allocation7 + $0x10] sm:$0xff]
    %v3572 = vld [vmem:[#allocation7 + $0x18] sm:$0xff]
    %v3573 = vld [vmem:[#allocation7 + $0x20] sm:$0xff]
    %v3574 = vld [vmem:[#allocation7 + $0x28] sm:$0xff]
    %v3575 = vld [vmem:[#allocation7 + $0x30] sm:$0xff]
    %v3576 = vld [vmem:[#allocation7 + $0x38] sm:$0xff]
    %v3577 = vld [vmem:[#allocation7 + $0x40] sm:$0xff]
    %v3578 = vld [vmem:[#allocation7 + $0x48] sm:$0xff]
    %v3579 = vld [vmem:[#allocation7 + $0x50] sm:$0xff]
    %v3580 = vld [vmem:[#allocation7 + $0x58] sm:$0xff]
    %v3581 = vld [vmem:[#allocation7 + $0x60] sm:$0xff]
    %v3582 = vld [vmem:[#allocation7 + $0x68] sm:$0xff]
    %v3583 = vld [vmem:[#allocation7 + $0x70] sm:$0xff]
    %v3584 = vld [vmem:[#allocation7 + $0x78] sm:$0xff]
    %v3585 = vld [vmem:[#allocation7 + $0x80] sm:$0xff]
    %v3586 = vld [vmem:[#allocation7 + $0x88] sm:$0xff]
    %v3587 = vld [vmem:[#allocation7 + $0x90] sm:$0xff]
    %v3588 = vld [vmem:[#allocation7 + $0x98] sm:$0xff]
    %v3589 = vld [vmem:[#allocation7 + $0xa0] sm:$0xff]
    %v3590 = vld [vmem:[#allocation7 + $0xa8] sm:$0xff]
    %v3591 = vld [vmem:[#allocation7 + $0xb0] sm:$0xff]
    %v3592 = vld [vmem:[#allocation7 + $0xb8] sm:$0xff]
    %v3593 = vld [vmem:[#allocation7 + $0xc0] sm:$0xff]
    %v3594 = vld [vmem:[#allocation7 + $0xc8] sm:$0xff]
    %v3595 = vld [vmem:[#allocation7 + $0xd0] sm:$0xff]
    %v3596 = vld [vmem:[#allocation7 + $0xd8] sm:$0xff]
    %v3597 = vld [vmem:[#allocation7 + $0xe0] sm:$0xff]
    %v3598 = vld [vmem:[#allocation7 + $0xe8] sm:$0xff]
    %v3599 = vld [vmem:[#allocation7 + $0xf0] sm:$0xff]
    %v3600 = vld [vmem:[#allocation7 + $0xf8] sm:$0xff]
    %v3601 = vld [vmem:[#allocation7 + $0x100] sm:$0xff]
    %v3602 = vld [vmem:[#allocation7 + $0x108] sm:$0xff]
    %v3603 = vld [vmem:[#allocation7 + $0x110] sm:$0xff]
    %v3604 = vld [vmem:[#allocation7 + $0x118] sm:$0xff]
    %v3605 = vld [vmem:[#allocation7 + $0x120] sm:$0xff]
    %v3606 = vld [vmem:[#allocation7 + $0x128] sm:$0xff]
    %v3607 = vld [vmem:[#allocation7 + $0x130] sm:$0xff]
    %v3608 = vld [vmem:[#allocation7 + $0x138] sm:$0xff]
    %v3609 = vld [vmem:[#allocation7 + $0x140] sm:$0xff]
    %v3610 = vld [vmem:[#allocation7 + $0x148] sm:$0xff]
    %v3611 = vld [vmem:[#allocation7 + $0x150] sm:$0xff]
    %v3612 = vld [vmem:[#allocation7 + $0x158] sm:$0xff]
    %v3613 = vld [vmem:[#allocation7 + $0x160] sm:$0xff]
    %v3614 = vld [vmem:[#allocation7 + $0x168] sm:$0xff]
    %v3615 = vld [vmem:[#allocation7 + $0x170] sm:$0xff]
    %v3616 = vld [vmem:[#allocation7 + $0x178] sm:$0xff]
    %v3617 = vld [vmem:[#allocation7 + $0x180] sm:$0xff]
    %v3618 = vld [vmem:[#allocation7 + $0x188] sm:$0xff]
    %v3619 = vld [vmem:[#allocation7 + $0x190] sm:$0xff]
    %v3620 = vld [vmem:[#allocation7 + $0x198] sm:$0xff]
    %v3621 = vld [vmem:[#allocation7 + $0x1a0] sm:$0xff]
    %v3622 = vld [vmem:[#allocation7 + $0x1a8] sm:$0xff]
    %v3623 = vld [vmem:[#allocation7 + $0x1b0] sm:$0xff]
    %v3624 = vld [vmem:[#allocation7 + $0x1b8] sm:$0xff]
    %v3625 = vld [vmem:[#allocation7 + $0x1c0] sm:$0xff]
    %v3626 = vld [vmem:[#allocation7 + $0x1c8] sm:$0xff]
    %v3627 = vld [vmem:[#allocation7 + $0x1d0] sm:$0xff]
    %v3628 = vld [vmem:[#allocation7 + $0x1d8] sm:$0xff]
    %v3629 = vld [vmem:[#allocation7 + $0x1e0] sm:$0xff]
    %v3630 = vld [vmem:[#allocation7 + $0x1e8] sm:$0xff]
    %v3631 = vld [vmem:[#allocation7 + $0x1f0] sm:$0xff]
    %v3632 = vld [vmem:[#allocation7 + $0x1f8] sm:$0xff]
    %v3633 = vld [vmem:[#allocation7 + $0x200] sm:$0xff]
    %v3634 = vld [vmem:[#allocation7 + $0x208] sm:$0xff]
    %v3635 = vld [vmem:[#allocation7 + $0x210] sm:$0xff]
    %v3636 = vld [vmem:[#allocation7 + $0x218] sm:$0xff]
    %v3637 = vld [vmem:[#allocation7 + $0x220] sm:$0xff]
    %v3638 = vld [vmem:[#allocation7 + $0x228] sm:$0xff]
    %v3639 = vld [vmem:[#allocation7 + $0x230] sm:$0xff]
    %v3640 = vld [vmem:[#allocation7 + $0x238] sm:$0xff]
    %v3641 = vld [vmem:[#allocation7 + $0x240] sm:$0xff]
    %v3642 = vld [vmem:[#allocation7 + $0x248] sm:$0xff]
    %v3643 = vld [vmem:[#allocation7 + $0x250] sm:$0xff]
    %v3644 = vld [vmem:[#allocation7 + $0x258] sm:$0xff]
    %v3645 = vld [vmem:[#allocation7 + $0x260] sm:$0xff]
    %v3646 = vld [vmem:[#allocation7 + $0x268] sm:$0xff]
    %v3647 = vld [vmem:[#allocation7 + $0x270] sm:$0xff]
    %v3648 = vld [vmem:[#allocation7 + $0x278] sm:$0xff]
    %v3649 = vld [vmem:[#allocation7 + $0x280] sm:$0xff]
    %v3650 = vld [vmem:[#allocation7 + $0x288] sm:$0xff]
    %v3651 = vld [vmem:[#allocation7 + $0x290] sm:$0xff]
    %v3652 = vld [vmem:[#allocation7 + $0x298] sm:$0xff]
    %v3653 = vld [vmem:[#allocation7 + $0x2a0] sm:$0xff]
    %v3654 = vld [vmem:[#allocation7 + $0x2a8] sm:$0xff]
    %v3655 = vld [vmem:[#allocation7 + $0x2b0] sm:$0xff]
    %v3656 = vld [vmem:[#allocation7 + $0x2b8] sm:$0xff]
    %v3657 = vld [vmem:[#allocation7 + $0x2c0] sm:$0xff]
    %v3658 = vld [vmem:[#allocation7 + $0x2c8] sm:$0xff]
    %v3659 = vld [vmem:[#allocation7 + $0x2d0] sm:$0xff]
    %v3660 = vld [vmem:[#allocation7 + $0x2d8] sm:$0xff]
    %v3661 = vld [vmem:[#allocation7 + $0x2e0] sm:$0xff]
    %v3662 = vld [vmem:[#allocation7 + $0x2e8] sm:$0xff]
    %v3663 = vld [vmem:[#allocation7 + $0x2f0] sm:$0xff]
    %v3664 = vld [vmem:[#allocation7 + $0x2f8] sm:$0xff]
    %v3665 = vld [vmem:[#allocation7 + $0x300] sm:$0xff]
    %v3666 = vld [vmem:[#allocation7 + $0x308] sm:$0xff]
    %v3667 = vld [vmem:[#allocation7 + $0x310] sm:$0xff]
    %v3668 = vld [vmem:[#allocation7 + $0x318] sm:$0xff]
    %v3669 = vld [vmem:[#allocation7 + $0x320] sm:$0xff]
    %v3670 = vld [vmem:[#allocation7 + $0x328] sm:$0xff]
    %v3671 = vld [vmem:[#allocation7 + $0x330] sm:$0xff]
    %v3672 = vld [vmem:[#allocation7 + $0x338] sm:$0xff]
    %v3673 = vld [vmem:[#allocation7 + $0x340] sm:$0xff]
    %v3674 = vld [vmem:[#allocation7 + $0x348] sm:$0xff]
    %v3675 = vld [vmem:[#allocation7 + $0x350] sm:$0xff]
    %v3676 = vld [vmem:[#allocation7 + $0x358] sm:$0xff]
    %v3677 = vld [vmem:[#allocation7 + $0x360] sm:$0xff]
    %v3678 = vld [vmem:[#allocation7 + $0x368] sm:$0xff]
    %v3679 = vld [vmem:[#allocation7 + $0x370] sm:$0xff]
    %v3680 = vld [vmem:[#allocation7 + $0x378] sm:$0xff]
    %v3681 = vld [vmem:[#allocation7 + $0x380] sm:$0xff]
    %v3682 = vld [vmem:[#allocation7 + $0x388] sm:$0xff]
    %v3683 = vld [vmem:[#allocation7 + $0x390] sm:$0xff]
    %v3684 = vld [vmem:[#allocation7 + $0x398] sm:$0xff]
    %v3685 = vld [vmem:[#allocation7 + $0x3a0] sm:$0xff]
    %v3686 = vld [vmem:[#allocation7 + $0x3a8] sm:$0xff]
    %v3687 = vld [vmem:[#allocation7 + $0x3b0] sm:$0xff]
    %v3688 = vld [vmem:[#allocation7 + $0x3b8] sm:$0xff]
    %v3689 = vld [vmem:[#allocation7 + $0x3c0] sm:$0xff]
    %v3690 = vld [vmem:[#allocation7 + $0x3c8] sm:$0xff]
    %v3691 = vld [vmem:[#allocation7 + $0x3d0] sm:$0xff]
    %v3692 = vld [vmem:[#allocation7 + $0x3d8] sm:$0xff]
    %v3693 = vld [vmem:[#allocation7 + $0x3e0] sm:$0xff]
    %v3694 = vld [vmem:[#allocation7 + $0x3e8] sm:$0xff]
    %v3695 = vld [vmem:[#allocation7 + $0x3f0] sm:$0xff]
    %v3696 = vld [vmem:[#allocation7 + $0x3f8] sm:$0xff]
    %v3697 = vld [vmem:[#allocation7 + $0x400] sm:$0xff]
    %v3698 = vld [vmem:[#allocation7 + $0x408] sm:$0xff]
    %v3699 = vld [vmem:[#allocation7 + $0x410] sm:$0xff]
    %v3700 = vld [vmem:[#allocation7 + $0x418] sm:$0xff]
    %v3701 = vld [vmem:[#allocation7 + $0x420] sm:$0xff]
    %v3702 = vld [vmem:[#allocation7 + $0x428] sm:$0xff]
    %v3703 = vld [vmem:[#allocation7 + $0x430] sm:$0xff]
    %v3704 = vld [vmem:[#allocation7 + $0x438] sm:$0xff]
    %v3705 = vld [vmem:[#allocation7 + $0x440] sm:$0xff]
    %v3706 = vld [vmem:[#allocation7 + $0x448] sm:$0xff]
    %v3707 = vld [vmem:[#allocation7 + $0x450] sm:$0xff]
    %v3708 = vld [vmem:[#allocation7 + $0x458] sm:$0xff]
    %v3709 = vld [vmem:[#allocation7 + $0x460] sm:$0xff]
    %v3710 = vld [vmem:[#allocation7 + $0x468] sm:$0xff]
    %v3711 = vld [vmem:[#allocation7 + $0x470] sm:$0xff]
    %v3712 = vld [vmem:[#allocation7 + $0x478] sm:$0xff]
    %v3713 = vld [vmem:[#allocation7 + $0x480] sm:$0xff]
    %v3714 = vld [vmem:[#allocation7 + $0x488] sm:$0xff]
    %v3715 = vld [vmem:[#allocation7 + $0x490] sm:$0xff]
    %v3716 = vld [vmem:[#allocation7 + $0x498] sm:$0xff]
    %v3717 = vld [vmem:[#allocation7 + $0x4a0] sm:$0xff]
    %v3718 = vld [vmem:[#allocation7 + $0x4a8] sm:$0xff]
    %v3719 = vld [vmem:[#allocation7 + $0x4b0] sm:$0xff]
    %v3720 = vld [vmem:[#allocation7 + $0x4b8] sm:$0xff]
    %v3721 = vld [vmem:[#allocation7 + $0x4c0] sm:$0xff]
    %v3722 = vld [vmem:[#allocation7 + $0x4c8] sm:$0xff]
    %v3723 = vld [vmem:[#allocation7 + $0x4d0] sm:$0xff]
    %v3724 = vld [vmem:[#allocation7 + $0x4d8] sm:$0xff]
    %v3725 = vld [vmem:[#allocation7 + $0x4e0] sm:$0xff]
    %v3726 = vld [vmem:[#allocation7 + $0x4e8] sm:$0xff]
    %v3727 = vld [vmem:[#allocation7 + $0x4f0] sm:$0xff]
    %v3728 = vld [vmem:[#allocation7 + $0x4f8] sm:$0xff]
    %v3729 = vld [vmem:[#allocation7 + $0x500] sm:$0xff]
    %v3730 = vld [vmem:[#allocation7 + $0x508] sm:$0xff]
    %v3731 = vld [vmem:[#allocation7 + $0x510] sm:$0xff]
    %v3732 = vld [vmem:[#allocation7 + $0x518] sm:$0xff]
    %v3733 = vld [vmem:[#allocation7 + $0x520] sm:$0xff]
    %v3734 = vld [vmem:[#allocation7 + $0x528] sm:$0xff]
    %v3735 = vld [vmem:[#allocation7 + $0x530] sm:$0xff]
    %v3736 = vld [vmem:[#allocation7 + $0x538] sm:$0xff]
    %v3737 = vld [vmem:[#allocation7 + $0x540] sm:$0xff]
    %v3738 = vld [vmem:[#allocation7 + $0x548] sm:$0xff]
    %v3739 = vld [vmem:[#allocation7 + $0x550] sm:$0xff]
    %v3740 = vld [vmem:[#allocation7 + $0x558] sm:$0xff]
    %v3741 = vld [vmem:[#allocation7 + $0x560] sm:$0xff]
    %v3742 = vld [vmem:[#allocation7 + $0x568] sm:$0xff]
    %v3743 = vld [vmem:[#allocation7 + $0x570] sm:$0xff]
    %v3744 = vld [vmem:[#allocation7 + $0x578] sm:$0xff]
    %v3745 = vld [vmem:[#allocation7 + $0x580] sm:$0xff]
    %v3746 = vld [vmem:[#allocation7 + $0x588] sm:$0xff]
    %v3747 = vld [vmem:[#allocation7 + $0x590] sm:$0xff]
    %v3748 = vld [vmem:[#allocation7 + $0x598] sm:$0xff]
    %v3749 = vld [vmem:[#allocation7 + $0x5a0] sm:$0xff]
    %v3750 = vld [vmem:[#allocation7 + $0x5a8] sm:$0xff]
    %v3751 = vld [vmem:[#allocation7 + $0x5b0] sm:$0xff]
    %v3752 = vld [vmem:[#allocation7 + $0x5b8] sm:$0xff]
    %v3753 = vld [vmem:[#allocation7 + $0x5c0] sm:$0xff]
    %v3754 = vld [vmem:[#allocation7 + $0x5c8] sm:$0xff]
    %v3755 = vld [vmem:[#allocation7 + $0x5d0] sm:$0xff]
    %v3756 = vld [vmem:[#allocation7 + $0x5d8] sm:$0xff]
    %v3757 = vld [vmem:[#allocation7 + $0x5e0] sm:$0xff]
    %v3758 = vld [vmem:[#allocation7 + $0x5e8] sm:$0xff]
    %v3759 = vld [vmem:[#allocation7 + $0x5f0] sm:$0xff]
    %v3760 = vld [vmem:[#allocation7 + $0x5f8] sm:$0xff]
    %v3761 = vld [vmem:[#allocation7 + $0x600] sm:$0xff]
    %v3762 = vld [vmem:[#allocation7 + $0x608] sm:$0xff]
    %v3763 = vld [vmem:[#allocation7 + $0x610] sm:$0xff]
    %v3764 = vld [vmem:[#allocation7 + $0x618] sm:$0xff]
    %v3765 = vld [vmem:[#allocation7 + $0x620] sm:$0xff]
    %v3766 = vld [vmem:[#allocation7 + $0x628] sm:$0xff]
    %v3767 = vld [vmem:[#allocation7 + $0x630] sm:$0xff]
    %v3768 = vld [vmem:[#allocation7 + $0x638] sm:$0xff]
    %v3769 = vld [vmem:[#allocation7 + $0x640] sm:$0xff]
    %v3770 = vld [vmem:[#allocation7 + $0x648] sm:$0xff]
    %v3771 = vld [vmem:[#allocation7 + $0x650] sm:$0xff]
    %v3772 = vld [vmem:[#allocation7 + $0x658] sm:$0xff]
    %v3773 = vld [vmem:[#allocation7 + $0x660] sm:$0xff]
    %v3774 = vld [vmem:[#allocation7 + $0x668] sm:$0xff]
    %v3775 = vld [vmem:[#allocation7 + $0x670] sm:$0xff]
    %v3776 = vld [vmem:[#allocation7 + $0x678] sm:$0xff]
    %v3777 = vld [vmem:[#allocation7 + $0x680] sm:$0xff]
    %v3778 = vld [vmem:[#allocation7 + $0x688] sm:$0xff]
    %v3779 = vld [vmem:[#allocation7 + $0x690] sm:$0xff]
    %v3780 = vld [vmem:[#allocation7 + $0x698] sm:$0xff]
    %v3781 = vld [vmem:[#allocation7 + $0x6a0] sm:$0xff]
    %v3782 = vld [vmem:[#allocation7 + $0x6a8] sm:$0xff]
    %v3783 = vld [vmem:[#allocation7 + $0x6b0] sm:$0xff]
    %v3784 = vld [vmem:[#allocation7 + $0x6b8] sm:$0xff]
    %v3785 = vld [vmem:[#allocation7 + $0x6c0] sm:$0xff]
    %v3786 = vld [vmem:[#allocation7 + $0x6c8] sm:$0xff]
    %v3787 = vld [vmem:[#allocation7 + $0x6d0] sm:$0xff]
    %v3788 = vld [vmem:[#allocation7 + $0x6d8] sm:$0xff]
    %v3789 = vld [vmem:[#allocation7 + $0x6e0] sm:$0xff]
    %v3790 = vld [vmem:[#allocation7 + $0x6e8] sm:$0xff]
    %v3791 = vld [vmem:[#allocation7 + $0x6f0] sm:$0xff]
    %v3792 = vld [vmem:[#allocation7 + $0x6f8] sm:$0xff]
    %v3793 = vld [vmem:[#allocation7 + $0x700] sm:$0xff]
    %v3794 = vld [vmem:[#allocation7 + $0x708] sm:$0xff]
    %v3795 = vld [vmem:[#allocation7 + $0x710] sm:$0xff]
    %v3796 = vld [vmem:[#allocation7 + $0x718] sm:$0xff]
    %v3797 = vld [vmem:[#allocation7 + $0x720] sm:$0xff]
    %v3798 = vld [vmem:[#allocation7 + $0x728] sm:$0xff]
    %v3799 = vld [vmem:[#allocation7 + $0x730] sm:$0xff]
    %v3800 = vld [vmem:[#allocation7 + $0x738] sm:$0xff]
    %v3801 = vld [vmem:[#allocation7 + $0x740] sm:$0xff]
    %v3802 = vld [vmem:[#allocation7 + $0x748] sm:$0xff]
    %v3803 = vld [vmem:[#allocation7 + $0x750] sm:$0xff]
    %v3804 = vld [vmem:[#allocation7 + $0x758] sm:$0xff]
    %v3805 = vld [vmem:[#allocation7 + $0x760] sm:$0xff]
    %v3806 = vld [vmem:[#allocation7 + $0x768] sm:$0xff]
    %v3807 = vld [vmem:[#allocation7 + $0x770] sm:$0xff]
    %v3808 = vld [vmem:[#allocation7 + $0x778] sm:$0xff]
    %v3809 = vld [vmem:[#allocation7 + $0x780] sm:$0xff]
    %v3810 = vld [vmem:[#allocation7 + $0x788] sm:$0xff]
    %v3811 = vld [vmem:[#allocation7 + $0x790] sm:$0xff]
    %v3812 = vld [vmem:[#allocation7 + $0x798] sm:$0xff]
    %v3813 = vld [vmem:[#allocation7 + $0x7a0] sm:$0xff]
    %v3814 = vld [vmem:[#allocation7 + $0x7a8] sm:$0xff]
    %v3815 = vld [vmem:[#allocation7 + $0x7b0] sm:$0xff]
    %v3816 = vld [vmem:[#allocation7 + $0x7b8] sm:$0xff]
    %v3817 = vld [vmem:[#allocation7 + $0x7c0] sm:$0xff]
    %v3818 = vld [vmem:[#allocation7 + $0x7c8] sm:$0xff]
    %v3819 = vld [vmem:[#allocation7 + $0x7d0] sm:$0xff]
    %v3820 = vld [vmem:[#allocation7 + $0x7d8] sm:$0xff]
    %v3821 = vld [vmem:[#allocation7 + $0x7e0] sm:$0xff]
    %v3822 = vld [vmem:[#allocation7 + $0x7e8] sm:$0xff]
    %v3823 = vld [vmem:[#allocation7 + $0x7f0] sm:$0xff]
    %v3824 = vld [vmem:[#allocation7 + $0x7f8] sm:$0xff]
    %v3825 = vld [vmem:[%s17] sm:$0xff]
    %v3827 = vlaneseq
    %v3828 = vshrl.u32 %v3827, 7
    %v3829 = vsub.s32 0, %v3828
    %v3830 = vrot.slane %v3825, %v3829
    %v3831 = vlaneseq
    %v3832 = vshrl.u32 %v3831, 7
    %v3833 = vsub.s32 1, %v3832
    %v3834 = vrot.slane %v3825, %v3833
    %v3835 = vlaneseq
    %v3836 = vshrl.u32 %v3835, 7
    %v3837 = vsub.s32 2, %v3836
    %v3838 = vrot.slane %v3825, %v3837
    %v3839 = vlaneseq
    %v3840 = vshrl.u32 %v3839, 7
    %v3841 = vsub.s32 3, %v3840
    %v3842 = vrot.slane %v3825, %v3841
    %v3843 = vlaneseq
    %v3844 = vshrl.u32 %v3843, 7
    %v3845 = vsub.s32 4, %v3844
    %v3846 = vrot.slane %v3825, %v3845
    %v3847 = vlaneseq
    %v3848 = vshrl.u32 %v3847, 7
    %v3849 = vsub.s32 5, %v3848
    %v3850 = vrot.slane %v3825, %v3849
    %v3851 = vlaneseq
    %v3852 = vshrl.u32 %v3851, 7
    %v3853 = vsub.s32 6, %v3852
    %v3854 = vrot.slane %v3825, %v3853
    %v3855 = vlaneseq
    %v3856 = vshrl.u32 %v3855, 7
    %v3857 = vsub.s32 7, %v3856
    %v3858 = vrot.slane %v3825, %v3857
    %v4123 = vunpack.c.l.b16 %v3569
    %v4124 = vunpack.c.h.b16 %v3569
    %v4125 = vunpack.c.l.b16 %v3570
    %v4126 = vunpack.c.h.b16 %v3570
    %v4127 = vunpack.c.l.b16 %v3571
    %v4128 = vunpack.c.h.b16 %v3571
    %v4129 = vunpack.c.l.b16 %v3572
    %v4130 = vunpack.c.h.b16 %v3572
    %v4131 = vunpack.c.l.b16 %v3573
    %v4132 = vunpack.c.h.b16 %v3573
    %v4133 = vunpack.c.l.b16 %v3574
    %v4134 = vunpack.c.h.b16 %v3574
    %v4135 = vunpack.c.l.b16 %v3575
    %v4136 = vunpack.c.h.b16 %v3575
    %v4137 = vunpack.c.l.b16 %v3576
    %v4138 = vunpack.c.h.b16 %v3576
    %v4139 = vunpack.c.l.b16 %v3577
    %v4140 = vunpack.c.h.b16 %v3577
    %v4141 = vunpack.c.l.b16 %v3578
    %v4142 = vunpack.c.h.b16 %v3578
    %v4143 = vunpack.c.l.b16 %v3579
    %v4144 = vunpack.c.h.b16 %v3579
    %v4145 = vunpack.c.l.b16 %v3580
    %v4146 = vunpack.c.h.b16 %v3580
    %v4147 = vunpack.c.l.b16 %v3581
    %v4148 = vunpack.c.h.b16 %v3581
    %v4149 = vunpack.c.l.b16 %v3582
    %v4150 = vunpack.c.h.b16 %v3582
    %v4151 = vunpack.c.l.b16 %v3583
    %v4152 = vunpack.c.h.b16 %v3583
    %v4153 = vunpack.c.l.b16 %v3584
    %v4154 = vunpack.c.h.b16 %v3584
    %v4155 = vunpack.c.l.b16 %v3585
    %v4156 = vunpack.c.h.b16 %v3585
    %v4157 = vunpack.c.l.b16 %v3586
    %v4158 = vunpack.c.h.b16 %v3586
    %v4159 = vunpack.c.l.b16 %v3587
    %v4160 = vunpack.c.h.b16 %v3587
    %v4161 = vunpack.c.l.b16 %v3588
    %v4162 = vunpack.c.h.b16 %v3588
    %v4163 = vunpack.c.l.b16 %v3589
    %v4164 = vunpack.c.h.b16 %v3589
    %v4165 = vunpack.c.l.b16 %v3590
    %v4166 = vunpack.c.h.b16 %v3590
    %v4167 = vunpack.c.l.b16 %v3591
    %v4168 = vunpack.c.h.b16 %v3591
    %v4169 = vunpack.c.l.b16 %v3592
    %v4170 = vunpack.c.h.b16 %v3592
    %v4171 = vunpack.c.l.b16 %v3593
    %v4172 = vunpack.c.h.b16 %v3593
    %v4173 = vunpack.c.l.b16 %v3594
    %v4174 = vunpack.c.h.b16 %v3594
    %v4175 = vunpack.c.l.b16 %v3595
    %v4176 = vunpack.c.h.b16 %v3595
    %v4177 = vunpack.c.l.b16 %v3596
    %v4178 = vunpack.c.h.b16 %v3596
    %v4179 = vunpack.c.l.b16 %v3597
    %v4180 = vunpack.c.h.b16 %v3597
    %v4181 = vunpack.c.l.b16 %v3598
    %v4182 = vunpack.c.h.b16 %v3598
    %v4183 = vunpack.c.l.b16 %v3599
    %v4184 = vunpack.c.h.b16 %v3599
    %v4185 = vunpack.c.l.b16 %v3600
    %v4186 = vunpack.c.h.b16 %v3600
    %v4187 = vunpack.c.l.b16 %v3601
    %v4188 = vunpack.c.h.b16 %v3601
    %v4189 = vunpack.c.l.b16 %v3602
    %v4190 = vunpack.c.h.b16 %v3602
    %v4191 = vunpack.c.l.b16 %v3603
    %v4192 = vunpack.c.h.b16 %v3603
    %v4193 = vunpack.c.l.b16 %v3604
    %v4194 = vunpack.c.h.b16 %v3604
    %v4195 = vunpack.c.l.b16 %v3605
    %v4196 = vunpack.c.h.b16 %v3605
    %v4197 = vunpack.c.l.b16 %v3606
    %v4198 = vunpack.c.h.b16 %v3606
    %v4199 = vunpack.c.l.b16 %v3607
    %v4200 = vunpack.c.h.b16 %v3607
    %v4201 = vunpack.c.l.b16 %v3608
    %v4202 = vunpack.c.h.b16 %v3608
    %v4203 = vunpack.c.l.b16 %v3609
    %v4204 = vunpack.c.h.b16 %v3609
    %v4205 = vunpack.c.l.b16 %v3610
    %v4206 = vunpack.c.h.b16 %v3610
    %v4207 = vunpack.c.l.b16 %v3611
    %v4208 = vunpack.c.h.b16 %v3611
    %v4209 = vunpack.c.l.b16 %v3612
    %v4210 = vunpack.c.h.b16 %v3612
    %v4211 = vunpack.c.l.b16 %v3613
    %v4212 = vunpack.c.h.b16 %v3613
    %v4213 = vunpack.c.l.b16 %v3614
    %v4214 = vunpack.c.h.b16 %v3614
    %v4215 = vunpack.c.l.b16 %v3615
    %v4216 = vunpack.c.h.b16 %v3615
    %v4217 = vunpack.c.l.b16 %v3616
    %v4218 = vunpack.c.h.b16 %v3616
    %v4219 = vunpack.c.l.b16 %v3617
    %v4220 = vunpack.c.h.b16 %v3617
    %v4221 = vunpack.c.l.b16 %v3618
    %v4222 = vunpack.c.h.b16 %v3618
    %v4223 = vunpack.c.l.b16 %v3619
    %v4224 = vunpack.c.h.b16 %v3619
    %v4225 = vunpack.c.l.b16 %v3620
    %v4226 = vunpack.c.h.b16 %v3620
    %v4227 = vunpack.c.l.b16 %v3621
    %v4228 = vunpack.c.h.b16 %v3621
    %v4229 = vunpack.c.l.b16 %v3622
    %v4230 = vunpack.c.h.b16 %v3622
    %v4231 = vunpack.c.l.b16 %v3623
    %v4232 = vunpack.c.h.b16 %v3623
    %v4233 = vunpack.c.l.b16 %v3624
    %v4234 = vunpack.c.h.b16 %v3624
    %v4235 = vunpack.c.l.b16 %v3625
    %v4236 = vunpack.c.h.b16 %v3625
    %v4237 = vunpack.c.l.b16 %v3626
    %v4238 = vunpack.c.h.b16 %v3626
    %v4239 = vunpack.c.l.b16 %v3627
    %v4240 = vunpack.c.h.b16 %v3627
    %v4241 = vunpack.c.l.b16 %v3628
    %v4242 = vunpack.c.h.b16 %v3628
    %v4243 = vunpack.c.l.b16 %v3629
    %v4244 = vunpack.c.h.b16 %v3629
    %v4245 = vunpack.c.l.b16 %v3630
    %v4246 = vunpack.c.h.b16 %v3630
    %v4247 = vunpack.c.l.b16 %v3631
    %v4248 = vunpack.c.h.b16 %v3631
    %v4249 = vunpack.c.l.b16 %v3632
    %v4250 = vunpack.c.h.b16 %v3632
    %v4251 = vunpack.c.l.b16 %v3633
    %v4252 = vunpack.c.h.b16 %v3633
    %v4253 = vunpack.c.l.b16 %v3634
    %v4254 = vunpack.c.h.b16 %v3634
    %v4255 = vunpack.c.l.b16 %v3635
    %v4256 = vunpack.c.h.b16 %v3635
    %v4257 = vunpack.c.l.b16 %v3636
    %v4258 = vunpack.c.h.b16 %v3636
    %v4259 = vunpack.c.l.b16 %v3637
    %v4260 = vunpack.c.h.b16 %v3637
    %v4261 = vunpack.c.l.b16 %v3638
    %v4262 = vunpack.c.h.b16 %v3638
    %v4263 = vunpack.c.l.b16 %v3639
    %v4264 = vunpack.c.h.b16 %v3639
    %v4265 = vunpack.c.l.b16 %v3640
    %v4266 = vunpack.c.h.b16 %v3640
    %v4267 = vunpack.c.l.b16 %v3641
    %v4268 = vunpack.c.h.b16 %v3641
    %v4269 = vunpack.c.l.b16 %v3642
    %v4270 = vunpack.c.h.b16 %v3642
    %v4271 = vunpack.c.l.b16 %v3643
    %v4272 = vunpack.c.h.b16 %v3643
    %v4273 = vunpack.c.l.b16 %v3644
    %v4274 = vunpack.c.h.b16 %v3644
    %v4275 = vunpack.c.l.b16 %v3645
    %v4276 = vunpack.c.h.b16 %v3645
    %v4277 = vunpack.c.l.b16 %v3646
    %v4278 = vunpack.c.h.b16 %v3646
    %v4279 = vunpack.c.l.b16 %v3647
    %v4280 = vunpack.c.h.b16 %v3647
    %v4281 = vunpack.c.l.b16 %v3648
    %v4282 = vunpack.c.h.b16 %v3648
    %v4283 = vunpack.c.l.b16 %v3649
    %v4284 = vunpack.c.h.b16 %v3649
    %v4285 = vunpack.c.l.b16 %v3650
    %v4286 = vunpack.c.h.b16 %v3650
    %v4287 = vunpack.c.l.b16 %v3651
    %v4288 = vunpack.c.h.b16 %v3651
    %v4289 = vunpack.c.l.b16 %v3652
    %v4290 = vunpack.c.h.b16 %v3652
    %v4291 = vunpack.c.l.b16 %v3653
    %v4292 = vunpack.c.h.b16 %v3653
    %v4293 = vunpack.c.l.b16 %v3654
    %v4294 = vunpack.c.h.b16 %v3654
    %v4295 = vunpack.c.l.b16 %v3655
    %v4296 = vunpack.c.h.b16 %v3655
    %v4297 = vunpack.c.l.b16 %v3656
    %v4298 = vunpack.c.h.b16 %v3656
    %v4299 = vunpack.c.l.b16 %v3657
    %v4300 = vunpack.c.h.b16 %v3657
    %v4301 = vunpack.c.l.b16 %v3658
    %v4302 = vunpack.c.h.b16 %v3658
    %v4303 = vunpack.c.l.b16 %v3659
    %v4304 = vunpack.c.h.b16 %v3659
    %v4305 = vunpack.c.l.b16 %v3660
    %v4306 = vunpack.c.h.b16 %v3660
    %v4307 = vunpack.c.l.b16 %v3661
    %v4308 = vunpack.c.h.b16 %v3661
    %v4309 = vunpack.c.l.b16 %v3662
    %v4310 = vunpack.c.h.b16 %v3662
    %v4311 = vunpack.c.l.b16 %v3663
    %v4312 = vunpack.c.h.b16 %v3663
    %v4313 = vunpack.c.l.b16 %v3664
    %v4314 = vunpack.c.h.b16 %v3664
    %v4315 = vunpack.c.l.b16 %v3665
    %v4316 = vunpack.c.h.b16 %v3665
    %v4317 = vunpack.c.l.b16 %v3666
    %v4318 = vunpack.c.h.b16 %v3666
    %v4319 = vunpack.c.l.b16 %v3667
    %v4320 = vunpack.c.h.b16 %v3667
    %v4321 = vunpack.c.l.b16 %v3668
    %v4322 = vunpack.c.h.b16 %v3668
    %v4323 = vunpack.c.l.b16 %v3669
    %v4324 = vunpack.c.h.b16 %v3669
    %v4325 = vunpack.c.l.b16 %v3670
    %v4326 = vunpack.c.h.b16 %v3670
    %v4327 = vunpack.c.l.b16 %v3671
    %v4328 = vunpack.c.h.b16 %v3671
    %v4329 = vunpack.c.l.b16 %v3672
    %v4330 = vunpack.c.h.b16 %v3672
    %v4331 = vunpack.c.l.b16 %v3673
    %v4332 = vunpack.c.h.b16 %v3673
    %v4333 = vunpack.c.l.b16 %v3674
    %v4334 = vunpack.c.h.b16 %v3674
    %v4335 = vunpack.c.l.b16 %v3675
    %v4336 = vunpack.c.h.b16 %v3675
    %v4337 = vunpack.c.l.b16 %v3676
    %v4338 = vunpack.c.h.b16 %v3676
    %v4339 = vunpack.c.l.b16 %v3677
    %v4340 = vunpack.c.h.b16 %v3677
    %v4341 = vunpack.c.l.b16 %v3678
    %v4342 = vunpack.c.h.b16 %v3678
    %v4343 = vunpack.c.l.b16 %v3679
    %v4344 = vunpack.c.h.b16 %v3679
    %v4345 = vunpack.c.l.b16 %v3680
    %v4346 = vunpack.c.h.b16 %v3680
    %v4347 = vunpack.c.l.b16 %v3681
    %v4348 = vunpack.c.h.b16 %v3681
    %v4349 = vunpack.c.l.b16 %v3682
    %v4350 = vunpack.c.h.b16 %v3682
    %v4351 = vunpack.c.l.b16 %v3683
    %v4352 = vunpack.c.h.b16 %v3683
    %v4353 = vunpack.c.l.b16 %v3684
    %v4354 = vunpack.c.h.b16 %v3684
    %v4355 = vunpack.c.l.b16 %v3685
    %v4356 = vunpack.c.h.b16 %v3685
    %v4357 = vunpack.c.l.b16 %v3686
    %v4358 = vunpack.c.h.b16 %v3686
    %v4359 = vunpack.c.l.b16 %v3687
    %v4360 = vunpack.c.h.b16 %v3687
    %v4361 = vunpack.c.l.b16 %v3688
    %v4362 = vunpack.c.h.b16 %v3688
    %v4363 = vunpack.c.l.b16 %v3689
    %v4364 = vunpack.c.h.b16 %v3689
    %v4365 = vunpack.c.l.b16 %v3690
    %v4366 = vunpack.c.h.b16 %v3690
    %v4367 = vunpack.c.l.b16 %v3691
    %v4368 = vunpack.c.h.b16 %v3691
    %v4369 = vunpack.c.l.b16 %v3692
    %v4370 = vunpack.c.h.b16 %v3692
    %v4371 = vunpack.c.l.b16 %v3693
    %v4372 = vunpack.c.h.b16 %v3693
    %v4373 = vunpack.c.l.b16 %v3694
    %v4374 = vunpack.c.h.b16 %v3694
    %v4375 = vunpack.c.l.b16 %v3695
    %v4376 = vunpack.c.h.b16 %v3695
    %v4377 = vunpack.c.l.b16 %v3696
    %v4378 = vunpack.c.h.b16 %v3696
    %v4379 = vunpack.c.l.b16 %v3697
    %v4380 = vunpack.c.h.b16 %v3697
    %v4381 = vunpack.c.l.b16 %v3698
    %v4382 = vunpack.c.h.b16 %v3698
    %v4383 = vunpack.c.l.b16 %v3699
    %v4384 = vunpack.c.h.b16 %v3699
    %v4385 = vunpack.c.l.b16 %v3700
    %v4386 = vunpack.c.h.b16 %v3700
    %v4387 = vunpack.c.l.b16 %v3701
    %v4388 = vunpack.c.h.b16 %v3701
    %v4389 = vunpack.c.l.b16 %v3702
    %v4390 = vunpack.c.h.b16 %v3702
    %v4391 = vunpack.c.l.b16 %v3703
    %v4392 = vunpack.c.h.b16 %v3703
    %v4393 = vunpack.c.l.b16 %v3704
    %v4394 = vunpack.c.h.b16 %v3704
    %v4395 = vunpack.c.l.b16 %v3705
    %v4396 = vunpack.c.h.b16 %v3705
    %v4397 = vunpack.c.l.b16 %v3706
    %v4398 = vunpack.c.h.b16 %v3706
    %v4399 = vunpack.c.l.b16 %v3707
    %v4400 = vunpack.c.h.b16 %v3707
    %v4401 = vunpack.c.l.b16 %v3708
    %v4402 = vunpack.c.h.b16 %v3708
    %v4403 = vunpack.c.l.b16 %v3709
    %v4404 = vunpack.c.h.b16 %v3709
    %v4405 = vunpack.c.l.b16 %v3710
    %v4406 = vunpack.c.h.b16 %v3710
    %v4407 = vunpack.c.l.b16 %v3711
    %v4408 = vunpack.c.h.b16 %v3711
    %v4409 = vunpack.c.l.b16 %v3712
    %v4410 = vunpack.c.h.b16 %v3712
    %v4411 = vunpack.c.l.b16 %v3713
    %v4412 = vunpack.c.h.b16 %v3713
    %v4413 = vunpack.c.l.b16 %v3714
    %v4414 = vunpack.c.h.b16 %v3714
    %v4415 = vunpack.c.l.b16 %v3715
    %v4416 = vunpack.c.h.b16 %v3715
    %v4417 = vunpack.c.l.b16 %v3716
    %v4418 = vunpack.c.h.b16 %v3716
    %v4419 = vunpack.c.l.b16 %v3717
    %v4420 = vunpack.c.h.b16 %v3717
    %v4421 = vunpack.c.l.b16 %v3718
    %v4422 = vunpack.c.h.b16 %v3718
    %v4423 = vunpack.c.l.b16 %v3719
    %v4424 = vunpack.c.h.b16 %v3719
    %v4425 = vunpack.c.l.b16 %v3720
    %v4426 = vunpack.c.h.b16 %v3720
    %v4427 = vunpack.c.l.b16 %v3721
    %v4428 = vunpack.c.h.b16 %v3721
    %v4429 = vunpack.c.l.b16 %v3722
    %v4430 = vunpack.c.h.b16 %v3722
    %v4431 = vunpack.c.l.b16 %v3723
    %v4432 = vunpack.c.h.b16 %v3723
    %v4433 = vunpack.c.l.b16 %v3724
    %v4434 = vunpack.c.h.b16 %v3724
    %v4435 = vunpack.c.l.b16 %v3725
    %v4436 = vunpack.c.h.b16 %v3725
    %v4437 = vunpack.c.l.b16 %v3726
    %v4438 = vunpack.c.h.b16 %v3726
    %v4439 = vunpack.c.l.b16 %v3727
    %v4440 = vunpack.c.h.b16 %v3727
    %v4441 = vunpack.c.l.b16 %v3728
    %v4442 = vunpack.c.h.b16 %v3728
    %v4443 = vunpack.c.l.b16 %v3729
    %v4444 = vunpack.c.h.b16 %v3729
    %v4445 = vunpack.c.l.b16 %v3730
    %v4446 = vunpack.c.h.b16 %v3730
    %v4447 = vunpack.c.l.b16 %v3731
    %v4448 = vunpack.c.h.b16 %v3731
    %v4449 = vunpack.c.l.b16 %v3732
    %v4450 = vunpack.c.h.b16 %v3732
    %v4451 = vunpack.c.l.b16 %v3733
    %v4452 = vunpack.c.h.b16 %v3733
    %v4453 = vunpack.c.l.b16 %v3734
    %v4454 = vunpack.c.h.b16 %v3734
    %v4455 = vunpack.c.l.b16 %v3735
    %v4456 = vunpack.c.h.b16 %v3735
    %v4457 = vunpack.c.l.b16 %v3736
    %v4458 = vunpack.c.h.b16 %v3736
    %v4459 = vunpack.c.l.b16 %v3737
    %v4460 = vunpack.c.h.b16 %v3737
    %v4461 = vunpack.c.l.b16 %v3738
    %v4462 = vunpack.c.h.b16 %v3738
    %v4463 = vunpack.c.l.b16 %v3739
    %v4464 = vunpack.c.h.b16 %v3739
    %v4465 = vunpack.c.l.b16 %v3740
    %v4466 = vunpack.c.h.b16 %v3740
    %v4467 = vunpack.c.l.b16 %v3741
    %v4468 = vunpack.c.h.b16 %v3741
    %v4469 = vunpack.c.l.b16 %v3742
    %v4470 = vunpack.c.h.b16 %v3742
    %v4471 = vunpack.c.l.b16 %v3743
    %v4472 = vunpack.c.h.b16 %v3743
    %v4473 = vunpack.c.l.b16 %v3744
    %v4474 = vunpack.c.h.b16 %v3744
    %v4475 = vunpack.c.l.b16 %v3745
    %v4476 = vunpack.c.h.b16 %v3745
    %v4477 = vunpack.c.l.b16 %v3746
    %v4478 = vunpack.c.h.b16 %v3746
    %v4479 = vunpack.c.l.b16 %v3747
    %v4480 = vunpack.c.h.b16 %v3747
    %v4481 = vunpack.c.l.b16 %v3748
    %v4482 = vunpack.c.h.b16 %v3748
    %v4483 = vunpack.c.l.b16 %v3749
    %v4484 = vunpack.c.h.b16 %v3749
    %v4485 = vunpack.c.l.b16 %v3750
    %v4486 = vunpack.c.h.b16 %v3750
    %v4487 = vunpack.c.l.b16 %v3751
    %v4488 = vunpack.c.h.b16 %v3751
    %v4489 = vunpack.c.l.b16 %v3752
    %v4490 = vunpack.c.h.b16 %v3752
    %v4491 = vunpack.c.l.b16 %v3753
    %v4492 = vunpack.c.h.b16 %v3753
    %v4493 = vunpack.c.l.b16 %v3754
    %v4494 = vunpack.c.h.b16 %v3754
    %v4495 = vunpack.c.l.b16 %v3755
    %v4496 = vunpack.c.h.b16 %v3755
    %v4497 = vunpack.c.l.b16 %v3756
    %v4498 = vunpack.c.h.b16 %v3756
    %v4499 = vunpack.c.l.b16 %v3757
    %v4500 = vunpack.c.h.b16 %v3757
    %v4501 = vunpack.c.l.b16 %v3758
    %v4502 = vunpack.c.h.b16 %v3758
    %v4503 = vunpack.c.l.b16 %v3759
    %v4504 = vunpack.c.h.b16 %v3759
    %v4505 = vunpack.c.l.b16 %v3760
    %v4506 = vunpack.c.h.b16 %v3760
    %v4507 = vunpack.c.l.b16 %v3761
    %v4508 = vunpack.c.h.b16 %v3761
    %v4509 = vunpack.c.l.b16 %v3762
    %v4510 = vunpack.c.h.b16 %v3762
    %v4511 = vunpack.c.l.b16 %v3763
    %v4512 = vunpack.c.h.b16 %v3763
    %v4513 = vunpack.c.l.b16 %v3764
    %v4514 = vunpack.c.h.b16 %v3764
    %v4515 = vunpack.c.l.b16 %v3765
    %v4516 = vunpack.c.h.b16 %v3765
    %v4517 = vunpack.c.l.b16 %v3766
    %v4518 = vunpack.c.h.b16 %v3766
    %v4519 = vunpack.c.l.b16 %v3767
    %v4520 = vunpack.c.h.b16 %v3767
    %v4521 = vunpack.c.l.b16 %v3768
    %v4522 = vunpack.c.h.b16 %v3768
    %v4523 = vunpack.c.l.b16 %v3769
    %v4524 = vunpack.c.h.b16 %v3769
    %v4525 = vunpack.c.l.b16 %v3770
    %v4526 = vunpack.c.h.b16 %v3770
    %v4527 = vunpack.c.l.b16 %v3771
    %v4528 = vunpack.c.h.b16 %v3771
    %v4529 = vunpack.c.l.b16 %v3772
    %v4530 = vunpack.c.h.b16 %v3772
    %v4531 = vunpack.c.l.b16 %v3773
    %v4532 = vunpack.c.h.b16 %v3773
    %v4533 = vunpack.c.l.b16 %v3774
    %v4534 = vunpack.c.h.b16 %v3774
    %v4535 = vunpack.c.l.b16 %v3775
    %v4536 = vunpack.c.h.b16 %v3775
    %v4537 = vunpack.c.l.b16 %v3776
    %v4538 = vunpack.c.h.b16 %v3776
    %v4539 = vunpack.c.l.b16 %v3777
    %v4540 = vunpack.c.h.b16 %v3777
    %v4541 = vunpack.c.l.b16 %v3778
    %v4542 = vunpack.c.h.b16 %v3778
    %v4543 = vunpack.c.l.b16 %v3779
    %v4544 = vunpack.c.h.b16 %v3779
    %v4545 = vunpack.c.l.b16 %v3780
    %v4546 = vunpack.c.h.b16 %v3780
    %v4547 = vunpack.c.l.b16 %v3781
    %v4548 = vunpack.c.h.b16 %v3781
    %v4549 = vunpack.c.l.b16 %v3782
    %v4550 = vunpack.c.h.b16 %v3782
    %v4551 = vunpack.c.l.b16 %v3783
    %v4552 = vunpack.c.h.b16 %v3783
    %v4553 = vunpack.c.l.b16 %v3784
    %v4554 = vunpack.c.h.b16 %v3784
    %v4555 = vunpack.c.l.b16 %v3785
    %v4556 = vunpack.c.h.b16 %v3785
    %v4557 = vunpack.c.l.b16 %v3786
    %v4558 = vunpack.c.h.b16 %v3786
    %v4559 = vunpack.c.l.b16 %v3787
    %v4560 = vunpack.c.h.b16 %v3787
    %v4561 = vunpack.c.l.b16 %v3788
    %v4562 = vunpack.c.h.b16 %v3788
    %v4563 = vunpack.c.l.b16 %v3789
    %v4564 = vunpack.c.h.b16 %v3789
    %v4565 = vunpack.c.l.b16 %v3790
    %v4566 = vunpack.c.h.b16 %v3790
    %v4567 = vunpack.c.l.b16 %v3791
    %v4568 = vunpack.c.h.b16 %v3791
    %v4569 = vunpack.c.l.b16 %v3792
    %v4570 = vunpack.c.h.b16 %v3792
    %v4571 = vunpack.c.l.b16 %v3793
    %v4572 = vunpack.c.h.b16 %v3793
    %v4573 = vunpack.c.l.b16 %v3794
    %v4574 = vunpack.c.h.b16 %v3794
    %v4575 = vunpack.c.l.b16 %v3795
    %v4576 = vunpack.c.h.b16 %v3795
    %v4577 = vunpack.c.l.b16 %v3796
    %v4578 = vunpack.c.h.b16 %v3796
    %v4579 = vunpack.c.l.b16 %v3797
    %v4580 = vunpack.c.h.b16 %v3797
    %v4581 = vunpack.c.l.b16 %v3798
    %v4582 = vunpack.c.h.b16 %v3798
    %v4583 = vunpack.c.l.b16 %v3799
    %v4584 = vunpack.c.h.b16 %v3799
    %v4585 = vunpack.c.l.b16 %v3800
    %v4586 = vunpack.c.h.b16 %v3800
    %v4587 = vunpack.c.l.b16 %v3801
    %v4588 = vunpack.c.h.b16 %v3801
    %v4589 = vunpack.c.l.b16 %v3802
    %v4590 = vunpack.c.h.b16 %v3802
    %v4591 = vunpack.c.l.b16 %v3803
    %v4592 = vunpack.c.h.b16 %v3803
    %v4593 = vunpack.c.l.b16 %v3804
    %v4594 = vunpack.c.h.b16 %v3804
    %v4595 = vunpack.c.l.b16 %v3805
    %v4596 = vunpack.c.h.b16 %v3805
    %v4597 = vunpack.c.l.b16 %v3806
    %v4598 = vunpack.c.h.b16 %v3806
    %v4599 = vunpack.c.l.b16 %v3807
    %v4600 = vunpack.c.h.b16 %v3807
    %v4601 = vunpack.c.l.b16 %v3808
    %v4602 = vunpack.c.h.b16 %v3808
    %v4603 = vunpack.c.l.b16 %v3809
    %v4604 = vunpack.c.h.b16 %v3809
    %v4605 = vunpack.c.l.b16 %v3810
    %v4606 = vunpack.c.h.b16 %v3810
    %v4607 = vunpack.c.l.b16 %v3811
    %v4608 = vunpack.c.h.b16 %v3811
    %v4609 = vunpack.c.l.b16 %v3812
    %v4610 = vunpack.c.h.b16 %v3812
    %v4611 = vunpack.c.l.b16 %v3813
    %v4612 = vunpack.c.h.b16 %v3813
    %v4613 = vunpack.c.l.b16 %v3814
    %v4614 = vunpack.c.h.b16 %v3814
    %v4615 = vunpack.c.l.b16 %v3815
    %v4616 = vunpack.c.h.b16 %v3815
    %v4617 = vunpack.c.l.b16 %v3816
    %v4618 = vunpack.c.h.b16 %v3816
    %v4619 = vunpack.c.l.b16 %v3817
    %v4620 = vunpack.c.h.b16 %v3817
    %v4621 = vunpack.c.l.b16 %v3818
    %v4622 = vunpack.c.h.b16 %v3818
    %v4623 = vunpack.c.l.b16 %v3819
    %v4624 = vunpack.c.h.b16 %v3819
    %v4625 = vunpack.c.l.b16 %v3820
    %v4626 = vunpack.c.h.b16 %v3820
    %v4627 = vunpack.c.l.b16 %v3821
    %v4628 = vunpack.c.h.b16 %v3821
    %v4629 = vunpack.c.l.b16 %v3822
    %v4630 = vunpack.c.h.b16 %v3822
    %v4631 = vunpack.c.l.b16 %v3823
    %v4632 = vunpack.c.h.b16 %v3823
    %v4633 = vunpack.c.l.b16 %v3824
    %v4634 = vunpack.c.h.b16 %v3824
    %v4635 = vpack.c.b16 %v4131, %v4123
    %v4636 = vpack.c.b16 %v4132, %v4124
    %v4637 = vpack.c.b16 %v4133, %v4125
    %v4638 = vpack.c.b16 %v4134, %v4126
    %v4639 = vpack.c.b16 %v4135, %v4127
    %v4640 = vpack.c.b16 %v4136, %v4128
    %v4641 = vpack.c.b16 %v4137, %v4129
    %v4642 = vpack.c.b16 %v4138, %v4130
    %v4643 = vpack.c.b16 %v4147, %v4139
    %v4644 = vpack.c.b16 %v4148, %v4140
    %v4645 = vpack.c.b16 %v4149, %v4141
    %v4646 = vpack.c.b16 %v4150, %v4142
    %v4647 = vpack.c.b16 %v4151, %v4143
    %v4648 = vpack.c.b16 %v4152, %v4144
    %v4649 = vpack.c.b16 %v4153, %v4145
    %v4650 = vpack.c.b16 %v4154, %v4146
    %v4651 = vpack.c.b16 %v4163, %v4155
    %v4652 = vpack.c.b16 %v4164, %v4156
    %v4653 = vpack.c.b16 %v4165, %v4157
    %v4654 = vpack.c.b16 %v4166, %v4158
    %v4655 = vpack.c.b16 %v4167, %v4159
    %v4656 = vpack.c.b16 %v4168, %v4160
    %v4657 = vpack.c.b16 %v4169, %v4161
    %v4658 = vpack.c.b16 %v4170, %v4162
    %v4659 = vpack.c.b16 %v4179, %v4171
    %v4660 = vpack.c.b16 %v4180, %v4172
    %v4661 = vpack.c.b16 %v4181, %v4173
    %v4662 = vpack.c.b16 %v4182, %v4174
    %v4663 = vpack.c.b16 %v4183, %v4175
    %v4664 = vpack.c.b16 %v4184, %v4176
    %v4665 = vpack.c.b16 %v4185, %v4177
    %v4666 = vpack.c.b16 %v4186, %v4178
    %v4667 = vpack.c.b16 %v4195, %v4187
    %v4668 = vpack.c.b16 %v4196, %v4188
    %v4669 = vpack.c.b16 %v4197, %v4189
    %v4670 = vpack.c.b16 %v4198, %v4190
    %v4671 = vpack.c.b16 %v4199, %v4191
    %v4672 = vpack.c.b16 %v4200, %v4192
    %v4673 = vpack.c.b16 %v4201, %v4193
    %v4674 = vpack.c.b16 %v4202, %v4194
    %v4675 = vpack.c.b16 %v4211, %v4203
    %v4676 = vpack.c.b16 %v4212, %v4204
    %v4677 = vpack.c.b16 %v4213, %v4205
    %v4678 = vpack.c.b16 %v4214, %v4206
    %v4679 = vpack.c.b16 %v4215, %v4207
    %v4680 = vpack.c.b16 %v4216, %v4208
    %v4681 = vpack.c.b16 %v4217, %v4209
    %v4682 = vpack.c.b16 %v4218, %v4210
    %v4683 = vpack.c.b16 %v4227, %v4219
    %v4684 = vpack.c.b16 %v4228, %v4220
    %v4685 = vpack.c.b16 %v4229, %v4221
    %v4686 = vpack.c.b16 %v4230, %v4222
    %v4687 = vpack.c.b16 %v4231, %v4223
    %v4688 = vpack.c.b16 %v4232, %v4224
    %v4689 = vpack.c.b16 %v4233, %v4225
    %v4690 = vpack.c.b16 %v4234, %v4226
    %v4691 = vpack.c.b16 %v4243, %v4235
    %v4692 = vpack.c.b16 %v4244, %v4236
    %v4693 = vpack.c.b16 %v4245, %v4237
    %v4694 = vpack.c.b16 %v4246, %v4238
    %v4695 = vpack.c.b16 %v4247, %v4239
    %v4696 = vpack.c.b16 %v4248, %v4240
    %v4697 = vpack.c.b16 %v4249, %v4241
    %v4698 = vpack.c.b16 %v4250, %v4242
    %v4699 = vpack.c.b16 %v4259, %v4251
    %v4700 = vpack.c.b16 %v4260, %v4252
    %v4701 = vpack.c.b16 %v4261, %v4253
    %v4702 = vpack.c.b16 %v4262, %v4254
    %v4703 = vpack.c.b16 %v4263, %v4255
    %v4704 = vpack.c.b16 %v4264, %v4256
    %v4705 = vpack.c.b16 %v4265, %v4257
    %v4706 = vpack.c.b16 %v4266, %v4258
    %v4707 = vpack.c.b16 %v4275, %v4267
    %v4708 = vpack.c.b16 %v4276, %v4268
    %v4709 = vpack.c.b16 %v4277, %v4269
    %v4710 = vpack.c.b16 %v4278, %v4270
    %v4711 = vpack.c.b16 %v4279, %v4271
    %v4712 = vpack.c.b16 %v4280, %v4272
    %v4713 = vpack.c.b16 %v4281, %v4273
    %v4714 = vpack.c.b16 %v4282, %v4274
    %v4715 = vpack.c.b16 %v4291, %v4283
    %v4716 = vpack.c.b16 %v4292, %v4284
    %v4717 = vpack.c.b16 %v4293, %v4285
    %v4718 = vpack.c.b16 %v4294, %v4286
    %v4719 = vpack.c.b16 %v4295, %v4287
    %v4720 = vpack.c.b16 %v4296, %v4288
    %v4721 = vpack.c.b16 %v4297, %v4289
    %v4722 = vpack.c.b16 %v4298, %v4290
    %v4723 = vpack.c.b16 %v4307, %v4299
    %v4724 = vpack.c.b16 %v4308, %v4300
    %v4725 = vpack.c.b16 %v4309, %v4301
    %v4726 = vpack.c.b16 %v4310, %v4302
    %v4727 = vpack.c.b16 %v4311, %v4303
    %v4728 = vpack.c.b16 %v4312, %v4304
    %v4729 = vpack.c.b16 %v4313, %v4305
    %v4730 = vpack.c.b16 %v4314, %v4306
    %v4731 = vpack.c.b16 %v4323, %v4315
    %v4732 = vpack.c.b16 %v4324, %v4316
    %v4733 = vpack.c.b16 %v4325, %v4317
    %v4734 = vpack.c.b16 %v4326, %v4318
    %v4735 = vpack.c.b16 %v4327, %v4319
    %v4736 = vpack.c.b16 %v4328, %v4320
    %v4737 = vpack.c.b16 %v4329, %v4321
    %v4738 = vpack.c.b16 %v4330, %v4322
    %v4739 = vpack.c.b16 %v4339, %v4331
    %v4740 = vpack.c.b16 %v4340, %v4332
    %v4741 = vpack.c.b16 %v4341, %v4333
    %v4742 = vpack.c.b16 %v4342, %v4334
    %v4743 = vpack.c.b16 %v4343, %v4335
    %v4744 = vpack.c.b16 %v4344, %v4336
    %v4745 = vpack.c.b16 %v4345, %v4337
    %v4746 = vpack.c.b16 %v4346, %v4338
    %v4747 = vpack.c.b16 %v4355, %v4347
    %v4748 = vpack.c.b16 %v4356, %v4348
    %v4749 = vpack.c.b16 %v4357, %v4349
    %v4750 = vpack.c.b16 %v4358, %v4350
    %v4751 = vpack.c.b16 %v4359, %v4351
    %v4752 = vpack.c.b16 %v4360, %v4352
    %v4753 = vpack.c.b16 %v4361, %v4353
    %v4754 = vpack.c.b16 %v4362, %v4354
    %v4755 = vpack.c.b16 %v4371, %v4363
    %v4756 = vpack.c.b16 %v4372, %v4364
    %v4757 = vpack.c.b16 %v4373, %v4365
    %v4758 = vpack.c.b16 %v4374, %v4366
    %v4759 = vpack.c.b16 %v4375, %v4367
    %v4760 = vpack.c.b16 %v4376, %v4368
    %v4761 = vpack.c.b16 %v4377, %v4369
    %v4762 = vpack.c.b16 %v4378, %v4370
    %v4763 = vpack.c.b16 %v4387, %v4379
    %v4764 = vpack.c.b16 %v4388, %v4380
    %v4765 = vpack.c.b16 %v4389, %v4381
    %v4766 = vpack.c.b16 %v4390, %v4382
    %v4767 = vpack.c.b16 %v4391, %v4383
    %v4768 = vpack.c.b16 %v4392, %v4384
    %v4769 = vpack.c.b16 %v4393, %v4385
    %v4770 = vpack.c.b16 %v4394, %v4386
    %v4771 = vpack.c.b16 %v4403, %v4395
    %v4772 = vpack.c.b16 %v4404, %v4396
    %v4773 = vpack.c.b16 %v4405, %v4397
    %v4774 = vpack.c.b16 %v4406, %v4398
    %v4775 = vpack.c.b16 %v4407, %v4399
    %v4776 = vpack.c.b16 %v4408, %v4400
    %v4777 = vpack.c.b16 %v4409, %v4401
    %v4778 = vpack.c.b16 %v4410, %v4402
    %v4779 = vpack.c.b16 %v4419, %v4411
    %v4780 = vpack.c.b16 %v4420, %v4412
    %v4781 = vpack.c.b16 %v4421, %v4413
    %v4782 = vpack.c.b16 %v4422, %v4414
    %v4783 = vpack.c.b16 %v4423, %v4415
    %v4784 = vpack.c.b16 %v4424, %v4416
    %v4785 = vpack.c.b16 %v4425, %v4417
    %v4786 = vpack.c.b16 %v4426, %v4418
    %v4787 = vpack.c.b16 %v4435, %v4427
    %v4788 = vpack.c.b16 %v4436, %v4428
    %v4789 = vpack.c.b16 %v4437, %v4429
    %v4790 = vpack.c.b16 %v4438, %v4430
    %v4791 = vpack.c.b16 %v4439, %v4431
    %v4792 = vpack.c.b16 %v4440, %v4432
    %v4793 = vpack.c.b16 %v4441, %v4433
    %v4794 = vpack.c.b16 %v4442, %v4434
    %v4795 = vpack.c.b16 %v4451, %v4443
    %v4796 = vpack.c.b16 %v4452, %v4444
    %v4797 = vpack.c.b16 %v4453, %v4445
    %v4798 = vpack.c.b16 %v4454, %v4446
    %v4799 = vpack.c.b16 %v4455, %v4447
    %v4800 = vpack.c.b16 %v4456, %v4448
    %v4801 = vpack.c.b16 %v4457, %v4449
    %v4802 = vpack.c.b16 %v4458, %v4450
    %v4803 = vpack.c.b16 %v4467, %v4459
    %v4804 = vpack.c.b16 %v4468, %v4460
    %v4805 = vpack.c.b16 %v4469, %v4461
    %v4806 = vpack.c.b16 %v4470, %v4462
    %v4807 = vpack.c.b16 %v4471, %v4463
    %v4808 = vpack.c.b16 %v4472, %v4464
    %v4809 = vpack.c.b16 %v4473, %v4465
    %v4810 = vpack.c.b16 %v4474, %v4466
    %v4811 = vpack.c.b16 %v4483, %v4475
    %v4812 = vpack.c.b16 %v4484, %v4476
    %v4813 = vpack.c.b16 %v4485, %v4477
    %v4814 = vpack.c.b16 %v4486, %v4478
    %v4815 = vpack.c.b16 %v4487, %v4479
    %v4816 = vpack.c.b16 %v4488, %v4480
    %v4817 = vpack.c.b16 %v4489, %v4481
    %v4818 = vpack.c.b16 %v4490, %v4482
    %v4819 = vpack.c.b16 %v4499, %v4491
    %v4820 = vpack.c.b16 %v4500, %v4492
    %v4821 = vpack.c.b16 %v4501, %v4493
    %v4822 = vpack.c.b16 %v4502, %v4494
    %v4823 = vpack.c.b16 %v4503, %v4495
    %v4824 = vpack.c.b16 %v4504, %v4496
    %v4825 = vpack.c.b16 %v4505, %v4497
    %v4826 = vpack.c.b16 %v4506, %v4498
    %v4827 = vpack.c.b16 %v4515, %v4507
    %v4828 = vpack.c.b16 %v4516, %v4508
    %v4829 = vpack.c.b16 %v4517, %v4509
    %v4830 = vpack.c.b16 %v4518, %v4510
    %v4831 = vpack.c.b16 %v4519, %v4511
    %v4832 = vpack.c.b16 %v4520, %v4512
    %v4833 = vpack.c.b16 %v4521, %v4513
    %v4834 = vpack.c.b16 %v4522, %v4514
    %v4835 = vpack.c.b16 %v4531, %v4523
    %v4836 = vpack.c.b16 %v4532, %v4524
    %v4837 = vpack.c.b16 %v4533, %v4525
    %v4838 = vpack.c.b16 %v4534, %v4526
    %v4839 = vpack.c.b16 %v4535, %v4527
    %v4840 = vpack.c.b16 %v4536, %v4528
    %v4841 = vpack.c.b16 %v4537, %v4529
    %v4842 = vpack.c.b16 %v4538, %v4530
    %v4843 = vpack.c.b16 %v4547, %v4539
    %v4844 = vpack.c.b16 %v4548, %v4540
    %v4845 = vpack.c.b16 %v4549, %v4541
    %v4846 = vpack.c.b16 %v4550, %v4542
    %v4847 = vpack.c.b16 %v4551, %v4543
    %v4848 = vpack.c.b16 %v4552, %v4544
    %v4849 = vpack.c.b16 %v4553, %v4545
    %v4850 = vpack.c.b16 %v4554, %v4546
    %v4851 = vpack.c.b16 %v4563, %v4555
    %v4852 = vpack.c.b16 %v4564, %v4556
    %v4853 = vpack.c.b16 %v4565, %v4557
    %v4854 = vpack.c.b16 %v4566, %v4558
    %v4855 = vpack.c.b16 %v4567, %v4559
    %v4856 = vpack.c.b16 %v4568, %v4560
    %v4857 = vpack.c.b16 %v4569, %v4561
    %v4858 = vpack.c.b16 %v4570, %v4562
    %v4859 = vpack.c.b16 %v4579, %v4571
    %v4860 = vpack.c.b16 %v4580, %v4572
    %v4861 = vpack.c.b16 %v4581, %v4573
    %v4862 = vpack.c.b16 %v4582, %v4574
    %v4863 = vpack.c.b16 %v4583, %v4575
    %v4864 = vpack.c.b16 %v4584, %v4576
    %v4865 = vpack.c.b16 %v4585, %v4577
    %v4866 = vpack.c.b16 %v4586, %v4578
    %v4867 = vpack.c.b16 %v4595, %v4587
    %v4868 = vpack.c.b16 %v4596, %v4588
    %v4869 = vpack.c.b16 %v4597, %v4589
    %v4870 = vpack.c.b16 %v4598, %v4590
    %v4871 = vpack.c.b16 %v4599, %v4591
    %v4872 = vpack.c.b16 %v4600, %v4592
    %v4873 = vpack.c.b16 %v4601, %v4593
    %v4874 = vpack.c.b16 %v4602, %v4594
    %v4875 = vpack.c.b16 %v4611, %v4603
    %v4876 = vpack.c.b16 %v4612, %v4604
    %v4877 = vpack.c.b16 %v4613, %v4605
    %v4878 = vpack.c.b16 %v4614, %v4606
    %v4879 = vpack.c.b16 %v4615, %v4607
    %v4880 = vpack.c.b16 %v4616, %v4608
    %v4881 = vpack.c.b16 %v4617, %v4609
    %v4882 = vpack.c.b16 %v4618, %v4610
    %v4883 = vpack.c.b16 %v4627, %v4619
    %v4884 = vpack.c.b16 %v4628, %v4620
    %v4885 = vpack.c.b16 %v4629, %v4621
    %v4886 = vpack.c.b16 %v4630, %v4622
    %v4887 = vpack.c.b16 %v4631, %v4623
    %v4888 = vpack.c.b16 %v4632, %v4624
    %v4889 = vpack.c.b16 %v4633, %v4625
    %v4890 = vpack.c.b16 %v4634, %v4626
    %5147 = vmatprep.subr.bf16.mxu0 %v4636
    %5148 = vmatpush1.bf16.msra.mxu0 %v4635
    %5149 = vmatprep.subr.bf16.mxu0 %v4644
    %5150 = vmatpush1.bf16.msra.mxu0 %v4643
    %5151 = vmatprep.subr.bf16.mxu0 %v4652
    %5152 = vmatpush1.bf16.msra.mxu0 %v4651
    %5153 = vmatprep.subr.bf16.mxu0 %v4660
    %5154 = vmatpush1.bf16.msra.mxu0 %v4659
    %5155 = vmatprep.subr.bf16.mxu0 %v4668
    %5156 = vmatpush1.bf16.msra.mxu0 %v4667
    %5157 = vmatprep.subr.bf16.mxu0 %v4676
    %5158 = vmatpush1.bf16.msra.mxu0 %v4675
    %5159 = vmatprep.subr.bf16.mxu0 %v4684
    %5160 = vmatpush1.bf16.msra.mxu0 %v4683
    %5161 = vmatprep.subr.bf16.mxu0 %v4692
    %5162 = vmatpush1.bf16.msra.mxu0 %v4691
    %5163 = vmatprep.subr.bf16.mxu0 %v4700
    %5164 = vmatpush1.bf16.msra.mxu0 %v4699
    %5165 = vmatprep.subr.bf16.mxu0 %v4708
    %5166 = vmatpush1.bf16.msra.mxu0 %v4707
    %5167 = vmatprep.subr.bf16.mxu0 %v4716
    %5168 = vmatpush1.bf16.msra.mxu0 %v4715
    %5169 = vmatprep.subr.bf16.mxu0 %v4724
    %5170 = vmatpush1.bf16.msra.mxu0 %v4723
    %5171 = vmatprep.subr.bf16.mxu0 %v4732
    %5172 = vmatpush1.bf16.msra.mxu0 %v4731
    %5173 = vmatprep.subr.bf16.mxu0 %v4740
    %5174 = vmatpush1.bf16.msra.mxu0 %v4739
    %5175 = vmatprep.subr.bf16.mxu0 %v4748
    %5176 = vmatpush1.bf16.msra.mxu0 %v4747
    %5177 = vmatprep.subr.bf16.mxu0 %v4756
    %5178 = vmatpush1.bf16.msra.mxu0 %v4755
    %5179 = vmatprep.mubr.bf16.mxu0 %v3566
    %5180 = vmatmul.mubr.bf16.gmra.mrb[0].mxu0 %v3565
    %v5181 = vpop.f32.mrb[0].mxu0
    %v5182 = vadd.f32 %v3830, %v5181
    %v5183 = vpop.f32.mrb[0].mxu0
    %v5184 = vadd.f32 %v3834, %v5183
    %v5185 = vpop.f32.mrb[0].mxu0
    %v5186 = vpop.f32.mrb[0].mxu0
    %5187 = vdwg.mxu0
    %5188 = vmatprep.subr.bf16.mxu0 %v4764
    %5189 = vmatpush1.bf16.msra.mxu0 %v4763
    %5190 = vmatprep.subr.bf16.mxu0 %v4772
    %5191 = vmatpush1.bf16.msra.mxu0 %v4771
    %5192 = vmatprep.subr.bf16.mxu0 %v4780
    %5193 = vmatpush1.bf16.msra.mxu0 %v4779
    %5194 = vmatprep.subr.bf16.mxu0 %v4788
    %5195 = vmatpush1.bf16.msra.mxu0 %v4787
    %5196 = vmatprep.subr.bf16.mxu0 %v4796
    %5197 = vmatpush1.bf16.msra.mxu0 %v4795
    %5198 = vmatprep.subr.bf16.mxu0 %v4804
    %5199 = vmatpush1.bf16.msra.mxu0 %v4803
    %5200 = vmatprep.subr.bf16.mxu0 %v4812
    %5201 = vmatpush1.bf16.msra.mxu0 %v4811
    %5202 = vmatprep.subr.bf16.mxu0 %v4820
    %5203 = vmatpush1.bf16.msra.mxu0 %v4819
    %5204 = vmatprep.subr.bf16.mxu0 %v4828
    %5205 = vmatpush1.bf16.msra.mxu0 %v4827
    %5206 = vmatprep.subr.bf16.mxu0 %v4836
    %5207 = vmatpush1.bf16.msra.mxu0 %v4835
    %5208 = vmatprep.subr.bf16.mxu0 %v4844
    %5209 = vmatpush1.bf16.msra.mxu0 %v4843
    %5210 = vmatprep.subr.bf16.mxu0 %v4852
    %5211 = vmatpush1.bf16.msra.mxu0 %v4851
    %5212 = vmatprep.subr.bf16.mxu0 %v4860
    %5213 = vmatpush1.bf16.msra.mxu0 %v4859
    %5214 = vmatprep.subr.bf16.mxu0 %v4868
    %5215 = vmatpush1.bf16.msra.mxu0 %v4867
    %5216 = vmatprep.subr.bf16.mxu0 %v4876
    %5217 = vmatpush1.bf16.msra.mxu0 %v4875
    %5218 = vmatprep.subr.bf16.mxu0 %v4884
    %5219 = vmatpush1.bf16.msra.mxu0 %v4883
    %5220 = vmatprep.mubr.bf16.mxu0 %v3568
    %5221 = vmatmul.mubr.bf16.gmra.mrb[0].mxu0 %v3567
    %v5222 = vpop.f32.mrb[0].mxu0
    %v5223 = vadd.f32 %v5182, %v5222
    %v5224 = vpop.f32.mrb[0].mxu0
    %v5225 = vadd.f32 %v5184, %v5224
    %v5226 = vpop.f32.mrb[0].mxu0
    %v5227 = vpop.f32.mrb[0].mxu0
    %5228 = vdwg.mxu0
    %5229 = vmatprep.subr.bf16.mxu0 %v4638
    %5230 = vmatpush1.bf16.msra.mxu0 %v4637
    %5231 = vmatprep.subr.bf16.mxu0 %v4646
    %5232 = vmatpush1.bf16.msra.mxu0 %v4645
    %5233 = vmatprep.subr.bf16.mxu0 %v4654
    %5234 = vmatpush1.bf16.msra.mxu0 %v4653
    %5235 = vmatprep.subr.bf16.mxu0 %v4662
    %5236 = vmatpush1.bf16.msra.mxu0 %v4661
    %5237 = vmatprep.subr.bf16.mxu0 %v4670
    %5238 = vmatpush1.bf16.msra.mxu0 %v4669
    %5239 = vmatprep.subr.bf16.mxu0 %v4678
    %5240 = vmatpush1.bf16.msra.mxu0 %v4677
    %5241 = vmatprep.subr.bf16.mxu0 %v4686
    %5242 = vmatpush1.bf16.msra.mxu0 %v4685
    %5243 = vmatprep.subr.bf16.mxu0 %v4694
    %5244 = vmatpush1.bf16.msra.mxu0 %v4693
    %5245 = vmatprep.subr.bf16.mxu0 %v4702
    %5246 = vmatpush1.bf16.msra.mxu0 %v4701
    %5247 = vmatprep.subr.bf16.mxu0 %v4710
    %5248 = vmatpush1.bf16.msra.mxu0 %v4709
    %5249 = vmatprep.subr.bf16.mxu0 %v4718
    %5250 = vmatpush1.bf16.msra.mxu0 %v4717
    %5251 = vmatprep.subr.bf16.mxu0 %v4726
    %5252 = vmatpush1.bf16.msra.mxu0 %v4725
    %5253 = vmatprep.subr.bf16.mxu0 %v4734
    %5254 = vmatpush1.bf16.msra.mxu0 %v4733
    %5255 = vmatprep.subr.bf16.mxu0 %v4742
    %5256 = vmatpush1.bf16.msra.mxu0 %v4741
    %5257 = vmatprep.subr.bf16.mxu0 %v4750
    %5258 = vmatpush1.bf16.msra.mxu0 %v4749
    %5259 = vmatprep.subr.bf16.mxu0 %v4758
    %5260 = vmatpush1.bf16.msra.mxu0 %v4757
    %5261 = vmatprep.mubr.bf16.mxu0 %v3566
    %5262 = vmatmul.mubr.bf16.gmra.mrb[0].mxu0 %v3565
    %v5263 = vpop.f32.mrb[0].mxu0
    %v5264 = vadd.f32 %v3838, %v5263
    %v5265 = vpop.f32.mrb[0].mxu0
    %v5266 = vadd.f32 %v3842, %v5265
    %v5267 = vpop.f32.mrb[0].mxu0
    %v5268 = vpop.f32.mrb[0].mxu0
    %5269 = vdwg.mxu0
    %5270 = vmatprep.subr.bf16.mxu0 %v4766
    %5271 = vmatpush1.bf16.msra.mxu0 %v4765
    %5272 = vmatprep.subr.bf16.mxu0 %v4774
    %5273 = vmatpush1.bf16.msra.mxu0 %v4773
    %5274 = vmatprep.subr.bf16.mxu0 %v4782
    %5275 = vmatpush1.bf16.msra.mxu0 %v4781
    %5276 = vmatprep.subr.bf16.mxu0 %v4790
    %5277 = vmatpush1.bf16.msra.mxu0 %v4789
    %5278 = vmatprep.subr.bf16.mxu0 %v4798
    %5279 = vmatpush1.bf16.msra.mxu0 %v4797
    %5280 = vmatprep.subr.bf16.mxu0 %v4806
    %5281 = vmatpush1.bf16.msra.mxu0 %v4805
    %5282 = vmatprep.subr.bf16.mxu0 %v4814
    %5283 = vmatpush1.bf16.msra.mxu0 %v4813
    %5284 = vmatprep.subr.bf16.mxu0 %v4822
    %5285 = vmatpush1.bf16.msra.mxu0 %v4821
    %5286 = vmatprep.subr.bf16.mxu0 %v4830
    %5287 = vmatpush1.bf16.msra.mxu0 %v4829
    %5288 = vmatprep.subr.bf16.mxu0 %v4838
    %5289 = vmatpush1.bf16.msra.mxu0 %v4837
    %5290 = vmatprep.subr.bf16.mxu0 %v4846
    %5291 = vmatpush1.bf16.msra.mxu0 %v4845
    %5292 = vmatprep.subr.bf16.mxu0 %v4854
    %5293 = vmatpush1.bf16.msra.mxu0 %v4853
    %5294 = vmatprep.subr.bf16.mxu0 %v4862
    %5295 = vmatpush1.bf16.msra.mxu0 %v4861
    %5296 = vmatprep.subr.bf16.mxu0 %v4870
    %5297 = vmatpush1.bf16.msra.mxu0 %v4869
    %5298 = vmatprep.subr.bf16.mxu0 %v4878
    %5299 = vmatpush1.bf16.msra.mxu0 %v4877
    %5300 = vmatprep.subr.bf16.mxu0 %v4886
    %5301 = vmatpush1.bf16.msra.mxu0 %v4885
    %5302 = vmatprep.mubr.bf16.mxu0 %v3568
    %5303 = vmatmul.mubr.bf16.gmra.mrb[0].mxu0 %v3567
    %v5304 = vpop.f32.mrb[0].mxu0
    %v5305 = vadd.f32 %v5264, %v5304
    %v5306 = vpop.f32.mrb[0].mxu0
    %v5307 = vadd.f32 %v5266, %v5306
    %v5308 = vpop.f32.mrb[0].mxu0
    %v5309 = vpop.f32.mrb[0].mxu0
    %5310 = vdwg.mxu0
    %5311 = vmatprep.subr.bf16.mxu0 %v4640
    %5312 = vmatpush1.bf16.msra.mxu0 %v4639
    %5313 = vmatprep.subr.bf16.mxu0 %v4648
    %5314 = vmatpush1.bf16.msra.mxu0 %v4647
    %5315 = vmatprep.subr.bf16.mxu0 %v4656
    %5316 = vmatpush1.bf16.msra.mxu0 %v4655
    %5317 = vmatprep.subr.bf16.mxu0 %v4664
    %5318 = vmatpush1.bf16.msra.mxu0 %v4663
    %5319 = vmatprep.subr.bf16.mxu0 %v4672
    %5320 = vmatpush1.bf16.msra.mxu0 %v4671
    %5321 = vmatprep.subr.bf16.mxu0 %v4680
    %5322 = vmatpush1.bf16.msra.mxu0 %v4679
    %5323 = vmatprep.subr.bf16.mxu0 %v4688
    %5324 = vmatpush1.bf16.msra.mxu0 %v4687
    %5325 = vmatprep.subr.bf16.mxu0 %v4696
    %5326 = vmatpush1.bf16.msra.mxu0 %v4695
    %5327 = vmatprep.subr.bf16.mxu0 %v4704
    %5328 = vmatpush1.bf16.msra.mxu0 %v4703
    %5329 = vmatprep.subr.bf16.mxu0 %v4712
    %5330 = vmatpush1.bf16.msra.mxu0 %v4711
    %5331 = vmatprep.subr.bf16.mxu0 %v4720
    %5332 = vmatpush1.bf16.msra.mxu0 %v4719
    %5333 = vmatprep.subr.bf16.mxu0 %v4728
    %5334 = vmatpush1.bf16.msra.mxu0 %v4727
    %5335 = vmatprep.subr.bf16.mxu0 %v4736
    %5336 = vmatpush1.bf16.msra.mxu0 %v4735
    %5337 = vmatprep.subr.bf16.mxu0 %v4744
    %5338 = vmatpush1.bf16.msra.mxu0 %v4743
    %5339 = vmatprep.subr.bf16.mxu0 %v4752
    %5340 = vmatpush1.bf16.msra.mxu0 %v4751
    %5341 = vmatprep.subr.bf16.mxu0 %v4760
    %5342 = vmatpush1.bf16.msra.mxu0 %v4759
    %5343 = vmatprep.mubr.bf16.mxu0 %v3566
    %5344 = vmatmul.mubr.bf16.gmra.mrb[0].mxu0 %v3565
    %v5345 = vpop.f32.mrb[0].mxu0
    %v5346 = vadd.f32 %v3846, %v5345
    %v5347 = vpop.f32.mrb[0].mxu0
    %v5348 = vadd.f32 %v3850, %v5347
    %v5349 = vpop.f32.mrb[0].mxu0
    %v5350 = vpop.f32.mrb[0].mxu0
    %5351 = vdwg.mxu0
    %5352 = vmatprep.subr.bf16.mxu0 %v4768
    %5353 = vmatpush1.bf16.msra.mxu0 %v4767
    %5354 = vmatprep.subr.bf16.mxu0 %v4776
    %5355 = vmatpush1.bf16.msra.mxu0 %v4775
    %5356 = vmatprep.subr.bf16.mxu0 %v4784
    %5357 = vmatpush1.bf16.msra.mxu0 %v4783
    %5358 = vmatprep.subr.bf16.mxu0 %v4792
    %5359 = vmatpush1.bf16.msra.mxu0 %v4791
    %5360 = vmatprep.subr.bf16.mxu0 %v4800
    %5361 = vmatpush1.bf16.msra.mxu0 %v4799
    %5362 = vmatprep.subr.bf16.mxu0 %v4808
    %5363 = vmatpush1.bf16.msra.mxu0 %v4807
    %5364 = vmatprep.subr.bf16.mxu0 %v4816
    %5365 = vmatpush1.bf16.msra.mxu0 %v4815
    %5366 = vmatprep.subr.bf16.mxu0 %v4824
    %5367 = vmatpush1.bf16.msra.mxu0 %v4823
    %5368 = vmatprep.subr.bf16.mxu0 %v4832
    %5369 = vmatpush1.bf16.msra.mxu0 %v4831
    %5370 = vmatprep.subr.bf16.mxu0 %v4840
    %5371 = vmatpush1.bf16.msra.mxu0 %v4839
    %5372 = vmatprep.subr.bf16.mxu0 %v4848
    %5373 = vmatpush1.bf16.msra.mxu0 %v4847
    %5374 = vmatprep.subr.bf16.mxu0 %v4856
    %5375 = vmatpush1.bf16.msra.mxu0 %v4855
    %5376 = vmatprep.subr.bf16.mxu0 %v4864
    %5377 = vmatpush1.bf16.msra.mxu0 %v4863
    %5378 = vmatprep.subr.bf16.mxu0 %v4872
    %5379 = vmatpush1.bf16.msra.mxu0 %v4871
    %5380 = vmatprep.subr.bf16.mxu0 %v4880
    %5381 = vmatpush1.bf16.msra.mxu0 %v4879
    %5382 = vmatprep.subr.bf16.mxu0 %v4888
    %5383 = vmatpush1.bf16.msra.mxu0 %v4887
    %5384 = vmatprep.mubr.bf16.mxu0 %v3568
    %5385 = vmatmul.mubr.bf16.gmra.mrb[0].mxu0 %v3567
    %v5386 = vpop.f32.mrb[0].mxu0
    %v5387 = vadd.f32 %v5346, %v5386
    %v5388 = vpop.f32.mrb[0].mxu0
    %v5389 = vadd.f32 %v5348, %v5388
    %v5390 = vpop.f32.mrb[0].mxu0
    %v5391 = vpop.f32.mrb[0].mxu0
    %5392 = vdwg.mxu0
    %5393 = vmatprep.subr.bf16.mxu0 %v4642
    %5394 = vmatpush1.bf16.msra.mxu0 %v4641
    %5395 = vmatprep.subr.bf16.mxu0 %v4650
    %5396 = vmatpush1.bf16.msra.mxu0 %v4649
    %5397 = vmatprep.subr.bf16.mxu0 %v4658
    %5398 = vmatpush1.bf16.msra.mxu0 %v4657
    %5399 = vmatprep.subr.bf16.mxu0 %v4666
    %5400 = vmatpush1.bf16.msra.mxu0 %v4665
    %5401 = vmatprep.subr.bf16.mxu0 %v4674
    %5402 = vmatpush1.bf16.msra.mxu0 %v4673
    %5403 = vmatprep.subr.bf16.mxu0 %v4682
    %5404 = vmatpush1.bf16.msra.mxu0 %v4681
    %5405 = vmatprep.subr.bf16.mxu0 %v4690
    %5406 = vmatpush1.bf16.msra.mxu0 %v4689
    %5407 = vmatprep.subr.bf16.mxu0 %v4698
    %5408 = vmatpush1.bf16.msra.mxu0 %v4697
    %5409 = vmatprep.subr.bf16.mxu0 %v4706
    %5410 = vmatpush1.bf16.msra.mxu0 %v4705
    %5411 = vmatprep.subr.bf16.mxu0 %v4714
    %5412 = vmatpush1.bf16.msra.mxu0 %v4713
    %5413 = vmatprep.subr.bf16.mxu0 %v4722
    %5414 = vmatpush1.bf16.msra.mxu0 %v4721
    %5415 = vmatprep.subr.bf16.mxu0 %v4730
    %5416 = vmatpush1.bf16.msra.mxu0 %v4729
    %5417 = vmatprep.subr.bf16.mxu0 %v4738
    %5418 = vmatpush1.bf16.msra.mxu0 %v4737
    %5419 = vmatprep.subr.bf16.mxu0 %v4746
    %5420 = vmatpush1.bf16.msra.mxu0 %v4745
    %5421 = vmatprep.subr.bf16.mxu0 %v4754
    %5422 = vmatpush1.bf16.msra.mxu0 %v4753
    %5423 = vmatprep.subr.bf16.mxu0 %v4762
    %5424 = vmatpush1.bf16.msra.mxu0 %v4761
    %5425 = vmatprep.mubr.bf16.mxu0 %v3566
    %5426 = vmatmul.mubr.bf16.gmra.mrb[0].mxu0 %v3565
    %v5427 = vpop.f32.mrb[0].mxu0
    %v5428 = vadd.f32 %v3854, %v5427
    %v5429 = vpop.f32.mrb[0].mxu0
    %v5430 = vadd.f32 %v3858, %v5429
    %v5431 = vpop.f32.mrb[0].mxu0
    %v5432 = vpop.f32.mrb[0].mxu0
    %5433 = vdwg.mxu0
    %5434 = vmatprep.subr.bf16.mxu0 %v4770
    %5435 = vmatpush1.bf16.msra.mxu0 %v4769
    %5436 = vmatprep.subr.bf16.mxu0 %v4778
    %5437 = vmatpush1.bf16.msra.mxu0 %v4777
    %5438 = vmatprep.subr.bf16.mxu0 %v4786
    %5439 = vmatpush1.bf16.msra.mxu0 %v4785
    %5440 = vmatprep.subr.bf16.mxu0 %v4794
    %5441 = vmatpush1.bf16.msra.mxu0 %v4793
    %5442 = vmatprep.subr.bf16.mxu0 %v4802
    %5443 = vmatpush1.bf16.msra.mxu0 %v4801
    %5444 = vmatprep.subr.bf16.mxu0 %v4810
    %5445 = vmatpush1.bf16.msra.mxu0 %v4809
    %5446 = vmatprep.subr.bf16.mxu0 %v4818
    %5447 = vmatpush1.bf16.msra.mxu0 %v4817
    %5448 = vmatprep.subr.bf16.mxu0 %v4826
    %5449 = vmatpush1.bf16.msra.mxu0 %v4825
    %5450 = vmatprep.subr.bf16.mxu0 %v4834
    %5451 = vmatpush1.bf16.msra.mxu0 %v4833
    %5452 = vmatprep.subr.bf16.mxu0 %v4842
    %5453 = vmatpush1.bf16.msra.mxu0 %v4841
    %5454 = vmatprep.subr.bf16.mxu0 %v4850
    %5455 = vmatpush1.bf16.msra.mxu0 %v4849
    %5456 = vmatprep.subr.bf16.mxu0 %v4858
    %5457 = vmatpush1.bf16.msra.mxu0 %v4857
    %5458 = vmatprep.subr.bf16.mxu0 %v4866
    %5459 = vmatpush1.bf16.msra.mxu0 %v4865
    %5460 = vmatprep.subr.bf16.mxu0 %v4874
    %5461 = vmatpush1.bf16.msra.mxu0 %v4873
    %5462 = vmatprep.subr.bf16.mxu0 %v4882
    %5463 = vmatpush1.bf16.msra.mxu0 %v4881
    %5464 = vmatprep.subr.bf16.mxu0 %v4890
    %5465 = vmatpush1.bf16.msra.mxu0 %v4889
    %5466 = vmatprep.mubr.bf16.mxu0 %v3568
    %5467 = vmatmul.mubr.bf16.gmra.mrb[0].mxu0 %v3567
    %v5468 = vpop.f32.mrb[0].mxu0
    %v5469 = vadd.f32 %v5428, %v5468
    %v5470 = vpop.f32.mrb[0].mxu0
    %v5471 = vadd.f32 %v5430, %v5470
    %v5472 = vpop.f32.mrb[0].mxu0
    %v5473 = vpop.f32.mrb[0].mxu0
    %5474 = vdwg.mxu0
    %v5475 = vxor.u32 %v5223, 2147483648
    %v5476 = vxor.u32 %v5225, 2147483648
    %v5477 = vxor.u32 %v5305, 2147483648
    %v5478 = vxor.u32 %v5307, 2147483648
    %v5479 = vxor.u32 %v5387, 2147483648
    %v5480 = vxor.u32 %v5389, 2147483648
    %v5481 = vxor.u32 %v5469, 2147483648
    %v5482 = vxor.u32 %v5471, 2147483648
    %v5483 = vmul.f32 %v5475, 1.442695
    %v5484 = vpow.pop %v5483
    %v5485 = vmul.f32 %v5476, 1.442695
    %v5486 = vpow.pop %v5485
    %v5487 = vmul.f32 %v5477, 1.442695
    %v5488 = vpow.pop %v5487
    %v5489 = vmul.f32 %v5478, 1.442695
    %v5490 = vpow.pop %v5489
    %v5491 = vmul.f32 %v5479, 1.442695
    %v5492 = vpow.pop %v5491
    %v5493 = vmul.f32 %v5480, 1.442695
    %v5494 = vpow.pop %v5493
    %v5495 = vmul.f32 %v5481, 1.442695
    %v5496 = vpow.pop %v5495
    %v5497 = vmul.f32 %v5482, 1.442695
    %v5498 = vpow.pop %v5497
    %v5499 = vadd.f32 %v5484, 1.0
    %v5500 = vadd.f32 %v5486, 1.0
    %v5501 = vadd.f32 %v5488, 1.0
    %v5502 = vadd.f32 %v5490, 1.0
    %v5503 = vadd.f32 %v5492, 1.0
    %v5504 = vadd.f32 %v5494, 1.0
    %v5505 = vadd.f32 %v5496, 1.0
    %v5506 = vadd.f32 %v5498, 1.0
    %v5507 = vrcp.pop %v5499
    %v5508 = vmul.f32 1.0, %v5507
    %v5509 = vrcp.pop %v5500
    %v5510 = vmul.f32 1.0, %v5509
    %v5511 = vrcp.pop %v5501
    %v5512 = vmul.f32 1.0, %v5511
    %v5513 = vrcp.pop %v5502
    %v5514 = vmul.f32 1.0, %v5513
    %v5515 = vrcp.pop %v5503
    %v5516 = vmul.f32 1.0, %v5515
    %v5517 = vrcp.pop %v5504
    %v5518 = vmul.f32 1.0, %v5517
    %v5519 = vrcp.pop %v5505
    %v5520 = vmul.f32 1.0, %v5519
    %v5521 = vrcp.pop %v5506
    %v5522 = vmul.f32 1.0, %v5521
    %vm5523 = vcmask 517120
    %5524 = vst.msk [vmem:[%s18] sm:$0x3] %vm5523, %v2835
    %5526 = vrot.lane.b32.xlu0 %v2849, 64
    %v5527 = vpop.permute.xlu0 %5526
    %vm5529 = vcmask 779776
    %5530 = vst.msk [vmem:[%s18] sm:$0x3] %vm5529, %v5527
    %v5539 = vcombine.low %v5508, %v5510
    %v5540 = vcombine.low %v5512, %v5514
    %v5542 = vunpack.c.l.s4 1983009808
    %v5543 = vunpack.c.0.s8 %v5542
    %v5544 = vlaneseq
    %v5545 = vshrl.u32 %v5544, 7
    %v5546 = vsub.s32 %v5543, %v5545
    %v5547 = vrot.slane %v5539, %v5546
    %v5549 = vunpack.c.l.s4 1983009808
    %v5550 = vunpack.c.0.s8 %v5549
    %v5551 = vlaneseq
    %v5552 = vshrl.u32 %v5551, 7
    %v5553 = vsub.s32 %v5550, %v5552
    %v5554 = vrot.slane %v5540, %v5553
    %v5555 = vcombine.low %v5547, %v5554
    %v5556 = vcombine.low %v5516, %v5518
    %v5557 = vcombine.low %v5520, %v5522
    %v5559 = vunpack.c.l.s4 1983009808
    %v5560 = vunpack.c.0.s8 %v5559
    %v5561 = vlaneseq
    %v5562 = vshrl.u32 %v5561, 7
    %v5563 = vsub.s32 %v5560, %v5562
    %v5564 = vrot.slane %v5556, %v5563
    %v5566 = vunpack.c.l.s4 1983009808
    %v5567 = vunpack.c.0.s8 %v5566
    %v5568 = vlaneseq
    %v5569 = vshrl.u32 %v5568, 7
    %v5570 = vsub.s32 %v5567, %v5569
    %v5571 = vrot.slane %v5557, %v5570
    %v5572 = vcombine.low %v5564, %v5571
    %5575 = vst [vmem:[%s19] sm:$0xff] %v5555
    %5576 = vst [vmem:[%s19 + $0x8] sm:$0xff] %v5572
    // Predicated region
    $region90: #{vae_forward.1} parent=1 // pred_check
      _
    $region91: #{vae_forward.1} parent=1 // pred_check_branch
      %5578 = sbr.rel (0) target = $region93
    $region92: #{vae_forward.1} parent=1 // pred_region
      _
    $region93: #{vae_forward.1} parent=1 // pred_fallthru
      _
    // Predicated region
    $region94: #{vae_forward.1} parent=1 // pred_check
      _
    $region95: #{vae_forward.1} parent=1 // pred_check_branch
      %5580 = sbr.rel (0) target = $region97
    $region96: #{vae_forward.1} parent=1 // pred_region
      _
    $region97: #{vae_forward.1} parent=1 // pred_fallthru
      _
    // Predicated region
    $region98: #{vae_forward.1} parent=1 // pred_check
      _
    $region99: #{vae_forward.1} parent=1 // pred_check_branch
      %5582 = sbr.rel (0) target = $region101
    $region100: #{vae_forward.1} parent=1 // pred_region
      _
    $region101: #{vae_forward.1} parent=1 // pred_fallthru
      _
    // Predicated region
    $region102: #{vae_forward.1} parent=1 // pred_check
      _
    $region103: #{vae_forward.1} parent=1 // pred_check_branch
      %5584 = sbr.rel (0) target = $region105
    $region104: #{vae_forward.1} parent=1 // pred_region
      _
    $region105: #{vae_forward.1} parent=1 // pred_fallthru
      _
    %5585 = vsyncpa [#allocation3], 1
    %5586 = vsyncpa [#allocation5], 1
    %5587 = vsyncpa [#allocation8], 1

</llo_original>
